<compile_context>
chip_gen: v6e
topology: v6e:2x2x1
jax: 0.10.0
libtpu: 0.0.40
codegen_flags: <defaults>
</compile_context>

<pallas_src>
import math
import functools

import jax
import jax.numpy as jnp
from jax.experimental import pallas as pl
from jax.experimental.pallas import tpu as pltpu  # noqa: F401  (TPU backend)

# ---------------- model hyper-parameters (small, synthetic) ----------------
D_MODEL = 32
N_HEADS = 4
D_K = D_MODEL // N_HEADS
D_FF = 64
N_LAYERS = 2
VOCAB = 100
EPS = 1e-6


# ---------------------------- Pallas kernel --------------------------------
def encoder_stack_kernel(
    x_ref,      # (B*S, D)      activations (token emb + pos enc), flattened
    mask_ref,   # (B, 1, S)     1.0 = attend, 0.0 = masked key
    wqkv_ref,   # (L, D, 3D)    fused Q|K|V weight
    bqkv_ref,   # (L, 1, 3D)    fused Q|K|V bias
    wo_ref,     # (L, D, D)     attention output projection
    w1_ref,     # (L, D, D_FF)  FFN first linear
    b1_ref,     # (L, 1, D_FF)
    w2_ref,     # (L, D_FF, D)  FFN second linear
    vec_ref,    # (L, 6, D)     rows: [ln1_g, ln1_b, ln2_g, ln2_b, bo, b2]
    o_ref,      # (B*S, D)
    *, bsz, seq, n_layers,
):
    x = x_ref[...]                                    # (B*S, D)
    mask = mask_ref[...]                              # (B, 1, S)

    # additive key-mask bias, computed once (reused by every layer / head)
    bias = jnp.where(mask > 0, jnp.float32(0.0), jnp.float32(-1e9))   # (B, 1, S)
    scale = jnp.float32(1.0 / math.sqrt(D_K))

    def layer_norm(v, g, b):
        mu = jnp.mean(v, axis=-1, keepdims=True)
        var = jnp.mean(jnp.square(v - mu), axis=-1, keepdims=True)
        return (v - mu) * jax.lax.rsqrt(var + EPS) * g + b

    for l in range(n_layers):                         # static unroll over layers
        wqkv = wqkv_ref[l]                            # (D, 3D)
        bqkv = bqkv_ref[l]                            # (1, 3D)
        wo = wo_ref[l]                                # (D, D)
        w1 = w1_ref[l]                                # (D, D_FF)
        b1 = b1_ref[l]                                # (1, D_FF)
        w2 = w2_ref[l]                                # (D_FF, D)
        vecs = vec_ref[l]                             # (6, D)
        ln1_g, ln1_b = vecs[0:1], vecs[1:2]
        ln2_g, ln2_b = vecs[2:3], vecs[3:4]
        bo, b2 = vecs[4:5], vecs[5:6]

        # ---- sublayer 0: x + self_attn(LayerNorm(x)) ------------------------
        xn = layer_norm(x, ln1_g, ln1_b)                                   # (B*S, D)
        qkv = jnp.dot(xn, wqkv, preferred_element_type=jnp.float32) + bqkv  # (B*S, 3D)
        qkv3 = qkv.reshape(bsz, seq, 3 * D_MODEL)                          # (B, S, 3D)

        attn = jnp.zeros((bsz * seq, D_MODEL), jnp.float32)
        for h in range(N_HEADS):                      # static unroll over heads
            lo = h * D_K
            qh = qkv3[:, :, lo:lo + D_K]                                   # (B, S, dk)
            kh = qkv3[:, :, D_MODEL + lo:D_MODEL + lo + D_K]               # (B, S, dk)
            vh = qkv3[:, :, 2 * D_MODEL + lo:2 * D_MODEL + lo + D_K]       # (B, S, dk)

            s = jnp.einsum('bqd,bkd->bqk', qh, kh,
                           preferred_element_type=jnp.float32) * scale + bias  # (B,S,S)
            s = s - jnp.max(s, axis=-1, keepdims=True)
            p = jnp.exp(s)
            p = p * pl.reciprocal(jnp.sum(p, axis=-1, keepdims=True), approx=True)
            ctx = jnp.einsum('bqk,bkd->bqd', p, vh,
                             preferred_element_type=jnp.float32)           # (B,S,dk)

            # per-head output projection accumulation == concat(heads) @ Wo
            attn = attn + jnp.dot(ctx.reshape(bsz * seq, D_K),
                                  wo[lo:lo + D_K, :],
                                  preferred_element_type=jnp.float32)
        x = x + attn + bo                              # dropout == identity (eval)

        # ---- sublayer 1: x + FFN(LayerNorm(x)) ------------------------------
        xn2 = layer_norm(x, ln2_g, ln2_b)
        h1 = jnp.maximum(jnp.dot(xn2, w1, preferred_element_type=jnp.float32) + b1, 0.0)
        x = x + jnp.dot(h1, w2, preferred_element_type=jnp.float32) + b2

    o_ref[...] = x


# ------------------------------ wrapper -------------------------------------
def encoder_stack(x, e_mask, stacked):
    """Run all encoder layers in ONE pallas_call.  x: (B,S,D) f32, e_mask: (B,1,S) f32."""
    B, S, D = x.shape
    wqkv, bqkv, wo, w1, b1, w2, vecs = stacked
    L = wqkv.shape[0]

    x2 = x.reshape(B * S, D)                           # free metadata reshape in JAX
    kernel = functools.partial(encoder_stack_kernel, bsz=B, seq=S, n_layers=L)

    # No grid: every operand is a single full-array block, VMEM-resident for the
    # whole call (total footprint ~100 KB << VMEM on v5e/v6e/v7x).
    out = pl.pallas_call(
        kernel,
        out_shape=jax.ShapeDtypeStruct((B * S, D), x.dtype),
    )(x2, e_mask, wqkv, bqkv, wo, w1, b1, w2, vecs)
    return out.reshape(B, S, D)


# --------------------------- parameters / glue -------------------------------
def init_layer_params(key):
    """Weights stored as [in, out] so the kernel computes x @ W + b (== torch Linear)."""
    ks = jax.random.split(key, 6)

    def lin(k, din, dout):
        w = jax.random.normal(k, (din, dout), jnp.float32) * 0.02
        b = jnp.zeros((1, dout), jnp.float32)
        return w, b

    wq, bq = lin(ks[0], D_MODEL, D_MODEL)
    wk, bk = lin(ks[1], D_MODEL, D_MODEL)
    wv, bv = lin(ks[2], D_MODEL, D_MODEL)
    wo, bo = lin(ks[3], D_MODEL, D_MODEL)
    w1, b1 = lin(ks[4], D_MODEL, D_FF)
    w2, b2 = lin(ks[5], D_FF, D_MODEL)
    ln1_g = jnp.ones((1, D_MODEL), jnp.float32)
    ln1_b = jnp.zeros((1, D_MODEL), jnp.float32)
    ln2_g = jnp.ones((1, D_MODEL), jnp.float32)
    ln2_b = jnp.zeros((1, D_MODEL), jnp.float32)
    return [wq, bq, wk, bk, wv, bv, wo, bo,
            ln1_g, ln1_b, ln2_g, ln2_b,
            w1, b1, w2, b2]


def stack_layer_params(layer_params):
    """Stack per-layer params along a leading L axis; fuse QKV; pack tiny D-vectors."""
    wqkv = jnp.stack([jnp.concatenate([p[0], p[2], p[4]], axis=1) for p in layer_params])
    bqkv = jnp.stack([jnp.concatenate([p[1], p[3], p[5]], axis=1) for p in layer_params])
    wo = jnp.stack([p[6] for p in layer_params])
    w1 = jnp.stack([p[12] for p in layer_params])
    b1 = jnp.stack([p[13] for p in layer_params])
    w2 = jnp.stack([p[14] for p in layer_params])
    # rows: [ln1_g, ln1_b, ln2_g, ln2_b, bo, b2]
    vecs = jnp.stack([jnp.concatenate([p[8], p[9], p[10], p[11], p[7], p[15]], axis=0)
                      for p in layer_params])
    return wqkv, bqkv, wo, w1, b1, w2, vecs


def embeddings(token_ids, emb_table):
    """Token embedding * sqrt(d_model) + sinusoidal positional encoding (plain-JAX glue)."""
    B, S = token_ids.shape
    x = emb_table[token_ids] * jnp.sqrt(jnp.float32(D_MODEL))   # gather stays in JAX
    pos = jnp.arange(S, dtype=jnp.float32)[:, None]
    div = jnp.exp(jnp.arange(0, D_MODEL, 2, dtype=jnp.float32)
                  * (-math.log(10000.0) / D_MODEL))
    pe = jnp.zeros((S, D_MODEL), jnp.float32)
    pe = pe.at[:, 0::2].set(jnp.sin(pos * div))
    pe = pe.at[:, 1::2].set(jnp.cos(pos * div))
    return x + pe[None]


@jax.jit
def encoder_forward(token_ids, e_mask, emb_table, stacked):
    # config.attn == 'orig'  ->  plain layer stacking; apply_proj never used.
    # TODO(synk): 'half'-attention apply_proj variant not implemented (that branch of
    #             MultiHeadAttention is not defined in the provided source).
    x = embeddings(token_ids, emb_table)
    return encoder_stack(x, e_mask, stacked)


# -------------------------------- main ---------------------------------------
if __name__ == "__main__":
    B, S = 2, 8
    key = jax.random.PRNGKey(0)
    k_ids, k_emb, k_layers = jax.random.split(key, 3)

    token_ids = jax.random.randint(k_ids, (B, S), 0, VOCAB)
    emb_table = jax.random.normal(k_emb, (VOCAB, D_MODEL), jnp.float32) * 0.02
    layer_params = [init_layer_params(k) for k in jax.random.split(k_layers, N_LAYERS)]
    stacked = stack_layer_params(layer_params)

    # padding mask: last position of each sequence is padding
    e_mask = jnp.ones((B, 1, S), jnp.float32).at[:, :, -1].set(0.0)

    out = encoder_forward(token_ids, e_mask, emb_table, stacked)
    out = jax.block_until_ready(out)
    assert out.shape == (B, S, D_MODEL)
    print("KERNEL_OK")
</pallas_src>

<mosaic_0001>
module attributes {stable_mosaic.version = 11 : i64} {
  func.func @encoder_stack_kernel(%arg0: memref<16x32xf32, #tpu.memory_space<vmem>>, %arg1: memref<2x1x8xf32, #tpu.memory_space<vmem>>, %arg2: memref<2x32x96xf32, #tpu.memory_space<vmem>>, %arg3: memref<2x1x96xf32, #tpu.memory_space<vmem>>, %arg4: memref<2x32x32xf32, #tpu.memory_space<vmem>>, %arg5: memref<2x32x64xf32, #tpu.memory_space<vmem>>, %arg6: memref<2x1x64xf32, #tpu.memory_space<vmem>>, %arg7: memref<2x64x32xf32, #tpu.memory_space<vmem>>, %arg8: memref<2x6x32xf32, #tpu.memory_space<vmem>>, %arg9: memref<16x32xf32, #tpu.memory_space<vmem>>) attributes {dimension_semantics = [], scalar_prefetch = 0 : i64, scratch_operands = 0 : i64, tpu.core_type = #tpu.core_type<tc>} {
    %c0 = arith.constant 0 : index
    %c0_0 = arith.constant 0 : index
    %0 = vector.load %arg0[%c0, %c0_0] : memref<16x32xf32, #tpu.memory_space<vmem>>, vector<16x32xf32>
    %c0_1 = arith.constant 0 : index
    %c0_2 = arith.constant 0 : index
    %c0_3 = arith.constant 0 : index
    %1 = vector.load %arg1[%c0_1, %c0_2, %c0_3] : memref<2x1x8xf32, #tpu.memory_space<vmem>>, vector<2x1x8xf32>
    %cst = arith.constant 0.000000e+00 : f32
    %2 = vector.broadcast %cst : f32 to vector<2x1x8xf32>
    %3 = arith.cmpf ogt, %1, %2 : vector<2x1x8xf32>
    %cst_4 = arith.constant 0.000000e+00 : f32
    %cst_5 = arith.constant -1.000000e+09 : f32
    %4 = vector.broadcast %cst_4 : f32 to vector<2x1x8xf32>
    %5 = vector.broadcast %cst_5 : f32 to vector<2x1x8xf32>
    %6 = arith.select %3, %4, %5 : vector<2x1x8xi1>, vector<2x1x8xf32>
    %c0_6 = arith.constant 0 : index
    %c0_7 = arith.constant 0 : index
    %c0_8 = arith.constant 0 : index
    %7 = vector.load %arg2[%c0_6, %c0_7, %c0_8] : memref<2x32x96xf32, #tpu.memory_space<vmem>>, vector<1x32x96xf32>
    %8 = vector.shape_cast %7 : vector<1x32x96xf32> to vector<32x96xf32>
    %c0_9 = arith.constant 0 : index
    %c0_10 = arith.constant 0 : index
    %c0_11 = arith.constant 0 : index
    %9 = vector.load %arg3[%c0_9, %c0_10, %c0_11] : memref<2x1x96xf32, #tpu.memory_space<vmem>>, vector<1x1x96xf32>
    %10 = vector.shape_cast %9 : vector<1x1x96xf32> to vector<1x96xf32>
    %c0_12 = arith.constant 0 : index
    %c0_13 = arith.constant 0 : index
    %c0_14 = arith.constant 0 : index
    %11 = vector.load %arg4[%c0_12, %c0_13, %c0_14] : memref<2x32x32xf32, #tpu.memory_space<vmem>>, vector<1x32x32xf32>
    %12 = vector.shape_cast %11 : vector<1x32x32xf32> to vector<32x32xf32>
    %c0_15 = arith.constant 0 : index
    %c0_16 = arith.constant 0 : index
    %c0_17 = arith.constant 0 : index
    %13 = vector.load %arg5[%c0_15, %c0_16, %c0_17] : memref<2x32x64xf32, #tpu.memory_space<vmem>>, vector<1x32x64xf32>
    %14 = vector.shape_cast %13 : vector<1x32x64xf32> to vector<32x64xf32>
    %c0_18 = arith.constant 0 : index
    %c0_19 = arith.constant 0 : index
    %c0_20 = arith.constant 0 : index
    %15 = vector.load %arg6[%c0_18, %c0_19, %c0_20] : memref<2x1x64xf32, #tpu.memory_space<vmem>>, vector<1x1x64xf32>
    %16 = vector.shape_cast %15 : vector<1x1x64xf32> to vector<1x64xf32>
    %c0_21 = arith.constant 0 : index
    %c0_22 = arith.constant 0 : index
    %c0_23 = arith.constant 0 : index
    %17 = vector.load %arg7[%c0_21, %c0_22, %c0_23] : memref<2x64x32xf32, #tpu.memory_space<vmem>>, vector<1x64x32xf32>
    %18 = vector.shape_cast %17 : vector<1x64x32xf32> to vector<64x32xf32>
    %c0_24 = arith.constant 0 : index
    %c0_25 = arith.constant 0 : index
    %c0_26 = arith.constant 0 : index
    %19 = vector.load %arg8[%c0_24, %c0_25, %c0_26] : memref<2x6x32xf32, #tpu.memory_space<vmem>>, vector<1x6x32xf32>
    %20 = vector.shape_cast %19 : vector<1x6x32xf32> to vector<6x32xf32>
    %21 = vector.extract_strided_slice %20 {offsets = [0, 0], sizes = [1, 32], strides = [1, 1]} : vector<6x32xf32> to vector<1x32xf32>
    %22 = vector.extract_strided_slice %20 {offsets = [1, 0], sizes = [1, 32], strides = [1, 1]} : vector<6x32xf32> to vector<1x32xf32>
    %23 = vector.extract_strided_slice %20 {offsets = [2, 0], sizes = [1, 32], strides = [1, 1]} : vector<6x32xf32> to vector<1x32xf32>
    %24 = vector.extract_strided_slice %20 {offsets = [3, 0], sizes = [1, 32], strides = [1, 1]} : vector<6x32xf32> to vector<1x32xf32>
    %25 = vector.extract_strided_slice %20 {offsets = [4, 0], sizes = [1, 32], strides = [1, 1]} : vector<6x32xf32> to vector<1x32xf32>
    %26 = vector.extract_strided_slice %20 {offsets = [5, 0], sizes = [1, 32], strides = [1, 1]} : vector<6x32xf32> to vector<1x32xf32>
    %cst_27 = arith.constant dense<0.000000e+00> : vector<16xf32>
    %27 = vector.multi_reduction <add>, %0, %cst_27 [1] : vector<16x32xf32> to vector<16xf32>
    %28 = vector.shape_cast %27 : vector<16xf32> to vector<16x1xf32>
    %cst_28 = arith.constant 3.200000e+01 : f32
    %29 = vector.broadcast %cst_28 : f32 to vector<16x1xf32>
    %30 = arith.divf %28, %29 : vector<16x1xf32>
    %31 = vector.broadcast %30 : vector<16x1xf32> to vector<16x32xf32>
    %32 = arith.subf %0, %31 : vector<16x32xf32>
    %33 = arith.mulf %32, %32 : vector<16x32xf32>
    %cst_29 = arith.constant dense<0.000000e+00> : vector<16xf32>
    %34 = vector.multi_reduction <add>, %33, %cst_29 [1] : vector<16x32xf32> to vector<16xf32>
    %35 = vector.shape_cast %34 : vector<16xf32> to vector<16x1xf32>
    %cst_30 = arith.constant 3.200000e+01 : f32
    %36 = vector.broadcast %cst_30 : f32 to vector<16x1xf32>
    %37 = arith.divf %35, %36 : vector<16x1xf32>
    %38 = vector.broadcast %30 : vector<16x1xf32> to vector<16x32xf32>
    %39 = arith.subf %0, %38 : vector<16x32xf32>
    %cst_31 = arith.constant 9.99999997E-7 : f32
    %40 = vector.broadcast %cst_31 : f32 to vector<16x1xf32>
    %41 = arith.addf %37, %40 : vector<16x1xf32>
    %42 = math.rsqrt %41 : vector<16x1xf32>
    %43 = vector.broadcast %42 : vector<16x1xf32> to vector<16x32xf32>
    %44 = arith.mulf %39, %43 : vector<16x32xf32>
    %45 = vector.broadcast %21 : vector<1x32xf32> to vector<16x32xf32>
    %46 = arith.mulf %44, %45 : vector<16x32xf32>
    %47 = vector.broadcast %22 : vector<1x32xf32> to vector<16x32xf32>
    %48 = arith.addf %46, %47 : vector<16x32xf32>
    %cst_32 = arith.constant dense<0.000000e+00> : vector<16x96xf32>
    %49 = tpu.matmul %48, %8, %cst_32 {dimension_numbers = #tpu.dot_dimension_numbers<[1], [0], [0], [1], [0, 0, 1, 1], [], []>} : vector<16x32xf32>, vector<32x96xf32>, vector<16x96xf32> -> vector<16x96xf32>
    %50 = vector.broadcast %10 : vector<1x96xf32> to vector<16x96xf32>
    %51 = arith.addf %49, %50 : vector<16x96xf32>
    %52 = vector.shape_cast %51 : vector<16x96xf32> to vector<2x8x96xf32>
    %cst_33 = arith.constant 0.000000e+00 : f32
    %53 = vector.broadcast %cst_33 : f32 to vector<16x32xf32>
    %54 = vector.extract_strided_slice %52 {offsets = [0, 0, 0], sizes = [2, 8, 8], strides = [1, 1, 1]} : vector<2x8x96xf32> to vector<2x8x8xf32>
    %55 = vector.extract_strided_slice %52 {offsets = [0, 0, 32], sizes = [2, 8, 8], strides = [1, 1, 1]} : vector<2x8x96xf32> to vector<2x8x8xf32>
    %56 = vector.extract_strided_slice %52 {offsets = [0, 0, 64], sizes = [2, 8, 8], strides = [1, 1, 1]} : vector<2x8x96xf32> to vector<2x8x8xf32>
    "tpu.trace_start"() <{level = 10 : i32, message = "bqd,bkd->bqk"}> : () -> ()
    %cst_34 = arith.constant dense<0.000000e+00> : vector<2x8x8xf32>
    %57 = tpu.matmul %54, %55, %cst_34 {dimension_numbers = #tpu.dot_dimension_numbers<[2], [2], [1], [1], [0, 0, 0, 1, 1, 1], [0], [0]>} : vector<2x8x8xf32>, vector<2x8x8xf32>, vector<2x8x8xf32> -> vector<2x8x8xf32>
    "tpu.trace_stop"() : () -> ()
    %cst_35 = arith.constant 0.353553385 : f32
    %58 = vector.broadcast %cst_35 : f32 to vector<2x8x8xf32>
    %59 = arith.mulf %57, %58 : vector<2x8x8xf32>
    %60 = vector.broadcast %6 : vector<2x1x8xf32> to vector<2x8x8xf32>
    %61 = arith.addf %59, %60 : vector<2x8x8xf32>
    %cst_36 = arith.constant dense<0xFF800000> : vector<2x8xf32>
    %62 = vector.multi_reduction <maximumf>, %61, %cst_36 [2] : vector<2x8x8xf32> to vector<2x8xf32>
    %63 = vector.shape_cast %62 : vector<2x8xf32> to vector<2x8x1xf32>
    %64 = vector.broadcast %63 : vector<2x8x1xf32> to vector<2x8x8xf32>
    %65 = arith.subf %61, %64 : vector<2x8x8xf32>
    %66 = math.exp %65 : vector<2x8x8xf32>
    %cst_37 = arith.constant dense<0.000000e+00> : vector<2x8xf32>
    %67 = vector.multi_reduction <add>, %66, %cst_37 [2] : vector<2x8x8xf32> to vector<2x8xf32>
    %68 = vector.shape_cast %67 : vector<2x8xf32> to vector<2x8x1xf32>
    %69 = tpu.reciprocal %68 {approx = true} : vector<2x8x1xf32> -> vector<2x8x1xf32>
    %70 = vector.broadcast %69 : vector<2x8x1xf32> to vector<2x8x8xf32>
    %71 = arith.mulf %66, %70 : vector<2x8x8xf32>
    "tpu.trace_start"() <{level = 10 : i32, message = "bqk,bkd->bqd"}> : () -> ()
    %cst_38 = arith.constant dense<0.000000e+00> : vector<2x8x8xf32>
    %72 = tpu.matmul %71, %56, %cst_38 {dimension_numbers = #tpu.dot_dimension_numbers<[2], [1], [1], [2], [0, 0, 0, 1, 1, 2], [0], [0]>} : vector<2x8x8xf32>, vector<2x8x8xf32>, vector<2x8x8xf32> -> vector<2x8x8xf32>
    "tpu.trace_stop"() : () -> ()
    %73 = vector.shape_cast %72 : vector<2x8x8xf32> to vector<16x8xf32>
    %74 = vector.extract_strided_slice %12 {offsets = [0, 0], sizes = [8, 32], strides = [1, 1]} : vector<32x32xf32> to vector<8x32xf32>
    %cst_39 = arith.constant dense<0.000000e+00> : vector<16x32xf32>
    %75 = tpu.matmul %73, %74, %cst_39 {dimension_numbers = #tpu.dot_dimension_numbers<[1], [0], [0], [1], [0, 0, 1, 1], [], []>} : vector<16x8xf32>, vector<8x32xf32>, vector<16x32xf32> -> vector<16x32xf32>
    %76 = arith.addf %53, %75 : vector<16x32xf32>
    %77 = vector.extract_strided_slice %52 {offsets = [0, 0, 8], sizes = [2, 8, 8], strides = [1, 1, 1]} : vector<2x8x96xf32> to vector<2x8x8xf32>
    %78 = vector.extract_strided_slice %52 {offsets = [0, 0, 40], sizes = [2, 8, 8], strides = [1, 1, 1]} : vector<2x8x96xf32> to vector<2x8x8xf32>
    %79 = vector.extract_strided_slice %52 {offsets = [0, 0, 72], sizes = [2, 8, 8], strides = [1, 1, 1]} : vector<2x8x96xf32> to vector<2x8x8xf32>
    "tpu.trace_start"() <{level = 10 : i32, message = "bqd,bkd->bqk"}> : () -> ()
    %cst_40 = arith.constant dense<0.000000e+00> : vector<2x8x8xf32>
    %80 = tpu.matmul %77, %78, %cst_40 {dimension_numbers = #tpu.dot_dimension_numbers<[2], [2], [1], [1], [0, 0, 0, 1, 1, 1], [0], [0]>} : vector<2x8x8xf32>, vector<2x8x8xf32>, vector<2x8x8xf32> -> vector<2x8x8xf32>
    "tpu.trace_stop"() : () -> ()
    %cst_41 = arith.constant 0.353553385 : f32
    %81 = vector.broadcast %cst_41 : f32 to vector<2x8x8xf32>
    %82 = arith.mulf %80, %81 : vector<2x8x8xf32>
    %83 = vector.broadcast %6 : vector<2x1x8xf32> to vector<2x8x8xf32>
    %84 = arith.addf %82, %83 : vector<2x8x8xf32>
    %cst_42 = arith.constant dense<0xFF800000> : vector<2x8xf32>
    %85 = vector.multi_reduction <maximumf>, %84, %cst_42 [2] : vector<2x8x8xf32> to vector<2x8xf32>
    %86 = vector.shape_cast %85 : vector<2x8xf32> to vector<2x8x1xf32>
    %87 = vector.broadcast %86 : vector<2x8x1xf32> to vector<2x8x8xf32>
    %88 = arith.subf %84, %87 : vector<2x8x8xf32>
    %89 = math.exp %88 : vector<2x8x8xf32>
    %cst_43 = arith.constant dense<0.000000e+00> : vector<2x8xf32>
    %90 = vector.multi_reduction <add>, %89, %cst_43 [2] : vector<2x8x8xf32> to vector<2x8xf32>
    %91 = vector.shape_cast %90 : vector<2x8xf32> to vector<2x8x1xf32>
    %92 = tpu.reciprocal %91 {approx = true} : vector<2x8x1xf32> -> vector<2x8x1xf32>
    %93 = vector.broadcast %92 : vector<2x8x1xf32> to vector<2x8x8xf32>
    %94 = arith.mulf %89, %93 : vector<2x8x8xf32>
    "tpu.trace_start"() <{level = 10 : i32, message = "bqk,bkd->bqd"}> : () -> ()
    %cst_44 = arith.constant dense<0.000000e+00> : vector<2x8x8xf32>
    %95 = tpu.matmul %94, %79, %cst_44 {dimension_numbers = #tpu.dot_dimension_numbers<[2], [1], [1], [2], [0, 0, 0, 1, 1, 2], [0], [0]>} : vector<2x8x8xf32>, vector<2x8x8xf32>, vector<2x8x8xf32> -> vector<2x8x8xf32>
    "tpu.trace_stop"() : () -> ()
    %96 = vector.shape_cast %95 : vector<2x8x8xf32> to vector<16x8xf32>
    %97 = vector.extract_strided_slice %12 {offsets = [8, 0], sizes = [8, 32], strides = [1, 1]} : vector<32x32xf32> to vector<8x32xf32>
    %cst_45 = arith.constant dense<0.000000e+00> : vector<16x32xf32>
    %98 = tpu.matmul %96, %97, %cst_45 {dimension_numbers = #tpu.dot_dimension_numbers<[1], [0], [0], [1], [0, 0, 1, 1], [], []>} : vector<16x8xf32>, vector<8x32xf32>, vector<16x32xf32> -> vector<16x32xf32>
    %99 = arith.addf %76, %98 : vector<16x32xf32>
    %100 = vector.extract_strided_slice %52 {offsets = [0, 0, 16], sizes = [2, 8, 8], strides = [1, 1, 1]} : vector<2x8x96xf32> to vector<2x8x8xf32>
    %101 = vector.extract_strided_slice %52 {offsets = [0, 0, 48], sizes = [2, 8, 8], strides = [1, 1, 1]} : vector<2x8x96xf32> to vector<2x8x8xf32>
    %102 = vector.extract_strided_slice %52 {offsets = [0, 0, 80], sizes = [2, 8, 8], strides = [1, 1, 1]} : vector<2x8x96xf32> to vector<2x8x8xf32>
    "tpu.trace_start"() <{level = 10 : i32, message = "bqd,bkd->bqk"}> : () -> ()
    %cst_46 = arith.constant dense<0.000000e+00> : vector<2x8x8xf32>
    %103 = tpu.matmul %100, %101, %cst_46 {dimension_numbers = #tpu.dot_dimension_numbers<[2], [2], [1], [1], [0, 0, 0, 1, 1, 1], [0], [0]>} : vector<2x8x8xf32>, vector<2x8x8xf32>, vector<2x8x8xf32> -> vector<2x8x8xf32>
    "tpu.trace_stop"() : () -> ()
    %cst_47 = arith.constant 0.353553385 : f32
    %104 = vector.broadcast %cst_47 : f32 to vector<2x8x8xf32>
    %105 = arith.mulf %103, %104 : vector<2x8x8xf32>
    %106 = vector.broadcast %6 : vector<2x1x8xf32> to vector<2x8x8xf32>
    %107 = arith.addf %105, %106 : vector<2x8x8xf32>
    %cst_48 = arith.constant dense<0xFF800000> : vector<2x8xf32>
    %108 = vector.multi_reduction <maximumf>, %107, %cst_48 [2] : vector<2x8x8xf32> to vector<2x8xf32>
    %109 = vector.shape_cast %108 : vector<2x8xf32> to vector<2x8x1xf32>
    %110 = vector.broadcast %109 : vector<2x8x1xf32> to vector<2x8x8xf32>
    %111 = arith.subf %107, %110 : vector<2x8x8xf32>
    %112 = math.exp %111 : vector<2x8x8xf32>
    %cst_49 = arith.constant dense<0.000000e+00> : vector<2x8xf32>
    %113 = vector.multi_reduction <add>, %112, %cst_49 [2] : vector<2x8x8xf32> to vector<2x8xf32>
    %114 = vector.shape_cast %113 : vector<2x8xf32> to vector<2x8x1xf32>
    %115 = tpu.reciprocal %114 {approx = true} : vector<2x8x1xf32> -> vector<2x8x1xf32>
    %116 = vector.broadcast %115 : vector<2x8x1xf32> to vector<2x8x8xf32>
    %117 = arith.mulf %112, %116 : vector<2x8x8xf32>
    "tpu.trace_start"() <{level = 10 : i32, message = "bqk,bkd->bqd"}> : () -> ()
    %cst_50 = arith.constant dense<0.000000e+00> : vector<2x8x8xf32>
    %118 = tpu.matmul %117, %102, %cst_50 {dimension_numbers = #tpu.dot_dimension_numbers<[2], [1], [1], [2], [0, 0, 0, 1, 1, 2], [0], [0]>} : vector<2x8x8xf32>, vector<2x8x8xf32>, vector<2x8x8xf32> -> vector<2x8x8xf32>
    "tpu.trace_stop"() : () -> ()
    %119 = vector.shape_cast %118 : vector<2x8x8xf32> to vector<16x8xf32>
    %120 = vector.extract_strided_slice %12 {offsets = [16, 0], sizes = [8, 32], strides = [1, 1]} : vector<32x32xf32> to vector<8x32xf32>
    %cst_51 = arith.constant dense<0.000000e+00> : vector<16x32xf32>
    %121 = tpu.matmul %119, %120, %cst_51 {dimension_numbers = #tpu.dot_dimension_numbers<[1], [0], [0], [1], [0, 0, 1, 1], [], []>} : vector<16x8xf32>, vector<8x32xf32>, vector<16x32xf32> -> vector<16x32xf32>
    %122 = arith.addf %99, %121 : vector<16x32xf32>
    %123 = vector.extract_strided_slice %52 {offsets = [0, 0, 24], sizes = [2, 8, 8], strides = [1, 1, 1]} : vector<2x8x96xf32> to vector<2x8x8xf32>
    %124 = vector.extract_strided_slice %52 {offsets = [0, 0, 56], sizes = [2, 8, 8], strides = [1, 1, 1]} : vector<2x8x96xf32> to vector<2x8x8xf32>
    %125 = vector.extract_strided_slice %52 {offsets = [0, 0, 88], sizes = [2, 8, 8], strides = [1, 1, 1]} : vector<2x8x96xf32> to vector<2x8x8xf32>
    "tpu.trace_start"() <{level = 10 : i32, message = "bqd,bkd->bqk"}> : () -> ()
    %cst_52 = arith.constant dense<0.000000e+00> : vector<2x8x8xf32>
    %126 = tpu.matmul %123, %124, %cst_52 {dimension_numbers = #tpu.dot_dimension_numbers<[2], [2], [1], [1], [0, 0, 0, 1, 1, 1], [0], [0]>} : vector<2x8x8xf32>, vector<2x8x8xf32>, vector<2x8x8xf32> -> vector<2x8x8xf32>
    "tpu.trace_stop"() : () -> ()
    %cst_53 = arith.constant 0.353553385 : f32
    %127 = vector.broadcast %cst_53 : f32 to vector<2x8x8xf32>
    %128 = arith.mulf %126, %127 : vector<2x8x8xf32>
    %129 = vector.broadcast %6 : vector<2x1x8xf32> to vector<2x8x8xf32>
    %130 = arith.addf %128, %129 : vector<2x8x8xf32>
    %cst_54 = arith.constant dense<0xFF800000> : vector<2x8xf32>
    %131 = vector.multi_reduction <maximumf>, %130, %cst_54 [2] : vector<2x8x8xf32> to vector<2x8xf32>
    %132 = vector.shape_cast %131 : vector<2x8xf32> to vector<2x8x1xf32>
    %133 = vector.broadcast %132 : vector<2x8x1xf32> to vector<2x8x8xf32>
    %134 = arith.subf %130, %133 : vector<2x8x8xf32>
    %135 = math.exp %134 : vector<2x8x8xf32>
    %cst_55 = arith.constant dense<0.000000e+00> : vector<2x8xf32>
    %136 = vector.multi_reduction <add>, %135, %cst_55 [2] : vector<2x8x8xf32> to vector<2x8xf32>
    %137 = vector.shape_cast %136 : vector<2x8xf32> to vector<2x8x1xf32>
    %138 = tpu.reciprocal %137 {approx = true} : vector<2x8x1xf32> -> vector<2x8x1xf32>
    %139 = vector.broadcast %138 : vector<2x8x1xf32> to vector<2x8x8xf32>
    %140 = arith.mulf %135, %139 : vector<2x8x8xf32>
    "tpu.trace_start"() <{level = 10 : i32, message = "bqk,bkd->bqd"}> : () -> ()
    %cst_56 = arith.constant dense<0.000000e+00> : vector<2x8x8xf32>
    %141 = tpu.matmul %140, %125, %cst_56 {dimension_numbers = #tpu.dot_dimension_numbers<[2], [1], [1], [2], [0, 0, 0, 1, 1, 2], [0], [0]>} : vector<2x8x8xf32>, vector<2x8x8xf32>, vector<2x8x8xf32> -> vector<2x8x8xf32>
    "tpu.trace_stop"() : () -> ()
    %142 = vector.shape_cast %141 : vector<2x8x8xf32> to vector<16x8xf32>
    %143 = vector.extract_strided_slice %12 {offsets = [24, 0], sizes = [8, 32], strides = [1, 1]} : vector<32x32xf32> to vector<8x32xf32>
    %cst_57 = arith.constant dense<0.000000e+00> : vector<16x32xf32>
    %144 = tpu.matmul %142, %143, %cst_57 {dimension_numbers = #tpu.dot_dimension_numbers<[1], [0], [0], [1], [0, 0, 1, 1], [], []>} : vector<16x8xf32>, vector<8x32xf32>, vector<16x32xf32> -> vector<16x32xf32>
    %145 = arith.addf %122, %144 : vector<16x32xf32>
    %146 = arith.addf %0, %145 : vector<16x32xf32>
    %147 = vector.broadcast %25 : vector<1x32xf32> to vector<16x32xf32>
    %148 = arith.addf %146, %147 : vector<16x32xf32>
    %cst_58 = arith.constant dense<0.000000e+00> : vector<16xf32>
    %149 = vector.multi_reduction <add>, %148, %cst_58 [1] : vector<16x32xf32> to vector<16xf32>
    %150 = vector.shape_cast %149 : vector<16xf32> to vector<16x1xf32>
    %cst_59 = arith.constant 3.200000e+01 : f32
    %151 = vector.broadcast %cst_59 : f32 to vector<16x1xf32>
    %152 = arith.divf %150, %151 : vector<16x1xf32>
    %153 = vector.broadcast %152 : vector<16x1xf32> to vector<16x32xf32>
    %154 = arith.subf %148, %153 : vector<16x32xf32>
    %155 = arith.mulf %154, %154 : vector<16x32xf32>
    %cst_60 = arith.constant dense<0.000000e+00> : vector<16xf32>
    %156 = vector.multi_reduction <add>, %155, %cst_60 [1] : vector<16x32xf32> to vector<16xf32>
    %157 = vector.shape_cast %156 : vector<16xf32> to vector<16x1xf32>
    %cst_61 = arith.constant 3.200000e+01 : f32
    %158 = vector.broadcast %cst_61 : f32 to vector<16x1xf32>
    %159 = arith.divf %157, %158 : vector<16x1xf32>
    %160 = vector.broadcast %152 : vector<16x1xf32> to vector<16x32xf32>
    %161 = arith.subf %148, %160 : vector<16x32xf32>
    %cst_62 = arith.constant 9.99999997E-7 : f32
    %162 = vector.broadcast %cst_62 : f32 to vector<16x1xf32>
    %163 = arith.addf %159, %162 : vector<16x1xf32>
    %164 = math.rsqrt %163 : vector<16x1xf32>
    %165 = vector.broadcast %164 : vector<16x1xf32> to vector<16x32xf32>
    %166 = arith.mulf %161, %165 : vector<16x32xf32>
    %167 = vector.broadcast %23 : vector<1x32xf32> to vector<16x32xf32>
    %168 = arith.mulf %166, %167 : vector<16x32xf32>
    %169 = vector.broadcast %24 : vector<1x32xf32> to vector<16x32xf32>
    %170 = arith.addf %168, %169 : vector<16x32xf32>
    %cst_63 = arith.constant dense<0.000000e+00> : vector<16x64xf32>
    %171 = tpu.matmul %170, %14, %cst_63 {dimension_numbers = #tpu.dot_dimension_numbers<[1], [0], [0], [1], [0, 0, 1, 1], [], []>} : vector<16x32xf32>, vector<32x64xf32>, vector<16x64xf32> -> vector<16x64xf32>
    %172 = vector.broadcast %16 : vector<1x64xf32> to vector<16x64xf32>
    %173 = arith.addf %171, %172 : vector<16x64xf32>
    %cst_64 = arith.constant 0.000000e+00 : f32
    %174 = vector.broadcast %cst_64 : f32 to vector<16x64xf32>
    %175 = arith.maximumf %173, %174 : vector<16x64xf32>
    %cst_65 = arith.constant dense<0.000000e+00> : vector<16x32xf32>
    %176 = tpu.matmul %175, %18, %cst_65 {dimension_numbers = #tpu.dot_dimension_numbers<[1], [0], [0], [1], [0, 0, 1, 1], [], []>} : vector<16x64xf32>, vector<64x32xf32>, vector<16x32xf32> -> vector<16x32xf32>
    %177 = arith.addf %148, %176 : vector<16x32xf32>
    %178 = vector.broadcast %26 : vector<1x32xf32> to vector<16x32xf32>
    %179 = arith.addf %177, %178 : vector<16x32xf32>
    %c1 = arith.constant 1 : index
    %c0_66 = arith.constant 0 : index
    %c0_67 = arith.constant 0 : index
    %180 = vector.load %arg2[%c1, %c0_66, %c0_67] : memref<2x32x96xf32, #tpu.memory_space<vmem>>, vector<1x32x96xf32>
    %181 = vector.shape_cast %180 : vector<1x32x96xf32> to vector<32x96xf32>
    %c1_68 = arith.constant 1 : index
    %c0_69 = arith.constant 0 : index
    %c0_70 = arith.constant 0 : index
    %182 = vector.load %arg3[%c1_68, %c0_69, %c0_70] : memref<2x1x96xf32, #tpu.memory_space<vmem>>, vector<1x1x96xf32>
    %183 = vector.shape_cast %182 : vector<1x1x96xf32> to vector<1x96xf32>
    %c1_71 = arith.constant 1 : index
    %c0_72 = arith.constant 0 : index
    %c0_73 = arith.constant 0 : index
    %184 = vector.load %arg4[%c1_71, %c0_72, %c0_73] : memref<2x32x32xf32, #tpu.memory_space<vmem>>, vector<1x32x32xf32>
    %185 = vector.shape_cast %184 : vector<1x32x32xf32> to vector<32x32xf32>
    %c1_74 = arith.constant 1 : index
    %c0_75 = arith.constant 0 : index
    %c0_76 = arith.constant 0 : index
    %186 = vector.load %arg5[%c1_74, %c0_75, %c0_76] : memref<2x32x64xf32, #tpu.memory_space<vmem>>, vector<1x32x64xf32>
    %187 = vector.shape_cast %186 : vector<1x32x64xf32> to vector<32x64xf32>
    %c1_77 = arith.constant 1 : index
    %c0_78 = arith.constant 0 : index
    %c0_79 = arith.constant 0 : index
    %188 = vector.load %arg6[%c1_77, %c0_78, %c0_79] : memref<2x1x64xf32, #tpu.memory_space<vmem>>, vector<1x1x64xf32>
    %189 = vector.shape_cast %188 : vector<1x1x64xf32> to vector<1x64xf32>
    %c1_80 = arith.constant 1 : index
    %c0_81 = arith.constant 0 : index
    %c0_82 = arith.constant 0 : index
    %190 = vector.load %arg7[%c1_80, %c0_81, %c0_82] : memref<2x64x32xf32, #tpu.memory_space<vmem>>, vector<1x64x32xf32>
    %191 = vector.shape_cast %190 : vector<1x64x32xf32> to vector<64x32xf32>
    %c1_83 = arith.constant 1 : index
    %c0_84 = arith.constant 0 : index
    %c0_85 = arith.constant 0 : index
    %192 = vector.load %arg8[%c1_83, %c0_84, %c0_85] : memref<2x6x32xf32, #tpu.memory_space<vmem>>, vector<1x6x32xf32>
    %193 = vector.shape_cast %192 : vector<1x6x32xf32> to vector<6x32xf32>
    %194 = vector.extract_strided_slice %193 {offsets = [0, 0], sizes = [1, 32], strides = [1, 1]} : vector<6x32xf32> to vector<1x32xf32>
    %195 = vector.extract_strided_slice %193 {offsets = [1, 0], sizes = [1, 32], strides = [1, 1]} : vector<6x32xf32> to vector<1x32xf32>
    %196 = vector.extract_strided_slice %193 {offsets = [2, 0], sizes = [1, 32], strides = [1, 1]} : vector<6x32xf32> to vector<1x32xf32>
    %197 = vector.extract_strided_slice %193 {offsets = [3, 0], sizes = [1, 32], strides = [1, 1]} : vector<6x32xf32> to vector<1x32xf32>
    %198 = vector.extract_strided_slice %193 {offsets = [4, 0], sizes = [1, 32], strides = [1, 1]} : vector<6x32xf32> to vector<1x32xf32>
    %199 = vector.extract_strided_slice %193 {offsets = [5, 0], sizes = [1, 32], strides = [1, 1]} : vector<6x32xf32> to vector<1x32xf32>
    %cst_86 = arith.constant dense<0.000000e+00> : vector<16xf32>
    %200 = vector.multi_reduction <add>, %179, %cst_86 [1] : vector<16x32xf32> to vector<16xf32>
    %201 = vector.shape_cast %200 : vector<16xf32> to vector<16x1xf32>
    %cst_87 = arith.constant 3.200000e+01 : f32
    %202 = vector.broadcast %cst_87 : f32 to vector<16x1xf32>
    %203 = arith.divf %201, %202 : vector<16x1xf32>
    %204 = vector.broadcast %203 : vector<16x1xf32> to vector<16x32xf32>
    %205 = arith.subf %179, %204 : vector<16x32xf32>
    %206 = arith.mulf %205, %205 : vector<16x32xf32>
    %cst_88 = arith.constant dense<0.000000e+00> : vector<16xf32>
    %207 = vector.multi_reduction <add>, %206, %cst_88 [1] : vector<16x32xf32> to vector<16xf32>
    %208 = vector.shape_cast %207 : vector<16xf32> to vector<16x1xf32>
    %cst_89 = arith.constant 3.200000e+01 : f32
    %209 = vector.broadcast %cst_89 : f32 to vector<16x1xf32>
    %210 = arith.divf %208, %209 : vector<16x1xf32>
    %211 = vector.broadcast %203 : vector<16x1xf32> to vector<16x32xf32>
    %212 = arith.subf %179, %211 : vector<16x32xf32>
    %cst_90 = arith.constant 9.99999997E-7 : f32
    %213 = vector.broadcast %cst_90 : f32 to vector<16x1xf32>
    %214 = arith.addf %210, %213 : vector<16x1xf32>
    %215 = math.rsqrt %214 : vector<16x1xf32>
    %216 = vector.broadcast %215 : vector<16x1xf32> to vector<16x32xf32>
    %217 = arith.mulf %212, %216 : vector<16x32xf32>
    %218 = vector.broadcast %194 : vector<1x32xf32> to vector<16x32xf32>
    %219 = arith.mulf %217, %218 : vector<16x32xf32>
    %220 = vector.broadcast %195 : vector<1x32xf32> to vector<16x32xf32>
    %221 = arith.addf %219, %220 : vector<16x32xf32>
    %cst_91 = arith.constant dense<0.000000e+00> : vector<16x96xf32>
    %222 = tpu.matmul %221, %181, %cst_91 {dimension_numbers = #tpu.dot_dimension_numbers<[1], [0], [0], [1], [0, 0, 1, 1], [], []>} : vector<16x32xf32>, vector<32x96xf32>, vector<16x96xf32> -> vector<16x96xf32>
    %223 = vector.broadcast %183 : vector<1x96xf32> to vector<16x96xf32>
    %224 = arith.addf %222, %223 : vector<16x96xf32>
    %225 = vector.shape_cast %224 : vector<16x96xf32> to vector<2x8x96xf32>
    %cst_92 = arith.constant 0.000000e+00 : f32
    %226 = vector.broadcast %cst_92 : f32 to vector<16x32xf32>
    %227 = vector.extract_strided_slice %225 {offsets = [0, 0, 0], sizes = [2, 8, 8], strides = [1, 1, 1]} : vector<2x8x96xf32> to vector<2x8x8xf32>
    %228 = vector.extract_strided_slice %225 {offsets = [0, 0, 32], sizes = [2, 8, 8], strides = [1, 1, 1]} : vector<2x8x96xf32> to vector<2x8x8xf32>
    %229 = vector.extract_strided_slice %225 {offsets = [0, 0, 64], sizes = [2, 8, 8], strides = [1, 1, 1]} : vector<2x8x96xf32> to vector<2x8x8xf32>
    "tpu.trace_start"() <{level = 10 : i32, message = "bqd,bkd->bqk"}> : () -> ()
    %cst_93 = arith.constant dense<0.000000e+00> : vector<2x8x8xf32>
    %230 = tpu.matmul %227, %228, %cst_93 {dimension_numbers = #tpu.dot_dimension_numbers<[2], [2], [1], [1], [0, 0, 0, 1, 1, 1], [0], [0]>} : vector<2x8x8xf32>, vector<2x8x8xf32>, vector<2x8x8xf32> -> vector<2x8x8xf32>
    "tpu.trace_stop"() : () -> ()
    %cst_94 = arith.constant 0.353553385 : f32
    %231 = vector.broadcast %cst_94 : f32 to vector<2x8x8xf32>
    %232 = arith.mulf %230, %231 : vector<2x8x8xf32>
    %233 = vector.broadcast %6 : vector<2x1x8xf32> to vector<2x8x8xf32>
    %234 = arith.addf %232, %233 : vector<2x8x8xf32>
    %cst_95 = arith.constant dense<0xFF800000> : vector<2x8xf32>
    %235 = vector.multi_reduction <maximumf>, %234, %cst_95 [2] : vector<2x8x8xf32> to vector<2x8xf32>
    %236 = vector.shape_cast %235 : vector<2x8xf32> to vector<2x8x1xf32>
    %237 = vector.broadcast %236 : vector<2x8x1xf32> to vector<2x8x8xf32>
    %238 = arith.subf %234, %237 : vector<2x8x8xf32>
    %239 = math.exp %238 : vector<2x8x8xf32>
    %cst_96 = arith.constant dense<0.000000e+00> : vector<2x8xf32>
    %240 = vector.multi_reduction <add>, %239, %cst_96 [2] : vector<2x8x8xf32> to vector<2x8xf32>
    %241 = vector.shape_cast %240 : vector<2x8xf32> to vector<2x8x1xf32>
    %242 = tpu.reciprocal %241 {approx = true} : vector<2x8x1xf32> -> vector<2x8x1xf32>
    %243 = vector.broadcast %242 : vector<2x8x1xf32> to vector<2x8x8xf32>
    %244 = arith.mulf %239, %243 : vector<2x8x8xf32>
    "tpu.trace_start"() <{level = 10 : i32, message = "bqk,bkd->bqd"}> : () -> ()
    %cst_97 = arith.constant dense<0.000000e+00> : vector<2x8x8xf32>
    %245 = tpu.matmul %244, %229, %cst_97 {dimension_numbers = #tpu.dot_dimension_numbers<[2], [1], [1], [2], [0, 0, 0, 1, 1, 2], [0], [0]>} : vector<2x8x8xf32>, vector<2x8x8xf32>, vector<2x8x8xf32> -> vector<2x8x8xf32>
    "tpu.trace_stop"() : () -> ()
    %246 = vector.shape_cast %245 : vector<2x8x8xf32> to vector<16x8xf32>
    %247 = vector.extract_strided_slice %185 {offsets = [0, 0], sizes = [8, 32], strides = [1, 1]} : vector<32x32xf32> to vector<8x32xf32>
    %cst_98 = arith.constant dense<0.000000e+00> : vector<16x32xf32>
    %248 = tpu.matmul %246, %247, %cst_98 {dimension_numbers = #tpu.dot_dimension_numbers<[1], [0], [0], [1], [0, 0, 1, 1], [], []>} : vector<16x8xf32>, vector<8x32xf32>, vector<16x32xf32> -> vector<16x32xf32>
    %249 = arith.addf %226, %248 : vector<16x32xf32>
    %250 = vector.extract_strided_slice %225 {offsets = [0, 0, 8], sizes = [2, 8, 8], strides = [1, 1, 1]} : vector<2x8x96xf32> to vector<2x8x8xf32>
    %251 = vector.extract_strided_slice %225 {offsets = [0, 0, 40], sizes = [2, 8, 8], strides = [1, 1, 1]} : vector<2x8x96xf32> to vector<2x8x8xf32>
    %252 = vector.extract_strided_slice %225 {offsets = [0, 0, 72], sizes = [2, 8, 8], strides = [1, 1, 1]} : vector<2x8x96xf32> to vector<2x8x8xf32>
    "tpu.trace_start"() <{level = 10 : i32, message = "bqd,bkd->bqk"}> : () -> ()
    %cst_99 = arith.constant dense<0.000000e+00> : vector<2x8x8xf32>
    %253 = tpu.matmul %250, %251, %cst_99 {dimension_numbers = #tpu.dot_dimension_numbers<[2], [2], [1], [1], [0, 0, 0, 1, 1, 1], [0], [0]>} : vector<2x8x8xf32>, vector<2x8x8xf32>, vector<2x8x8xf32> -> vector<2x8x8xf32>
    "tpu.trace_stop"() : () -> ()
    %cst_100 = arith.constant 0.353553385 : f32
    %254 = vector.broadcast %cst_100 : f32 to vector<2x8x8xf32>
    %255 = arith.mulf %253, %254 : vector<2x8x8xf32>
    %256 = vector.broadcast %6 : vector<2x1x8xf32> to vector<2x8x8xf32>
    %257 = arith.addf %255, %256 : vector<2x8x8xf32>
    %cst_101 = arith.constant dense<0xFF800000> : vector<2x8xf32>
    %258 = vector.multi_reduction <maximumf>, %257, %cst_101 [2] : vector<2x8x8xf32> to vector<2x8xf32>
    %259 = vector.shape_cast %258 : vector<2x8xf32> to vector<2x8x1xf32>
    %260 = vector.broadcast %259 : vector<2x8x1xf32> to vector<2x8x8xf32>
    %261 = arith.subf %257, %260 : vector<2x8x8xf32>
    %262 = math.exp %261 : vector<2x8x8xf32>
    %cst_102 = arith.constant dense<0.000000e+00> : vector<2x8xf32>
    %263 = vector.multi_reduction <add>, %262, %cst_102 [2] : vector<2x8x8xf32> to vector<2x8xf32>
    %264 = vector.shape_cast %263 : vector<2x8xf32> to vector<2x8x1xf32>
    %265 = tpu.reciprocal %264 {approx = true} : vector<2x8x1xf32> -> vector<2x8x1xf32>
    %266 = vector.broadcast %265 : vector<2x8x1xf32> to vector<2x8x8xf32>
    %267 = arith.mulf %262, %266 : vector<2x8x8xf32>
    "tpu.trace_start"() <{level = 10 : i32, message = "bqk,bkd->bqd"}> : () -> ()
    %cst_103 = arith.constant dense<0.000000e+00> : vector<2x8x8xf32>
    %268 = tpu.matmul %267, %252, %cst_103 {dimension_numbers = #tpu.dot_dimension_numbers<[2], [1], [1], [2], [0, 0, 0, 1, 1, 2], [0], [0]>} : vector<2x8x8xf32>, vector<2x8x8xf32>, vector<2x8x8xf32> -> vector<2x8x8xf32>
    "tpu.trace_stop"() : () -> ()
    %269 = vector.shape_cast %268 : vector<2x8x8xf32> to vector<16x8xf32>
    %270 = vector.extract_strided_slice %185 {offsets = [8, 0], sizes = [8, 32], strides = [1, 1]} : vector<32x32xf32> to vector<8x32xf32>
    %cst_104 = arith.constant dense<0.000000e+00> : vector<16x32xf32>
    %271 = tpu.matmul %269, %270, %cst_104 {dimension_numbers = #tpu.dot_dimension_numbers<[1], [0], [0], [1], [0, 0, 1, 1], [], []>} : vector<16x8xf32>, vector<8x32xf32>, vector<16x32xf32> -> vector<16x32xf32>
    %272 = arith.addf %249, %271 : vector<16x32xf32>
    %273 = vector.extract_strided_slice %225 {offsets = [0, 0, 16], sizes = [2, 8, 8], strides = [1, 1, 1]} : vector<2x8x96xf32> to vector<2x8x8xf32>
    %274 = vector.extract_strided_slice %225 {offsets = [0, 0, 48], sizes = [2, 8, 8], strides = [1, 1, 1]} : vector<2x8x96xf32> to vector<2x8x8xf32>
    %275 = vector.extract_strided_slice %225 {offsets = [0, 0, 80], sizes = [2, 8, 8], strides = [1, 1, 1]} : vector<2x8x96xf32> to vector<2x8x8xf32>
    "tpu.trace_start"() <{level = 10 : i32, message = "bqd,bkd->bqk"}> : () -> ()
    %cst_105 = arith.constant dense<0.000000e+00> : vector<2x8x8xf32>
    %276 = tpu.matmul %273, %274, %cst_105 {dimension_numbers = #tpu.dot_dimension_numbers<[2], [2], [1], [1], [0, 0, 0, 1, 1, 1], [0], [0]>} : vector<2x8x8xf32>, vector<2x8x8xf32>, vector<2x8x8xf32> -> vector<2x8x8xf32>
    "tpu.trace_stop"() : () -> ()
    %cst_106 = arith.constant 0.353553385 : f32
    %277 = vector.broadcast %cst_106 : f32 to vector<2x8x8xf32>
    %278 = arith.mulf %276, %277 : vector<2x8x8xf32>
    %279 = vector.broadcast %6 : vector<2x1x8xf32> to vector<2x8x8xf32>
    %280 = arith.addf %278, %279 : vector<2x8x8xf32>
    %cst_107 = arith.constant dense<0xFF800000> : vector<2x8xf32>
    %281 = vector.multi_reduction <maximumf>, %280, %cst_107 [2] : vector<2x8x8xf32> to vector<2x8xf32>
    %282 = vector.shape_cast %281 : vector<2x8xf32> to vector<2x8x1xf32>
    %283 = vector.broadcast %282 : vector<2x8x1xf32> to vector<2x8x8xf32>
    %284 = arith.subf %280, %283 : vector<2x8x8xf32>
    %285 = math.exp %284 : vector<2x8x8xf32>
    %cst_108 = arith.constant dense<0.000000e+00> : vector<2x8xf32>
    %286 = vector.multi_reduction <add>, %285, %cst_108 [2] : vector<2x8x8xf32> to vector<2x8xf32>
    %287 = vector.shape_cast %286 : vector<2x8xf32> to vector<2x8x1xf32>
    %288 = tpu.reciprocal %287 {approx = true} : vector<2x8x1xf32> -> vector<2x8x1xf32>
    %289 = vector.broadcast %288 : vector<2x8x1xf32> to vector<2x8x8xf32>
    %290 = arith.mulf %285, %289 : vector<2x8x8xf32>
    "tpu.trace_start"() <{level = 10 : i32, message = "bqk,bkd->bqd"}> : () -> ()
    %cst_109 = arith.constant dense<0.000000e+00> : vector<2x8x8xf32>
    %291 = tpu.matmul %290, %275, %cst_109 {dimension_numbers = #tpu.dot_dimension_numbers<[2], [1], [1], [2], [0, 0, 0, 1, 1, 2], [0], [0]>} : vector<2x8x8xf32>, vector<2x8x8xf32>, vector<2x8x8xf32> -> vector<2x8x8xf32>
    "tpu.trace_stop"() : () -> ()
    %292 = vector.shape_cast %291 : vector<2x8x8xf32> to vector<16x8xf32>
    %293 = vector.extract_strided_slice %185 {offsets = [16, 0], sizes = [8, 32], strides = [1, 1]} : vector<32x32xf32> to vector<8x32xf32>
    %cst_110 = arith.constant dense<0.000000e+00> : vector<16x32xf32>
    %294 = tpu.matmul %292, %293, %cst_110 {dimension_numbers = #tpu.dot_dimension_numbers<[1], [0], [0], [1], [0, 0, 1, 1], [], []>} : vector<16x8xf32>, vector<8x32xf32>, vector<16x32xf32> -> vector<16x32xf32>
    %295 = arith.addf %272, %294 : vector<16x32xf32>
    %296 = vector.extract_strided_slice %225 {offsets = [0, 0, 24], sizes = [2, 8, 8], strides = [1, 1, 1]} : vector<2x8x96xf32> to vector<2x8x8xf32>
    %297 = vector.extract_strided_slice %225 {offsets = [0, 0, 56], sizes = [2, 8, 8], strides = [1, 1, 1]} : vector<2x8x96xf32> to vector<2x8x8xf32>
    %298 = vector.extract_strided_slice %225 {offsets = [0, 0, 88], sizes = [2, 8, 8], strides = [1, 1, 1]} : vector<2x8x96xf32> to vector<2x8x8xf32>
    "tpu.trace_start"() <{level = 10 : i32, message = "bqd,bkd->bqk"}> : () -> ()
    %cst_111 = arith.constant dense<0.000000e+00> : vector<2x8x8xf32>
    %299 = tpu.matmul %296, %297, %cst_111 {dimension_numbers = #tpu.dot_dimension_numbers<[2], [2], [1], [1], [0, 0, 0, 1, 1, 1], [0], [0]>} : vector<2x8x8xf32>, vector<2x8x8xf32>, vector<2x8x8xf32> -> vector<2x8x8xf32>
    "tpu.trace_stop"() : () -> ()
    %cst_112 = arith.constant 0.353553385 : f32
    %300 = vector.broadcast %cst_112 : f32 to vector<2x8x8xf32>
    %301 = arith.mulf %299, %300 : vector<2x8x8xf32>
    %302 = vector.broadcast %6 : vector<2x1x8xf32> to vector<2x8x8xf32>
    %303 = arith.addf %301, %302 : vector<2x8x8xf32>
    %cst_113 = arith.constant dense<0xFF800000> : vector<2x8xf32>
    %304 = vector.multi_reduction <maximumf>, %303, %cst_113 [2] : vector<2x8x8xf32> to vector<2x8xf32>
    %305 = vector.shape_cast %304 : vector<2x8xf32> to vector<2x8x1xf32>
    %306 = vector.broadcast %305 : vector<2x8x1xf32> to vector<2x8x8xf32>
    %307 = arith.subf %303, %306 : vector<2x8x8xf32>
    %308 = math.exp %307 : vector<2x8x8xf32>
    %cst_114 = arith.constant dense<0.000000e+00> : vector<2x8xf32>
    %309 = vector.multi_reduction <add>, %308, %cst_114 [2] : vector<2x8x8xf32> to vector<2x8xf32>
    %310 = vector.shape_cast %309 : vector<2x8xf32> to vector<2x8x1xf32>
    %311 = tpu.reciprocal %310 {approx = true} : vector<2x8x1xf32> -> vector<2x8x1xf32>
    %312 = vector.broadcast %311 : vector<2x8x1xf32> to vector<2x8x8xf32>
    %313 = arith.mulf %308, %312 : vector<2x8x8xf32>
    "tpu.trace_start"() <{level = 10 : i32, message = "bqk,bkd->bqd"}> : () -> ()
    %cst_115 = arith.constant dense<0.000000e+00> : vector<2x8x8xf32>
    %314 = tpu.matmul %313, %298, %cst_115 {dimension_numbers = #tpu.dot_dimension_numbers<[2], [1], [1], [2], [0, 0, 0, 1, 1, 2], [0], [0]>} : vector<2x8x8xf32>, vector<2x8x8xf32>, vector<2x8x8xf32> -> vector<2x8x8xf32>
    "tpu.trace_stop"() : () -> ()
    %315 = vector.shape_cast %314 : vector<2x8x8xf32> to vector<16x8xf32>
    %316 = vector.extract_strided_slice %185 {offsets = [24, 0], sizes = [8, 32], strides = [1, 1]} : vector<32x32xf32> to vector<8x32xf32>
    %cst_116 = arith.constant dense<0.000000e+00> : vector<16x32xf32>
    %317 = tpu.matmul %315, %316, %cst_116 {dimension_numbers = #tpu.dot_dimension_numbers<[1], [0], [0], [1], [0, 0, 1, 1], [], []>} : vector<16x8xf32>, vector<8x32xf32>, vector<16x32xf32> -> vector<16x32xf32>
    %318 = arith.addf %295, %317 : vector<16x32xf32>
    %319 = arith.addf %179, %318 : vector<16x32xf32>
    %320 = vector.broadcast %198 : vector<1x32xf32> to vector<16x32xf32>
    %321 = arith.addf %319, %320 : vector<16x32xf32>
    %cst_117 = arith.constant dense<0.000000e+00> : vector<16xf32>
    %322 = vector.multi_reduction <add>, %321, %cst_117 [1] : vector<16x32xf32> to vector<16xf32>
    %323 = vector.shape_cast %322 : vector<16xf32> to vector<16x1xf32>
    %cst_118 = arith.constant 3.200000e+01 : f32
    %324 = vector.broadcast %cst_118 : f32 to vector<16x1xf32>
    %325 = arith.divf %323, %324 : vector<16x1xf32>
    %326 = vector.broadcast %325 : vector<16x1xf32> to vector<16x32xf32>
    %327 = arith.subf %321, %326 : vector<16x32xf32>
    %328 = arith.mulf %327, %327 : vector<16x32xf32>
    %cst_119 = arith.constant dense<0.000000e+00> : vector<16xf32>
    %329 = vector.multi_reduction <add>, %328, %cst_119 [1] : vector<16x32xf32> to vector<16xf32>
    %330 = vector.shape_cast %329 : vector<16xf32> to vector<16x1xf32>
    %cst_120 = arith.constant 3.200000e+01 : f32
    %331 = vector.broadcast %cst_120 : f32 to vector<16x1xf32>
    %332 = arith.divf %330, %331 : vector<16x1xf32>
    %333 = vector.broadcast %325 : vector<16x1xf32> to vector<16x32xf32>
    %334 = arith.subf %321, %333 : vector<16x32xf32>
    %cst_121 = arith.constant 9.99999997E-7 : f32
    %335 = vector.broadcast %cst_121 : f32 to vector<16x1xf32>
    %336 = arith.addf %332, %335 : vector<16x1xf32>
    %337 = math.rsqrt %336 : vector<16x1xf32>
    %338 = vector.broadcast %337 : vector<16x1xf32> to vector<16x32xf32>
    %339 = arith.mulf %334, %338 : vector<16x32xf32>
    %340 = vector.broadcast %196 : vector<1x32xf32> to vector<16x32xf32>
    %341 = arith.mulf %339, %340 : vector<16x32xf32>
    %342 = vector.broadcast %197 : vector<1x32xf32> to vector<16x32xf32>
    %343 = arith.addf %341, %342 : vector<16x32xf32>
    %cst_122 = arith.constant dense<0.000000e+00> : vector<16x64xf32>
    %344 = tpu.matmul %343, %187, %cst_122 {dimension_numbers = #tpu.dot_dimension_numbers<[1], [0], [0], [1], [0, 0, 1, 1], [], []>} : vector<16x32xf32>, vector<32x64xf32>, vector<16x64xf32> -> vector<16x64xf32>
    %345 = vector.broadcast %189 : vector<1x64xf32> to vector<16x64xf32>
    %346 = arith.addf %344, %345 : vector<16x64xf32>
    %cst_123 = arith.constant 0.000000e+00 : f32
    %347 = vector.broadcast %cst_123 : f32 to vector<16x64xf32>
    %348 = arith.maximumf %346, %347 : vector<16x64xf32>
    %cst_124 = arith.constant dense<0.000000e+00> : vector<16x32xf32>
    %349 = tpu.matmul %348, %191, %cst_124 {dimension_numbers = #tpu.dot_dimension_numbers<[1], [0], [0], [1], [0, 0, 1, 1], [], []>} : vector<16x64xf32>, vector<64x32xf32>, vector<16x32xf32> -> vector<16x32xf32>
    %350 = arith.addf %321, %349 : vector<16x32xf32>
    %351 = vector.broadcast %199 : vector<1x32xf32> to vector<16x32xf32>
    %352 = arith.addf %350, %351 : vector<16x32xf32>
    %c0_125 = arith.constant 0 : index
    %c0_126 = arith.constant 0 : index
    %353 = vector.load %arg9[%c0_125, %c0_126] : memref<16x32xf32, #tpu.memory_space<vmem>>, vector<16x32xf32>
    tpu.vector_store %arg9[%c0_125, %c0_126], %352 {strides = array<i32>} : memref<16x32xf32, #tpu.memory_space<vmem>>, vector<16x32xf32>,
    return
  }
}

</mosaic_0001>

<llo_original>
// kernel: encoder_forward.1
$region0: #{encoder_forward.1}
  #allocation0 [shape = 'u32[]', space=smem, size = 0x4, offset = 0x4, fixed_abs, tag = 'smem constant byte address 0x4 - core index']
  #allocation1 [shape = 'u32[144,128]{1,0:T(1,128)}', space=vmem, size = 0x12000, scoped, tag = 'internal scratch']
  %s0 = inlined_call_operand.vmem [shape: f32[16,32], index: 0, kind: input, shape index: {}]
  %s1 = inlined_call_operand.vmem [shape: f32[2,1,8], index: 1, kind: input, shape index: {}]
  %s2 = inlined_call_operand.vmem [shape: f32[2,32,96], index: 2, kind: input, shape index: {}]
  %s3 = inlined_call_operand.vmem [shape: f32[2,1,96], index: 3, kind: input, shape index: {}]
  %s4 = inlined_call_operand.vmem [shape: f32[2,32,32], index: 4, kind: input, shape index: {}]
  %s5 = inlined_call_operand.vmem [shape: f32[2,32,64], index: 5, kind: input, shape index: {}]
  %s6 = inlined_call_operand.vmem [shape: f32[2,1,64], index: 6, kind: input, shape index: {}]
  %s7 = inlined_call_operand.vmem [shape: f32[2,64,32], index: 7, kind: input, shape index: {}]
  %s8 = inlined_call_operand.vmem [shape: f32[2,6,32], index: 8, kind: input, shape index: {}]
  %s9 = inlined_call_operand.hbm [shape: f32[16,32], index: 9, kind: output, shape index: {}]
  %s10 = sld [smem:[#allocation0]]
  $region46: #{encoder_forward.1} parent=0
    _
  %s12 = ssub.s32 1, %s10
  %s13 = scalar_select 0, %s12, %s10
  $region1: #{encoder_forward.1} parent=0
    #allocation2 [shape = 'u8[8192]{0}', space=vmem, size = 0x2000, scoped, tag = 'output window, operand 0, single buffered']
    #allocation3 [shape = 's32[1]{0}', space=sflag, size = 0x4, scoped, tag = 'scoped memory for encoder_forward.1']
    %14 = vsyncpa [#allocation3], 0
    // Predicated region
    $region2: #{encoder_forward.1} parent=1 // pred_check
      _
    $region3: #{encoder_forward.1} parent=1 // pred_check_branch
      %16 = sbr.rel (0) target = $region5
    $region4: #{encoder_forward.1} parent=1 // pred_region
      _
    $region5: #{encoder_forward.1} parent=1 // pred_fallthru
      _
    // Predicated region
    $region6: #{encoder_forward.1} parent=1 // pred_check
      _
    $region7: #{encoder_forward.1} parent=1 // pred_check_branch
      %18 = sbr.rel (0) target = $region9
    $region8: #{encoder_forward.1} parent=1 // pred_region
      _
    $region9: #{encoder_forward.1} parent=1 // pred_fallthru
      _
    // Predicated region
    $region10: #{encoder_forward.1} parent=1 // pred_check
      _
    $region11: #{encoder_forward.1} parent=1 // pred_check_branch
      %20 = sbr.rel (0) target = $region13
    $region12: #{encoder_forward.1} parent=1 // pred_region
      _
    $region13: #{encoder_forward.1} parent=1 // pred_fallthru
      _
    // Predicated region
    $region14: #{encoder_forward.1} parent=1 // pred_check
      _
    $region15: #{encoder_forward.1} parent=1 // pred_check_branch
      %22 = sbr.rel (0) target = $region17
    $region16: #{encoder_forward.1} parent=1 // pred_region
      _
    $region17: #{encoder_forward.1} parent=1 // pred_fallthru
      _
    // Predicated region
    $region18: #{encoder_forward.1} parent=1 // pred_check
      _
    $region19: #{encoder_forward.1} parent=1 // pred_check_branch
      %24 = sbr.rel (0) target = $region21
    $region20: #{encoder_forward.1} parent=1 // pred_region
      _
    $region21: #{encoder_forward.1} parent=1 // pred_fallthru
      _
    // Predicated region
    $region22: #{encoder_forward.1} parent=1 // pred_check
      _
    $region23: #{encoder_forward.1} parent=1 // pred_check_branch
      %26 = sbr.rel (0) target = $region25
    $region24: #{encoder_forward.1} parent=1 // pred_region
      _
    $region25: #{encoder_forward.1} parent=1 // pred_fallthru
      _
    // Predicated region
    $region26: #{encoder_forward.1} parent=1 // pred_check
      _
    $region27: #{encoder_forward.1} parent=1 // pred_check_branch
      %28 = sbr.rel (0) target = $region29
    $region28: #{encoder_forward.1} parent=1 // pred_region
      _
    $region29: #{encoder_forward.1} parent=1 // pred_fallthru
      _
    // Predicated region
    $region30: #{encoder_forward.1} parent=1 // pred_check
      _
    $region31: #{encoder_forward.1} parent=1 // pred_check_branch
      %30 = sbr.rel (0) target = $region33
    $region32: #{encoder_forward.1} parent=1 // pred_region
      _
    $region33: #{encoder_forward.1} parent=1 // pred_fallthru
      _
    // Predicated region
    $region34: #{encoder_forward.1} parent=1 // pred_check
      _
    $region35: #{encoder_forward.1} parent=1 // pred_check_branch
      %32 = sbr.rel (0) target = $region37
    $region36: #{encoder_forward.1} parent=1 // pred_region
      _
    $region37: #{encoder_forward.1} parent=1 // pred_fallthru
      _
    %v33 = vld [vmem:[%s0] sm:$0xff]
    %v34 = vld [vmem:[%s0 + $0x8] sm:$0xff]
    %v35 = vld [vmem:[%s1] sm:$0x1]
    %v36 = vld [vmem:[%s1 + $0x1] sm:$0x1]
    %vm37 = vcmp.gt.f32.partialorder %v35, 0.0
    %vm38 = vcmp.gt.f32.partialorder %v36, 0.0
    %v39 = vsel %vm37, 0.0, -1e+09
    %v40 = vsel %vm38, 0.0, -1e+09
    %v41 = vld [vmem:[%s2] sm:$0xff]
    %v42 = vld [vmem:[%s2 + $0x8] sm:$0xff]
    %v43 = vld [vmem:[%s2 + $0x10] sm:$0xff]
    %v44 = vld [vmem:[%s2 + $0x18] sm:$0xff]
    %v45 = vld [vmem:[%s3] sm:$0x1]
    %v46 = vld [vmem:[%s4] sm:$0xff]
    %v47 = vld [vmem:[%s4 + $0x8] sm:$0xff]
    %v48 = vld [vmem:[%s4 + $0x10] sm:$0xff]
    %v49 = vld [vmem:[%s4 + $0x18] sm:$0xff]
    %v50 = vld [vmem:[%s5] sm:$0xff]
    %v51 = vld [vmem:[%s5 + $0x8] sm:$0xff]
    %v52 = vld [vmem:[%s5 + $0x10] sm:$0xff]
    %v53 = vld [vmem:[%s5 + $0x18] sm:$0xff]
    %v54 = vld [vmem:[%s6] sm:$0x1]
    %v55 = vld [vmem:[%s7] sm:$0xff]
    %v56 = vld [vmem:[%s7 + $0x8] sm:$0xff]
    %v57 = vld [vmem:[%s7 + $0x10] sm:$0xff]
    %v58 = vld [vmem:[%s7 + $0x18] sm:$0xff]
    %v59 = vld [vmem:[%s7 + $0x20] sm:$0xff]
    %v60 = vld [vmem:[%s7 + $0x28] sm:$0xff]
    %v61 = vld [vmem:[%s7 + $0x30] sm:$0xff]
    %v62 = vld [vmem:[%s7 + $0x38] sm:$0xff]
    %v63 = vld [vmem:[%s8] sm:$0x3f]
    %vm64 = vcmask 261120
    %v65 = vsel %vm64, %v33, 0.0
    %66 = vadd.xlane.f32.xlu0 %v65
    %v67 = vpop.xlane.xlu0 %66
    %v68 = vsel %vm64, %v34, 0.0
    %69 = vadd.xlane.f32.xlu0 %v68
    %v70 = vpop.xlane.xlu0 %69
    %v71 = vrcp.pop 32.0
    %v72 = vmul.f32 %v67, %v71
    %v73 = vmul.f32 %v70, %v71
    %v74 = vsub.f32 %v33, %v72
    %v75 = vsub.f32 %v34, %v73
    %v76 = vmul.f32 %v74, %v74
    %v77 = vmul.f32 %v75, %v75
    %v78 = vsel %vm64, %v76, 0.0
    %79 = vadd.xlane.f32.xlu0 %v78
    %v80 = vpop.xlane.xlu0 %79
    %v81 = vsel %vm64, %v77, 0.0
    %82 = vadd.xlane.f32.xlu0 %v81
    %v83 = vpop.xlane.xlu0 %82
    %v84 = vmul.f32 %v80, %v71
    %v85 = vmul.f32 %v83, %v71
    %v86 = vadd.f32 %v84, 1e-06
    %v87 = vadd.f32 %v85, 1e-06
    %v88 = vrsqrt.pop %v86
    %v89 = vrsqrt.pop %v87
    %v90 = vmul.f32 %v74, %v88
    %v91 = vmul.f32 %v75, %v89
    %v92 = vlaneseq
    %v93 = vshrl.u32 %v92, 7
    %v94 = vsub.s32 0, %v93
    %v95 = vrot.slane %v63, %v94
    %v96 = vmul.f32 %v90, %v95
    %v97 = vmul.f32 %v91, %v95
    %v98 = vlaneseq
    %v99 = vshrl.u32 %v98, 7
    %v100 = vsub.s32 1, %v99
    %v101 = vrot.slane %v63, %v100
    %v102 = vadd.f32 %v96, %v101
    %v103 = vadd.f32 %v97, %v101
    %v105 = vlaneseq
    %v106 = vshrl.u32 %v105, 7
    %v107 = vsub.s32 0, %v106
    %v108 = vrot.slane %v45, %v107
    %v111 = vsel %vm64, %v102, 0
    %v114 = vsel %vm64, %v103, 0
    %116 = vmatprep.subr.mxu0 0.0
    %117 = vmatpush1.msra.mxu0 0.0
    %118 = vmatprep.subr.mxu0 0.0
    %119 = vmatpush1.msra.mxu0 0.0
    %120 = vmatprep.subr.mxu0 0.0
    %121 = vmatpush1.msra.mxu0 0.0
    %122 = vmatprep.subr.mxu0 0.0
    %123 = vmatpush1.msra.mxu0 0.0
    %124 = vmatprep.subr.mxu0 0.0
    %125 = vmatpush1.msra.mxu0 0.0
    %126 = vmatprep.subr.mxu0 0.0
    %127 = vmatpush1.msra.mxu0 0.0
    %128 = vmatprep.subr.mxu0 0.0
    %129 = vmatpush1.msra.mxu0 0.0
    %130 = vmatprep.subr.mxu0 0.0
    %131 = vmatpush1.msra.mxu0 0.0
    %132 = vmatprep.subr.mxu0 0.0
    %133 = vmatpush1.msra.mxu0 0.0
    %134 = vmatprep.subr.mxu0 0.0
    %135 = vmatpush1.msra.mxu0 0.0
    %136 = vmatprep.subr.mxu0 0.0
    %137 = vmatpush1.msra.mxu0 0.0
    %138 = vmatprep.subr.mxu0 0.0
    %139 = vmatpush1.msra.mxu0 0.0
    %140 = vmatprep.subr.mxu0 0.0
    %141 = vmatpush1.msra.mxu0 %v44
    %142 = vmatprep.subr.mxu0 0.0
    %143 = vmatpush1.msra.mxu0 %v43
    %144 = vmatprep.subr.mxu0 0.0
    %145 = vmatpush1.msra.mxu0 %v42
    %146 = vmatprep.subr.mxu0 0.0
    %147 = vmatpush1.msra.mxu0 %v41
    %148 = vmatprep.subr.mxu0 0.0
    %149 = vmatpush2.msra.mxu0 0.0
    %150 = vmatprep.subr.mxu0 0.0
    %151 = vmatpush2.msra.mxu0 0.0
    %152 = vmatprep.subr.mxu0 0.0
    %153 = vmatpush2.msra.mxu0 0.0
    %154 = vmatprep.subr.mxu0 0.0
    %155 = vmatpush2.msra.mxu0 0.0
    %156 = vmatprep.subr.mxu0 0.0
    %157 = vmatpush2.msra.mxu0 0.0
    %158 = vmatprep.subr.mxu0 0.0
    %159 = vmatpush2.msra.mxu0 0.0
    %160 = vmatprep.subr.mxu0 0.0
    %161 = vmatpush2.msra.mxu0 0.0
    %162 = vmatprep.subr.mxu0 0.0
    %163 = vmatpush2.msra.mxu0 0.0
    %164 = vmatprep.subr.mxu0 0.0
    %165 = vmatpush2.msra.mxu0 0.0
    %166 = vmatprep.subr.mxu0 0.0
    %167 = vmatpush2.msra.mxu0 0.0
    %168 = vmatprep.subr.mxu0 0.0
    %169 = vmatpush2.msra.mxu0 0.0
    %170 = vmatprep.subr.mxu0 0.0
    %171 = vmatpush2.msra.mxu0 0.0
    %172 = vmatprep.subr.mxu0 0.0
    %173 = vmatpush2.msra.mxu0 0.0
    %174 = vmatprep.subr.mxu0 0.0
    %175 = vmatpush2.msra.mxu0 0.0
    %176 = vmatprep.subr.mxu0 0.0
    %177 = vmatpush2.msra.mxu0 0.0
    %178 = vmatprep.subr.mxu0 0.0
    %179 = vmatpush2.msra.mxu0 0.0
    %180 = vmatprep.mubr.f32.mxu0 0.0
    %181 = vmatmul.mubr.f32.gmra.mxu0 %v111
    %v182 = vpop.f32.mrf.mxu0
    %v183 = vadd.f32 %v108, %v182
    %v184 = vpop.f32.mrf.mxu0
    %185 = vmatprep.mubr.f32.mxu0 0.0
    %186 = vmatmul.mubr.f32.gmra.mxu0 %v114
    %v187 = vpop.f32.mrf.mxu0
    %v188 = vadd.f32 %v108, %v187
    %v189 = vpop.f32.mrf.mxu0
    %190 = vdwg.mxu0
    %192 = vrot.lane.b32.xlu0 %v183, 96
    %v193 = vpop.permute.xlu0 %192
    %vm194 = vcmask 64512
    %v195 = vsel %vm194, %v183, 0
    %v197 = vsel %vm194, %v193, 0
    %199 = vmatprep.subr.mxu0 0.0
    %200 = vmatpush1.xpose.msra.mxu0 0.0
    %201 = vmatprep.subr.mxu0 0.0
    %202 = vmatpush1.xpose.msra.mxu0 0.0
    %203 = vmatprep.subr.mxu0 0.0
    %204 = vmatpush1.xpose.msra.mxu0 0.0
    %205 = vmatprep.subr.mxu0 0.0
    %206 = vmatpush1.xpose.msra.mxu0 0.0
    %207 = vmatprep.subr.mxu0 0.0
    %208 = vmatpush1.xpose.msra.mxu0 0.0
    %209 = vmatprep.subr.mxu0 0.0
    %210 = vmatpush1.xpose.msra.mxu0 0.0
    %211 = vmatprep.subr.mxu0 0.0
    %212 = vmatpush1.xpose.msra.mxu0 0.0
    %213 = vmatprep.subr.mxu0 0.0
    %214 = vmatpush1.xpose.msra.mxu0 0.0
    %215 = vmatprep.subr.mxu0 0.0
    %216 = vmatpush1.xpose.msra.mxu0 0.0
    %217 = vmatprep.subr.mxu0 0.0
    %218 = vmatpush1.xpose.msra.mxu0 0.0
    %219 = vmatprep.subr.mxu0 0.0
    %220 = vmatpush1.xpose.msra.mxu0 0.0
    %221 = vmatprep.subr.mxu0 0.0
    %222 = vmatpush1.xpose.msra.mxu0 0.0
    %223 = vmatprep.subr.mxu0 0.0
    %224 = vmatpush1.xpose.msra.mxu0 0.0
    %225 = vmatprep.subr.mxu0 0.0
    %226 = vmatpush1.xpose.msra.mxu0 0.0
    %227 = vmatprep.subr.mxu0 0.0
    %228 = vmatpush1.xpose.msra.mxu0 0.0
    %229 = vmatprep.subr.mxu0 0.0
    %230 = vmatpush1.xpose.msra.mxu0 %v197
    %231 = vmatprep.subr.mxu0 0.0
    %232 = vmatpush2.xpose.msra.mxu0 0.0
    %233 = vmatprep.subr.mxu0 0.0
    %234 = vmatpush2.xpose.msra.mxu0 0.0
    %235 = vmatprep.subr.mxu0 0.0
    %236 = vmatpush2.xpose.msra.mxu0 0.0
    %237 = vmatprep.subr.mxu0 0.0
    %238 = vmatpush2.xpose.msra.mxu0 0.0
    %239 = vmatprep.subr.mxu0 0.0
    %240 = vmatpush2.xpose.msra.mxu0 0.0
    %241 = vmatprep.subr.mxu0 0.0
    %242 = vmatpush2.xpose.msra.mxu0 0.0
    %243 = vmatprep.subr.mxu0 0.0
    %244 = vmatpush2.xpose.msra.mxu0 0.0
    %245 = vmatprep.subr.mxu0 0.0
    %246 = vmatpush2.xpose.msra.mxu0 0.0
    %247 = vmatprep.subr.mxu0 0.0
    %248 = vmatpush2.xpose.msra.mxu0 0.0
    %249 = vmatprep.subr.mxu0 0.0
    %250 = vmatpush2.xpose.msra.mxu0 0.0
    %251 = vmatprep.subr.mxu0 0.0
    %252 = vmatpush2.xpose.msra.mxu0 0.0
    %253 = vmatprep.subr.mxu0 0.0
    %254 = vmatpush2.xpose.msra.mxu0 0.0
    %255 = vmatprep.subr.mxu0 0.0
    %256 = vmatpush2.xpose.msra.mxu0 0.0
    %257 = vmatprep.subr.mxu0 0.0
    %258 = vmatpush2.xpose.msra.mxu0 0.0
    %259 = vmatprep.subr.mxu0 0.0
    %260 = vmatpush2.xpose.msra.mxu0 0.0
    %261 = vmatprep.subr.mxu0 0.0
    %262 = vmatpush2.xpose.msra.mxu0 0.0
    %263 = vmatprep.mubr.f32.mxu0 0.0
    %264 = vmatmul.mubr.f32.gmra.mxu0 %v195
    %v265 = vpop.f32.mrf.mxu0
    %v266 = vadd.f32 0.0, %v265
    %v267 = vpop.f32.mrf.mxu0
    %268 = vdwg.mxu0
    %270 = vrot.lane.b32.xlu0 %v188, 96
    %v271 = vpop.permute.xlu0 %270
    %v272 = vsel %vm194, %v188, 0
    %v274 = vsel %vm194, %v271, 0
    %276 = vmatprep.subr.mxu0 0.0
    %277 = vmatpush1.xpose.msra.mxu0 0.0
    %278 = vmatprep.subr.mxu0 0.0
    %279 = vmatpush1.xpose.msra.mxu0 0.0
    %280 = vmatprep.subr.mxu0 0.0
    %281 = vmatpush1.xpose.msra.mxu0 0.0
    %282 = vmatprep.subr.mxu0 0.0
    %283 = vmatpush1.xpose.msra.mxu0 0.0
    %284 = vmatprep.subr.mxu0 0.0
    %285 = vmatpush1.xpose.msra.mxu0 0.0
    %286 = vmatprep.subr.mxu0 0.0
    %287 = vmatpush1.xpose.msra.mxu0 0.0
    %288 = vmatprep.subr.mxu0 0.0
    %289 = vmatpush1.xpose.msra.mxu0 0.0
    %290 = vmatprep.subr.mxu0 0.0
    %291 = vmatpush1.xpose.msra.mxu0 0.0
    %292 = vmatprep.subr.mxu0 0.0
    %293 = vmatpush1.xpose.msra.mxu0 0.0
    %294 = vmatprep.subr.mxu0 0.0
    %295 = vmatpush1.xpose.msra.mxu0 0.0
    %296 = vmatprep.subr.mxu0 0.0
    %297 = vmatpush1.xpose.msra.mxu0 0.0
    %298 = vmatprep.subr.mxu0 0.0
    %299 = vmatpush1.xpose.msra.mxu0 0.0
    %300 = vmatprep.subr.mxu0 0.0
    %301 = vmatpush1.xpose.msra.mxu0 0.0
    %302 = vmatprep.subr.mxu0 0.0
    %303 = vmatpush1.xpose.msra.mxu0 0.0
    %304 = vmatprep.subr.mxu0 0.0
    %305 = vmatpush1.xpose.msra.mxu0 0.0
    %306 = vmatprep.subr.mxu0 0.0
    %307 = vmatpush1.xpose.msra.mxu0 %v274
    %308 = vmatprep.subr.mxu0 0.0
    %309 = vmatpush2.xpose.msra.mxu0 0.0
    %310 = vmatprep.subr.mxu0 0.0
    %311 = vmatpush2.xpose.msra.mxu0 0.0
    %312 = vmatprep.subr.mxu0 0.0
    %313 = vmatpush2.xpose.msra.mxu0 0.0
    %314 = vmatprep.subr.mxu0 0.0
    %315 = vmatpush2.xpose.msra.mxu0 0.0
    %316 = vmatprep.subr.mxu0 0.0
    %317 = vmatpush2.xpose.msra.mxu0 0.0
    %318 = vmatprep.subr.mxu0 0.0
    %319 = vmatpush2.xpose.msra.mxu0 0.0
    %320 = vmatprep.subr.mxu0 0.0
    %321 = vmatpush2.xpose.msra.mxu0 0.0
    %322 = vmatprep.subr.mxu0 0.0
    %323 = vmatpush2.xpose.msra.mxu0 0.0
    %324 = vmatprep.subr.mxu0 0.0
    %325 = vmatpush2.xpose.msra.mxu0 0.0
    %326 = vmatprep.subr.mxu0 0.0
    %327 = vmatpush2.xpose.msra.mxu0 0.0
    %328 = vmatprep.subr.mxu0 0.0
    %329 = vmatpush2.xpose.msra.mxu0 0.0
    %330 = vmatprep.subr.mxu0 0.0
    %331 = vmatpush2.xpose.msra.mxu0 0.0
    %332 = vmatprep.subr.mxu0 0.0
    %333 = vmatpush2.xpose.msra.mxu0 0.0
    %334 = vmatprep.subr.mxu0 0.0
    %335 = vmatpush2.xpose.msra.mxu0 0.0
    %336 = vmatprep.subr.mxu0 0.0
    %337 = vmatpush2.xpose.msra.mxu0 0.0
    %338 = vmatprep.subr.mxu0 0.0
    %339 = vmatpush2.xpose.msra.mxu0 0.0
    %340 = vmatprep.mubr.f32.mxu0 0.0
    %341 = vmatmul.mubr.f32.gmra.mxu0 %v272
    %v342 = vpop.f32.mrf.mxu0
    %v343 = vadd.f32 0.0, %v342
    %v344 = vpop.f32.mrf.mxu0
    %345 = vdwg.mxu0
    %v346 = vmul.f32 %v266, 0.35355338
    %v347 = vmul.f32 %v343, 0.35355338
    %v350 = vlaneseq
    %v351 = vshrl.u32 %v350, 7
    %v352 = vsub.s32 0, %v351
    %v353 = vrot.slane %v39, %v352
    %v354 = vlaneseq
    %v355 = vshrl.u32 %v354, 7
    %v356 = vsub.s32 0, %v355
    %v357 = vrot.slane %v40, %v356
    %v360 = vadd.f32 %v346, %v353
    %v361 = vadd.f32 %v347, %v357
    %v362 = vsel %vm194, %v360, -inf
    %363 = vmax.xlane.f32.xlu0 %v362
    %v364 = vpop.xlane.xlu0 %363
    %v365 = vsel %vm194, %v361, -inf
    %366 = vmax.xlane.f32.xlu0 %v365
    %v367 = vpop.xlane.xlu0 %366
    %v368 = vsub.f32 %v360, %v364
    %v369 = vsub.f32 %v361, %v367
    %v370 = vmul.f32 %v368, 1.442695
    %v371 = vpow.pop %v370
    %v372 = vmul.f32 %v369, 1.442695
    %v373 = vpow.pop %v372
    %v374 = vsel %vm194, %v371, 0.0
    %375 = vadd.xlane.f32.xlu0 %v374
    %v376 = vpop.xlane.xlu0 %375
    %v377 = vsel %vm194, %v373, 0.0
    %378 = vadd.xlane.f32.xlu0 %v377
    %v379 = vpop.xlane.xlu0 %378
    %v380 = vrcp.pop %v376
    %v381 = vrcp.pop %v379
    %v382 = vmul.f32 %v371, %v380
    %v383 = vmul.f32 %v373, %v381
    %384 = vrot.lane.b32.xlu0 %v183, 64
    %v385 = vpop.permute.xlu0 %384
    %v388 = vsel %vm194, %v382, 0
    %390 = vmatprep.subr.mxu0 0.0
    %391 = vmatpush1.msra.mxu0 0.0
    %392 = vmatprep.subr.mxu0 0.0
    %393 = vmatpush1.msra.mxu0 0.0
    %394 = vmatprep.subr.mxu0 0.0
    %395 = vmatpush1.msra.mxu0 0.0
    %396 = vmatprep.subr.mxu0 0.0
    %397 = vmatpush1.msra.mxu0 0.0
    %398 = vmatprep.subr.mxu0 0.0
    %399 = vmatpush1.msra.mxu0 0.0
    %400 = vmatprep.subr.mxu0 0.0
    %401 = vmatpush1.msra.mxu0 0.0
    %402 = vmatprep.subr.mxu0 0.0
    %403 = vmatpush1.msra.mxu0 0.0
    %404 = vmatprep.subr.mxu0 0.0
    %405 = vmatpush1.msra.mxu0 0.0
    %406 = vmatprep.subr.mxu0 0.0
    %407 = vmatpush1.msra.mxu0 0.0
    %408 = vmatprep.subr.mxu0 0.0
    %409 = vmatpush1.msra.mxu0 0.0
    %410 = vmatprep.subr.mxu0 0.0
    %411 = vmatpush1.msra.mxu0 0.0
    %412 = vmatprep.subr.mxu0 0.0
    %413 = vmatpush1.msra.mxu0 0.0
    %414 = vmatprep.subr.mxu0 0.0
    %415 = vmatpush1.msra.mxu0 0.0
    %416 = vmatprep.subr.mxu0 0.0
    %417 = vmatpush1.msra.mxu0 0.0
    %418 = vmatprep.subr.mxu0 0.0
    %419 = vmatpush1.msra.mxu0 0.0
    %420 = vmatprep.subr.mxu0 0.0
    %421 = vmatpush1.msra.mxu0 %v385
    %422 = vmatprep.subr.mxu0 0.0
    %423 = vmatpush2.msra.mxu0 0.0
    %424 = vmatprep.subr.mxu0 0.0
    %425 = vmatpush2.msra.mxu0 0.0
    %426 = vmatprep.subr.mxu0 0.0
    %427 = vmatpush2.msra.mxu0 0.0
    %428 = vmatprep.subr.mxu0 0.0
    %429 = vmatpush2.msra.mxu0 0.0
    %430 = vmatprep.subr.mxu0 0.0
    %431 = vmatpush2.msra.mxu0 0.0
    %432 = vmatprep.subr.mxu0 0.0
    %433 = vmatpush2.msra.mxu0 0.0
    %434 = vmatprep.subr.mxu0 0.0
    %435 = vmatpush2.msra.mxu0 0.0
    %436 = vmatprep.subr.mxu0 0.0
    %437 = vmatpush2.msra.mxu0 0.0
    %438 = vmatprep.subr.mxu0 0.0
    %439 = vmatpush2.msra.mxu0 0.0
    %440 = vmatprep.subr.mxu0 0.0
    %441 = vmatpush2.msra.mxu0 0.0
    %442 = vmatprep.subr.mxu0 0.0
    %443 = vmatpush2.msra.mxu0 0.0
    %444 = vmatprep.subr.mxu0 0.0
    %445 = vmatpush2.msra.mxu0 0.0
    %446 = vmatprep.subr.mxu0 0.0
    %447 = vmatpush2.msra.mxu0 0.0
    %448 = vmatprep.subr.mxu0 0.0
    %449 = vmatpush2.msra.mxu0 0.0
    %450 = vmatprep.subr.mxu0 0.0
    %451 = vmatpush2.msra.mxu0 0.0
    %452 = vmatprep.subr.mxu0 0.0
    %453 = vmatpush2.msra.mxu0 0.0
    %454 = vmatprep.mubr.f32.mxu0 0.0
    %455 = vmatmul.mubr.f32.gmra.mxu0 %v388
    %v456 = vpop.f32.mrf.mxu0
    %v457 = vadd.f32 0.0, %v456
    %v458 = vpop.f32.mrf.mxu0
    %459 = vdwg.mxu0
    %460 = vrot.lane.b32.xlu0 %v188, 64
    %v461 = vpop.permute.xlu0 %460
    %v464 = vsel %vm194, %v383, 0
    %466 = vmatprep.subr.mxu0 0.0
    %467 = vmatpush1.msra.mxu0 0.0
    %468 = vmatprep.subr.mxu0 0.0
    %469 = vmatpush1.msra.mxu0 0.0
    %470 = vmatprep.subr.mxu0 0.0
    %471 = vmatpush1.msra.mxu0 0.0
    %472 = vmatprep.subr.mxu0 0.0
    %473 = vmatpush1.msra.mxu0 0.0
    %474 = vmatprep.subr.mxu0 0.0
    %475 = vmatpush1.msra.mxu0 0.0
    %476 = vmatprep.subr.mxu0 0.0
    %477 = vmatpush1.msra.mxu0 0.0
    %478 = vmatprep.subr.mxu0 0.0
    %479 = vmatpush1.msra.mxu0 0.0
    %480 = vmatprep.subr.mxu0 0.0
    %481 = vmatpush1.msra.mxu0 0.0
    %482 = vmatprep.subr.mxu0 0.0
    %483 = vmatpush1.msra.mxu0 0.0
    %484 = vmatprep.subr.mxu0 0.0
    %485 = vmatpush1.msra.mxu0 0.0
    %486 = vmatprep.subr.mxu0 0.0
    %487 = vmatpush1.msra.mxu0 0.0
    %488 = vmatprep.subr.mxu0 0.0
    %489 = vmatpush1.msra.mxu0 0.0
    %490 = vmatprep.subr.mxu0 0.0
    %491 = vmatpush1.msra.mxu0 0.0
    %492 = vmatprep.subr.mxu0 0.0
    %493 = vmatpush1.msra.mxu0 0.0
    %494 = vmatprep.subr.mxu0 0.0
    %495 = vmatpush1.msra.mxu0 0.0
    %496 = vmatprep.subr.mxu0 0.0
    %497 = vmatpush1.msra.mxu0 %v461
    %498 = vmatprep.subr.mxu0 0.0
    %499 = vmatpush2.msra.mxu0 0.0
    %500 = vmatprep.subr.mxu0 0.0
    %501 = vmatpush2.msra.mxu0 0.0
    %502 = vmatprep.subr.mxu0 0.0
    %503 = vmatpush2.msra.mxu0 0.0
    %504 = vmatprep.subr.mxu0 0.0
    %505 = vmatpush2.msra.mxu0 0.0
    %506 = vmatprep.subr.mxu0 0.0
    %507 = vmatpush2.msra.mxu0 0.0
    %508 = vmatprep.subr.mxu0 0.0
    %509 = vmatpush2.msra.mxu0 0.0
    %510 = vmatprep.subr.mxu0 0.0
    %511 = vmatpush2.msra.mxu0 0.0
    %512 = vmatprep.subr.mxu0 0.0
    %513 = vmatpush2.msra.mxu0 0.0
    %514 = vmatprep.subr.mxu0 0.0
    %515 = vmatpush2.msra.mxu0 0.0
    %516 = vmatprep.subr.mxu0 0.0
    %517 = vmatpush2.msra.mxu0 0.0
    %518 = vmatprep.subr.mxu0 0.0
    %519 = vmatpush2.msra.mxu0 0.0
    %520 = vmatprep.subr.mxu0 0.0
    %521 = vmatpush2.msra.mxu0 0.0
    %522 = vmatprep.subr.mxu0 0.0
    %523 = vmatpush2.msra.mxu0 0.0
    %524 = vmatprep.subr.mxu0 0.0
    %525 = vmatpush2.msra.mxu0 0.0
    %526 = vmatprep.subr.mxu0 0.0
    %527 = vmatpush2.msra.mxu0 0.0
    %528 = vmatprep.subr.mxu0 0.0
    %529 = vmatpush2.msra.mxu0 0.0
    %530 = vmatprep.mubr.f32.mxu0 0.0
    %531 = vmatmul.mubr.f32.gmra.mxu0 %v464
    %v532 = vpop.f32.mrf.mxu0
    %v533 = vadd.f32 0.0, %v532
    %v534 = vpop.f32.mrf.mxu0
    %535 = vdwg.mxu0
    %536 = vrot.lane.b32.xlu0 %v183, 120
    %v537 = vpop.permute.xlu0 %536
    %538 = vrot.lane.b32.xlu0 %v183, 88
    %v539 = vpop.permute.xlu0 %538
    %v540 = vsel %vm194, %v537, 0
    %v542 = vsel %vm194, %v539, 0
    %544 = vmatprep.subr.mxu0 0.0
    %545 = vmatpush1.xpose.msra.mxu0 0.0
    %546 = vmatprep.subr.mxu0 0.0
    %547 = vmatpush1.xpose.msra.mxu0 0.0
    %548 = vmatprep.subr.mxu0 0.0
    %549 = vmatpush1.xpose.msra.mxu0 0.0
    %550 = vmatprep.subr.mxu0 0.0
    %551 = vmatpush1.xpose.msra.mxu0 0.0
    %552 = vmatprep.subr.mxu0 0.0
    %553 = vmatpush1.xpose.msra.mxu0 0.0
    %554 = vmatprep.subr.mxu0 0.0
    %555 = vmatpush1.xpose.msra.mxu0 0.0
    %556 = vmatprep.subr.mxu0 0.0
    %557 = vmatpush1.xpose.msra.mxu0 0.0
    %558 = vmatprep.subr.mxu0 0.0
    %559 = vmatpush1.xpose.msra.mxu0 0.0
    %560 = vmatprep.subr.mxu0 0.0
    %561 = vmatpush1.xpose.msra.mxu0 0.0
    %562 = vmatprep.subr.mxu0 0.0
    %563 = vmatpush1.xpose.msra.mxu0 0.0
    %564 = vmatprep.subr.mxu0 0.0
    %565 = vmatpush1.xpose.msra.mxu0 0.0
    %566 = vmatprep.subr.mxu0 0.0
    %567 = vmatpush1.xpose.msra.mxu0 0.0
    %568 = vmatprep.subr.mxu0 0.0
    %569 = vmatpush1.xpose.msra.mxu0 0.0
    %570 = vmatprep.subr.mxu0 0.0
    %571 = vmatpush1.xpose.msra.mxu0 0.0
    %572 = vmatprep.subr.mxu0 0.0
    %573 = vmatpush1.xpose.msra.mxu0 0.0
    %574 = vmatprep.subr.mxu0 0.0
    %575 = vmatpush1.xpose.msra.mxu0 %v542
    %576 = vmatprep.subr.mxu0 0.0
    %577 = vmatpush2.xpose.msra.mxu0 0.0
    %578 = vmatprep.subr.mxu0 0.0
    %579 = vmatpush2.xpose.msra.mxu0 0.0
    %580 = vmatprep.subr.mxu0 0.0
    %581 = vmatpush2.xpose.msra.mxu0 0.0
    %582 = vmatprep.subr.mxu0 0.0
    %583 = vmatpush2.xpose.msra.mxu0 0.0
    %584 = vmatprep.subr.mxu0 0.0
    %585 = vmatpush2.xpose.msra.mxu0 0.0
    %586 = vmatprep.subr.mxu0 0.0
    %587 = vmatpush2.xpose.msra.mxu0 0.0
    %588 = vmatprep.subr.mxu0 0.0
    %589 = vmatpush2.xpose.msra.mxu0 0.0
    %590 = vmatprep.subr.mxu0 0.0
    %591 = vmatpush2.xpose.msra.mxu0 0.0
    %592 = vmatprep.subr.mxu0 0.0
    %593 = vmatpush2.xpose.msra.mxu0 0.0
    %594 = vmatprep.subr.mxu0 0.0
    %595 = vmatpush2.xpose.msra.mxu0 0.0
    %596 = vmatprep.subr.mxu0 0.0
    %597 = vmatpush2.xpose.msra.mxu0 0.0
    %598 = vmatprep.subr.mxu0 0.0
    %599 = vmatpush2.xpose.msra.mxu0 0.0
    %600 = vmatprep.subr.mxu0 0.0
    %601 = vmatpush2.xpose.msra.mxu0 0.0
    %602 = vmatprep.subr.mxu0 0.0
    %603 = vmatpush2.xpose.msra.mxu0 0.0
    %604 = vmatprep.subr.mxu0 0.0
    %605 = vmatpush2.xpose.msra.mxu0 0.0
    %606 = vmatprep.subr.mxu0 0.0
    %607 = vmatpush2.xpose.msra.mxu0 0.0
    %608 = vmatprep.mubr.f32.mxu0 0.0
    %609 = vmatmul.mubr.f32.gmra.mxu0 %v540
    %v610 = vpop.f32.mrf.mxu0
    %v611 = vadd.f32 0.0, %v610
    %v612 = vpop.f32.mrf.mxu0
    %613 = vdwg.mxu0
    %614 = vrot.lane.b32.xlu0 %v188, 120
    %v615 = vpop.permute.xlu0 %614
    %616 = vrot.lane.b32.xlu0 %v188, 88
    %v617 = vpop.permute.xlu0 %616
    %v618 = vsel %vm194, %v615, 0
    %v620 = vsel %vm194, %v617, 0
    %622 = vmatprep.subr.mxu0 0.0
    %623 = vmatpush1.xpose.msra.mxu0 0.0
    %624 = vmatprep.subr.mxu0 0.0
    %625 = vmatpush1.xpose.msra.mxu0 0.0
    %626 = vmatprep.subr.mxu0 0.0
    %627 = vmatpush1.xpose.msra.mxu0 0.0
    %628 = vmatprep.subr.mxu0 0.0
    %629 = vmatpush1.xpose.msra.mxu0 0.0
    %630 = vmatprep.subr.mxu0 0.0
    %631 = vmatpush1.xpose.msra.mxu0 0.0
    %632 = vmatprep.subr.mxu0 0.0
    %633 = vmatpush1.xpose.msra.mxu0 0.0
    %634 = vmatprep.subr.mxu0 0.0
    %635 = vmatpush1.xpose.msra.mxu0 0.0
    %636 = vmatprep.subr.mxu0 0.0
    %637 = vmatpush1.xpose.msra.mxu0 0.0
    %638 = vmatprep.subr.mxu0 0.0
    %639 = vmatpush1.xpose.msra.mxu0 0.0
    %640 = vmatprep.subr.mxu0 0.0
    %641 = vmatpush1.xpose.msra.mxu0 0.0
    %642 = vmatprep.subr.mxu0 0.0
    %643 = vmatpush1.xpose.msra.mxu0 0.0
    %644 = vmatprep.subr.mxu0 0.0
    %645 = vmatpush1.xpose.msra.mxu0 0.0
    %646 = vmatprep.subr.mxu0 0.0
    %647 = vmatpush1.xpose.msra.mxu0 0.0
    %648 = vmatprep.subr.mxu0 0.0
    %649 = vmatpush1.xpose.msra.mxu0 0.0
    %650 = vmatprep.subr.mxu0 0.0
    %651 = vmatpush1.xpose.msra.mxu0 0.0
    %652 = vmatprep.subr.mxu0 0.0
    %653 = vmatpush1.xpose.msra.mxu0 %v620
    %654 = vmatprep.subr.mxu0 0.0
    %655 = vmatpush2.xpose.msra.mxu0 0.0
    %656 = vmatprep.subr.mxu0 0.0
    %657 = vmatpush2.xpose.msra.mxu0 0.0
    %658 = vmatprep.subr.mxu0 0.0
    %659 = vmatpush2.xpose.msra.mxu0 0.0
    %660 = vmatprep.subr.mxu0 0.0
    %661 = vmatpush2.xpose.msra.mxu0 0.0
    %662 = vmatprep.subr.mxu0 0.0
    %663 = vmatpush2.xpose.msra.mxu0 0.0
    %664 = vmatprep.subr.mxu0 0.0
    %665 = vmatpush2.xpose.msra.mxu0 0.0
    %666 = vmatprep.subr.mxu0 0.0
    %667 = vmatpush2.xpose.msra.mxu0 0.0
    %668 = vmatprep.subr.mxu0 0.0
    %669 = vmatpush2.xpose.msra.mxu0 0.0
    %670 = vmatprep.subr.mxu0 0.0
    %671 = vmatpush2.xpose.msra.mxu0 0.0
    %672 = vmatprep.subr.mxu0 0.0
    %673 = vmatpush2.xpose.msra.mxu0 0.0
    %674 = vmatprep.subr.mxu0 0.0
    %675 = vmatpush2.xpose.msra.mxu0 0.0
    %676 = vmatprep.subr.mxu0 0.0
    %677 = vmatpush2.xpose.msra.mxu0 0.0
    %678 = vmatprep.subr.mxu0 0.0
    %679 = vmatpush2.xpose.msra.mxu0 0.0
    %680 = vmatprep.subr.mxu0 0.0
    %681 = vmatpush2.xpose.msra.mxu0 0.0
    %682 = vmatprep.subr.mxu0 0.0
    %683 = vmatpush2.xpose.msra.mxu0 0.0
    %684 = vmatprep.subr.mxu0 0.0
    %685 = vmatpush2.xpose.msra.mxu0 0.0
    %686 = vmatprep.mubr.f32.mxu0 0.0
    %687 = vmatmul.mubr.f32.gmra.mxu0 %v618
    %v688 = vpop.f32.mrf.mxu0
    %v689 = vadd.f32 0.0, %v688
    %v690 = vpop.f32.mrf.mxu0
    %691 = vdwg.mxu0
    %v692 = vmul.f32 %v611, 0.35355338
    %v693 = vmul.f32 %v689, 0.35355338
    %v694 = vadd.f32 %v692, %v353
    %v695 = vadd.f32 %v693, %v357
    %v696 = vsel %vm194, %v694, -inf
    %697 = vmax.xlane.f32.xlu0 %v696
    %v698 = vpop.xlane.xlu0 %697
    %v699 = vsel %vm194, %v695, -inf
    %700 = vmax.xlane.f32.xlu0 %v699
    %v701 = vpop.xlane.xlu0 %700
    %v702 = vsub.f32 %v694, %v698
    %v703 = vsub.f32 %v695, %v701
    %v704 = vmul.f32 %v702, 1.442695
    %v705 = vpow.pop %v704
    %v706 = vmul.f32 %v703, 1.442695
    %v707 = vpow.pop %v706
    %v708 = vsel %vm194, %v705, 0.0
    %709 = vadd.xlane.f32.xlu0 %v708
    %v710 = vpop.xlane.xlu0 %709
    %v711 = vsel %vm194, %v707, 0.0
    %712 = vadd.xlane.f32.xlu0 %v711
    %v713 = vpop.xlane.xlu0 %712
    %v714 = vrcp.pop %v710
    %v715 = vrcp.pop %v713
    %v716 = vmul.f32 %v705, %v714
    %v717 = vmul.f32 %v707, %v715
    %718 = vrot.lane.b32.xlu0 %v183, 56
    %v719 = vpop.permute.xlu0 %718
    %v722 = vsel %vm194, %v716, 0
    %724 = vmatprep.subr.mxu0 0.0
    %725 = vmatpush1.msra.mxu0 0.0
    %726 = vmatprep.subr.mxu0 0.0
    %727 = vmatpush1.msra.mxu0 0.0
    %728 = vmatprep.subr.mxu0 0.0
    %729 = vmatpush1.msra.mxu0 0.0
    %730 = vmatprep.subr.mxu0 0.0
    %731 = vmatpush1.msra.mxu0 0.0
    %732 = vmatprep.subr.mxu0 0.0
    %733 = vmatpush1.msra.mxu0 0.0
    %734 = vmatprep.subr.mxu0 0.0
    %735 = vmatpush1.msra.mxu0 0.0
    %736 = vmatprep.subr.mxu0 0.0
    %737 = vmatpush1.msra.mxu0 0.0
    %738 = vmatprep.subr.mxu0 0.0
    %739 = vmatpush1.msra.mxu0 0.0
    %740 = vmatprep.subr.mxu0 0.0
    %741 = vmatpush1.msra.mxu0 0.0
    %742 = vmatprep.subr.mxu0 0.0
    %743 = vmatpush1.msra.mxu0 0.0
    %744 = vmatprep.subr.mxu0 0.0
    %745 = vmatpush1.msra.mxu0 0.0
    %746 = vmatprep.subr.mxu0 0.0
    %747 = vmatpush1.msra.mxu0 0.0
    %748 = vmatprep.subr.mxu0 0.0
    %749 = vmatpush1.msra.mxu0 0.0
    %750 = vmatprep.subr.mxu0 0.0
    %751 = vmatpush1.msra.mxu0 0.0
    %752 = vmatprep.subr.mxu0 0.0
    %753 = vmatpush1.msra.mxu0 0.0
    %754 = vmatprep.subr.mxu0 0.0
    %755 = vmatpush1.msra.mxu0 %v719
    %756 = vmatprep.subr.mxu0 0.0
    %757 = vmatpush2.msra.mxu0 0.0
    %758 = vmatprep.subr.mxu0 0.0
    %759 = vmatpush2.msra.mxu0 0.0
    %760 = vmatprep.subr.mxu0 0.0
    %761 = vmatpush2.msra.mxu0 0.0
    %762 = vmatprep.subr.mxu0 0.0
    %763 = vmatpush2.msra.mxu0 0.0
    %764 = vmatprep.subr.mxu0 0.0
    %765 = vmatpush2.msra.mxu0 0.0
    %766 = vmatprep.subr.mxu0 0.0
    %767 = vmatpush2.msra.mxu0 0.0
    %768 = vmatprep.subr.mxu0 0.0
    %769 = vmatpush2.msra.mxu0 0.0
    %770 = vmatprep.subr.mxu0 0.0
    %771 = vmatpush2.msra.mxu0 0.0
    %772 = vmatprep.subr.mxu0 0.0
    %773 = vmatpush2.msra.mxu0 0.0
    %774 = vmatprep.subr.mxu0 0.0
    %775 = vmatpush2.msra.mxu0 0.0
    %776 = vmatprep.subr.mxu0 0.0
    %777 = vmatpush2.msra.mxu0 0.0
    %778 = vmatprep.subr.mxu0 0.0
    %779 = vmatpush2.msra.mxu0 0.0
    %780 = vmatprep.subr.mxu0 0.0
    %781 = vmatpush2.msra.mxu0 0.0
    %782 = vmatprep.subr.mxu0 0.0
    %783 = vmatpush2.msra.mxu0 0.0
    %784 = vmatprep.subr.mxu0 0.0
    %785 = vmatpush2.msra.mxu0 0.0
    %786 = vmatprep.subr.mxu0 0.0
    %787 = vmatpush2.msra.mxu0 0.0
    %788 = vmatprep.mubr.f32.mxu0 0.0
    %789 = vmatmul.mubr.f32.gmra.mxu0 %v722
    %v790 = vpop.f32.mrf.mxu0
    %v791 = vadd.f32 0.0, %v790
    %v792 = vpop.f32.mrf.mxu0
    %793 = vdwg.mxu0
    %794 = vrot.lane.b32.xlu0 %v188, 56
    %v795 = vpop.permute.xlu0 %794
    %v798 = vsel %vm194, %v717, 0
    %800 = vmatprep.subr.mxu0 0.0
    %801 = vmatpush1.msra.mxu0 0.0
    %802 = vmatprep.subr.mxu0 0.0
    %803 = vmatpush1.msra.mxu0 0.0
    %804 = vmatprep.subr.mxu0 0.0
    %805 = vmatpush1.msra.mxu0 0.0
    %806 = vmatprep.subr.mxu0 0.0
    %807 = vmatpush1.msra.mxu0 0.0
    %808 = vmatprep.subr.mxu0 0.0
    %809 = vmatpush1.msra.mxu0 0.0
    %810 = vmatprep.subr.mxu0 0.0
    %811 = vmatpush1.msra.mxu0 0.0
    %812 = vmatprep.subr.mxu0 0.0
    %813 = vmatpush1.msra.mxu0 0.0
    %814 = vmatprep.subr.mxu0 0.0
    %815 = vmatpush1.msra.mxu0 0.0
    %816 = vmatprep.subr.mxu0 0.0
    %817 = vmatpush1.msra.mxu0 0.0
    %818 = vmatprep.subr.mxu0 0.0
    %819 = vmatpush1.msra.mxu0 0.0
    %820 = vmatprep.subr.mxu0 0.0
    %821 = vmatpush1.msra.mxu0 0.0
    %822 = vmatprep.subr.mxu0 0.0
    %823 = vmatpush1.msra.mxu0 0.0
    %824 = vmatprep.subr.mxu0 0.0
    %825 = vmatpush1.msra.mxu0 0.0
    %826 = vmatprep.subr.mxu0 0.0
    %827 = vmatpush1.msra.mxu0 0.0
    %828 = vmatprep.subr.mxu0 0.0
    %829 = vmatpush1.msra.mxu0 0.0
    %830 = vmatprep.subr.mxu0 0.0
    %831 = vmatpush1.msra.mxu0 %v795
    %832 = vmatprep.subr.mxu0 0.0
    %833 = vmatpush2.msra.mxu0 0.0
    %834 = vmatprep.subr.mxu0 0.0
    %835 = vmatpush2.msra.mxu0 0.0
    %836 = vmatprep.subr.mxu0 0.0
    %837 = vmatpush2.msra.mxu0 0.0
    %838 = vmatprep.subr.mxu0 0.0
    %839 = vmatpush2.msra.mxu0 0.0
    %840 = vmatprep.subr.mxu0 0.0
    %841 = vmatpush2.msra.mxu0 0.0
    %842 = vmatprep.subr.mxu0 0.0
    %843 = vmatpush2.msra.mxu0 0.0
    %844 = vmatprep.subr.mxu0 0.0
    %845 = vmatpush2.msra.mxu0 0.0
    %846 = vmatprep.subr.mxu0 0.0
    %847 = vmatpush2.msra.mxu0 0.0
    %848 = vmatprep.subr.mxu0 0.0
    %849 = vmatpush2.msra.mxu0 0.0
    %850 = vmatprep.subr.mxu0 0.0
    %851 = vmatpush2.msra.mxu0 0.0
    %852 = vmatprep.subr.mxu0 0.0
    %853 = vmatpush2.msra.mxu0 0.0
    %854 = vmatprep.subr.mxu0 0.0
    %855 = vmatpush2.msra.mxu0 0.0
    %856 = vmatprep.subr.mxu0 0.0
    %857 = vmatpush2.msra.mxu0 0.0
    %858 = vmatprep.subr.mxu0 0.0
    %859 = vmatpush2.msra.mxu0 0.0
    %860 = vmatprep.subr.mxu0 0.0
    %861 = vmatpush2.msra.mxu0 0.0
    %862 = vmatprep.subr.mxu0 0.0
    %863 = vmatpush2.msra.mxu0 0.0
    %864 = vmatprep.mubr.f32.mxu0 0.0
    %865 = vmatmul.mubr.f32.gmra.mxu0 %v798
    %v866 = vpop.f32.mrf.mxu0
    %v867 = vadd.f32 0.0, %v866
    %v868 = vpop.f32.mrf.mxu0
    %869 = vdwg.mxu0
    %v871 = vsel %vm194, %v791, 0
    %v874 = vsel %vm194, %v867, 0
    %876 = vmatprep.subr.mxu0 0.0
    %877 = vmatpush1.msra.mxu0 0.0
    %878 = vmatprep.subr.mxu0 0.0
    %879 = vmatpush1.msra.mxu0 0.0
    %880 = vmatprep.subr.mxu0 0.0
    %881 = vmatpush1.msra.mxu0 0.0
    %882 = vmatprep.subr.mxu0 0.0
    %883 = vmatpush1.msra.mxu0 0.0
    %884 = vmatprep.subr.mxu0 0.0
    %885 = vmatpush1.msra.mxu0 0.0
    %886 = vmatprep.subr.mxu0 0.0
    %887 = vmatpush1.msra.mxu0 0.0
    %888 = vmatprep.subr.mxu0 0.0
    %889 = vmatpush1.msra.mxu0 0.0
    %890 = vmatprep.subr.mxu0 0.0
    %891 = vmatpush1.msra.mxu0 0.0
    %892 = vmatprep.subr.mxu0 0.0
    %893 = vmatpush1.msra.mxu0 0.0
    %894 = vmatprep.subr.mxu0 0.0
    %895 = vmatpush1.msra.mxu0 0.0
    %896 = vmatprep.subr.mxu0 0.0
    %897 = vmatpush1.msra.mxu0 0.0
    %898 = vmatprep.subr.mxu0 0.0
    %899 = vmatpush1.msra.mxu0 0.0
    %900 = vmatprep.subr.mxu0 0.0
    %901 = vmatpush1.msra.mxu0 0.0
    %902 = vmatprep.subr.mxu0 0.0
    %903 = vmatpush1.msra.mxu0 0.0
    %904 = vmatprep.subr.mxu0 0.0
    %905 = vmatpush1.msra.mxu0 0.0
    %906 = vmatprep.subr.mxu0 0.0
    %907 = vmatpush1.msra.mxu0 %v47
    %908 = vmatprep.subr.mxu0 0.0
    %909 = vmatpush2.msra.mxu0 0.0
    %910 = vmatprep.subr.mxu0 0.0
    %911 = vmatpush2.msra.mxu0 0.0
    %912 = vmatprep.subr.mxu0 0.0
    %913 = vmatpush2.msra.mxu0 0.0
    %914 = vmatprep.subr.mxu0 0.0
    %915 = vmatpush2.msra.mxu0 0.0
    %916 = vmatprep.subr.mxu0 0.0
    %917 = vmatpush2.msra.mxu0 0.0
    %918 = vmatprep.subr.mxu0 0.0
    %919 = vmatpush2.msra.mxu0 0.0
    %920 = vmatprep.subr.mxu0 0.0
    %921 = vmatpush2.msra.mxu0 0.0
    %922 = vmatprep.subr.mxu0 0.0
    %923 = vmatpush2.msra.mxu0 0.0
    %924 = vmatprep.subr.mxu0 0.0
    %925 = vmatpush2.msra.mxu0 0.0
    %926 = vmatprep.subr.mxu0 0.0
    %927 = vmatpush2.msra.mxu0 0.0
    %928 = vmatprep.subr.mxu0 0.0
    %929 = vmatpush2.msra.mxu0 0.0
    %930 = vmatprep.subr.mxu0 0.0
    %931 = vmatpush2.msra.mxu0 0.0
    %932 = vmatprep.subr.mxu0 0.0
    %933 = vmatpush2.msra.mxu0 0.0
    %934 = vmatprep.subr.mxu0 0.0
    %935 = vmatpush2.msra.mxu0 0.0
    %936 = vmatprep.subr.mxu0 0.0
    %937 = vmatpush2.msra.mxu0 0.0
    %938 = vmatprep.subr.mxu0 0.0
    %939 = vmatpush2.msra.mxu0 0.0
    %940 = vmatprep.mubr.f32.mxu0 0.0
    %941 = vmatmul.mubr.f32.gmra.mxu0 %v871
    %v942 = vpop.f32.mrf.mxu0
    %v943 = vadd.f32 0.0, %v942
    %v944 = vpop.f32.mrf.mxu0
    %945 = vmatprep.mubr.f32.mxu0 0.0
    %946 = vmatmul.mubr.f32.gmra.mxu0 %v874
    %v947 = vpop.f32.mrf.mxu0
    %v948 = vadd.f32 0.0, %v947
    %v949 = vpop.f32.mrf.mxu0
    %950 = vdwg.mxu0
    %v952 = vsel %vm194, %v457, 0
    %v955 = vsel %vm194, %v533, 0
    %957 = vmatprep.subr.mxu0 0.0
    %958 = vmatpush1.msra.mxu0 0.0
    %959 = vmatprep.subr.mxu0 0.0
    %960 = vmatpush1.msra.mxu0 0.0
    %961 = vmatprep.subr.mxu0 0.0
    %962 = vmatpush1.msra.mxu0 0.0
    %963 = vmatprep.subr.mxu0 0.0
    %964 = vmatpush1.msra.mxu0 0.0
    %965 = vmatprep.subr.mxu0 0.0
    %966 = vmatpush1.msra.mxu0 0.0
    %967 = vmatprep.subr.mxu0 0.0
    %968 = vmatpush1.msra.mxu0 0.0
    %969 = vmatprep.subr.mxu0 0.0
    %970 = vmatpush1.msra.mxu0 0.0
    %971 = vmatprep.subr.mxu0 0.0
    %972 = vmatpush1.msra.mxu0 0.0
    %973 = vmatprep.subr.mxu0 0.0
    %974 = vmatpush1.msra.mxu0 0.0
    %975 = vmatprep.subr.mxu0 0.0
    %976 = vmatpush1.msra.mxu0 0.0
    %977 = vmatprep.subr.mxu0 0.0
    %978 = vmatpush1.msra.mxu0 0.0
    %979 = vmatprep.subr.mxu0 0.0
    %980 = vmatpush1.msra.mxu0 0.0
    %981 = vmatprep.subr.mxu0 0.0
    %982 = vmatpush1.msra.mxu0 0.0
    %983 = vmatprep.subr.mxu0 0.0
    %984 = vmatpush1.msra.mxu0 0.0
    %985 = vmatprep.subr.mxu0 0.0
    %986 = vmatpush1.msra.mxu0 0.0
    %987 = vmatprep.subr.mxu0 0.0
    %988 = vmatpush1.msra.mxu0 %v46
    %989 = vmatprep.subr.mxu0 0.0
    %990 = vmatpush2.msra.mxu0 0.0
    %991 = vmatprep.subr.mxu0 0.0
    %992 = vmatpush2.msra.mxu0 0.0
    %993 = vmatprep.subr.mxu0 0.0
    %994 = vmatpush2.msra.mxu0 0.0
    %995 = vmatprep.subr.mxu0 0.0
    %996 = vmatpush2.msra.mxu0 0.0
    %997 = vmatprep.subr.mxu0 0.0
    %998 = vmatpush2.msra.mxu0 0.0
    %999 = vmatprep.subr.mxu0 0.0
    %1000 = vmatpush2.msra.mxu0 0.0
    %1001 = vmatprep.subr.mxu0 0.0
    %1002 = vmatpush2.msra.mxu0 0.0
    %1003 = vmatprep.subr.mxu0 0.0
    %1004 = vmatpush2.msra.mxu0 0.0
    %1005 = vmatprep.subr.mxu0 0.0
    %1006 = vmatpush2.msra.mxu0 0.0
    %1007 = vmatprep.subr.mxu0 0.0
    %1008 = vmatpush2.msra.mxu0 0.0
    %1009 = vmatprep.subr.mxu0 0.0
    %1010 = vmatpush2.msra.mxu0 0.0
    %1011 = vmatprep.subr.mxu0 0.0
    %1012 = vmatpush2.msra.mxu0 0.0
    %1013 = vmatprep.subr.mxu0 0.0
    %1014 = vmatpush2.msra.mxu0 0.0
    %1015 = vmatprep.subr.mxu0 0.0
    %1016 = vmatpush2.msra.mxu0 0.0
    %1017 = vmatprep.subr.mxu0 0.0
    %1018 = vmatpush2.msra.mxu0 0.0
    %1019 = vmatprep.subr.mxu0 0.0
    %1020 = vmatpush2.msra.mxu0 0.0
    %1021 = vmatprep.mubr.f32.mxu0 0.0
    %1022 = vmatmul.mubr.f32.gmra.mxu0 %v952
    %v1023 = vpop.f32.mrf.mxu0
    %v1024 = vadd.f32 %v943, %v1023
    %v1025 = vpop.f32.mrf.mxu0
    %1026 = vmatprep.mubr.f32.mxu0 0.0
    %1027 = vmatmul.mubr.f32.gmra.mxu0 %v955
    %v1028 = vpop.f32.mrf.mxu0
    %v1029 = vadd.f32 %v948, %v1028
    %v1030 = vpop.f32.mrf.mxu0
    %1031 = vdwg.mxu0
    %1032 = vrot.lane.b32.xlu0 %v183, 112
    %v1033 = vpop.permute.xlu0 %1032
    %1034 = vrot.lane.b32.xlu0 %v183, 80
    %v1035 = vpop.permute.xlu0 %1034
    %v1036 = vsel %vm194, %v1033, 0
    %v1038 = vsel %vm194, %v1035, 0
    %1040 = vmatprep.subr.mxu0 0.0
    %1041 = vmatpush1.xpose.msra.mxu0 0.0
    %1042 = vmatprep.subr.mxu0 0.0
    %1043 = vmatpush1.xpose.msra.mxu0 0.0
    %1044 = vmatprep.subr.mxu0 0.0
    %1045 = vmatpush1.xpose.msra.mxu0 0.0
    %1046 = vmatprep.subr.mxu0 0.0
    %1047 = vmatpush1.xpose.msra.mxu0 0.0
    %1048 = vmatprep.subr.mxu0 0.0
    %1049 = vmatpush1.xpose.msra.mxu0 0.0
    %1050 = vmatprep.subr.mxu0 0.0
    %1051 = vmatpush1.xpose.msra.mxu0 0.0
    %1052 = vmatprep.subr.mxu0 0.0
    %1053 = vmatpush1.xpose.msra.mxu0 0.0
    %1054 = vmatprep.subr.mxu0 0.0
    %1055 = vmatpush1.xpose.msra.mxu0 0.0
    %1056 = vmatprep.subr.mxu0 0.0
    %1057 = vmatpush1.xpose.msra.mxu0 0.0
    %1058 = vmatprep.subr.mxu0 0.0
    %1059 = vmatpush1.xpose.msra.mxu0 0.0
    %1060 = vmatprep.subr.mxu0 0.0
    %1061 = vmatpush1.xpose.msra.mxu0 0.0
    %1062 = vmatprep.subr.mxu0 0.0
    %1063 = vmatpush1.xpose.msra.mxu0 0.0
    %1064 = vmatprep.subr.mxu0 0.0
    %1065 = vmatpush1.xpose.msra.mxu0 0.0
    %1066 = vmatprep.subr.mxu0 0.0
    %1067 = vmatpush1.xpose.msra.mxu0 0.0
    %1068 = vmatprep.subr.mxu0 0.0
    %1069 = vmatpush1.xpose.msra.mxu0 0.0
    %1070 = vmatprep.subr.mxu0 0.0
    %1071 = vmatpush1.xpose.msra.mxu0 %v1038
    %1072 = vmatprep.subr.mxu0 0.0
    %1073 = vmatpush2.xpose.msra.mxu0 0.0
    %1074 = vmatprep.subr.mxu0 0.0
    %1075 = vmatpush2.xpose.msra.mxu0 0.0
    %1076 = vmatprep.subr.mxu0 0.0
    %1077 = vmatpush2.xpose.msra.mxu0 0.0
    %1078 = vmatprep.subr.mxu0 0.0
    %1079 = vmatpush2.xpose.msra.mxu0 0.0
    %1080 = vmatprep.subr.mxu0 0.0
    %1081 = vmatpush2.xpose.msra.mxu0 0.0
    %1082 = vmatprep.subr.mxu0 0.0
    %1083 = vmatpush2.xpose.msra.mxu0 0.0
    %1084 = vmatprep.subr.mxu0 0.0
    %1085 = vmatpush2.xpose.msra.mxu0 0.0
    %1086 = vmatprep.subr.mxu0 0.0
    %1087 = vmatpush2.xpose.msra.mxu0 0.0
    %1088 = vmatprep.subr.mxu0 0.0
    %1089 = vmatpush2.xpose.msra.mxu0 0.0
    %1090 = vmatprep.subr.mxu0 0.0
    %1091 = vmatpush2.xpose.msra.mxu0 0.0
    %1092 = vmatprep.subr.mxu0 0.0
    %1093 = vmatpush2.xpose.msra.mxu0 0.0
    %1094 = vmatprep.subr.mxu0 0.0
    %1095 = vmatpush2.xpose.msra.mxu0 0.0
    %1096 = vmatprep.subr.mxu0 0.0
    %1097 = vmatpush2.xpose.msra.mxu0 0.0
    %1098 = vmatprep.subr.mxu0 0.0
    %1099 = vmatpush2.xpose.msra.mxu0 0.0
    %1100 = vmatprep.subr.mxu0 0.0
    %1101 = vmatpush2.xpose.msra.mxu0 0.0
    %1102 = vmatprep.subr.mxu0 0.0
    %1103 = vmatpush2.xpose.msra.mxu0 0.0
    %1104 = vmatprep.mubr.f32.mxu0 0.0
    %1105 = vmatmul.mubr.f32.gmra.mxu0 %v1036
    %v1106 = vpop.f32.mrf.mxu0
    %v1107 = vadd.f32 0.0, %v1106
    %v1108 = vpop.f32.mrf.mxu0
    %1109 = vdwg.mxu0
    %1110 = vrot.lane.b32.xlu0 %v188, 112
    %v1111 = vpop.permute.xlu0 %1110
    %1112 = vrot.lane.b32.xlu0 %v188, 80
    %v1113 = vpop.permute.xlu0 %1112
    %v1114 = vsel %vm194, %v1111, 0
    %v1116 = vsel %vm194, %v1113, 0
    %1118 = vmatprep.subr.mxu0 0.0
    %1119 = vmatpush1.xpose.msra.mxu0 0.0
    %1120 = vmatprep.subr.mxu0 0.0
    %1121 = vmatpush1.xpose.msra.mxu0 0.0
    %1122 = vmatprep.subr.mxu0 0.0
    %1123 = vmatpush1.xpose.msra.mxu0 0.0
    %1124 = vmatprep.subr.mxu0 0.0
    %1125 = vmatpush1.xpose.msra.mxu0 0.0
    %1126 = vmatprep.subr.mxu0 0.0
    %1127 = vmatpush1.xpose.msra.mxu0 0.0
    %1128 = vmatprep.subr.mxu0 0.0
    %1129 = vmatpush1.xpose.msra.mxu0 0.0
    %1130 = vmatprep.subr.mxu0 0.0
    %1131 = vmatpush1.xpose.msra.mxu0 0.0
    %1132 = vmatprep.subr.mxu0 0.0
    %1133 = vmatpush1.xpose.msra.mxu0 0.0
    %1134 = vmatprep.subr.mxu0 0.0
    %1135 = vmatpush1.xpose.msra.mxu0 0.0
    %1136 = vmatprep.subr.mxu0 0.0
    %1137 = vmatpush1.xpose.msra.mxu0 0.0
    %1138 = vmatprep.subr.mxu0 0.0
    %1139 = vmatpush1.xpose.msra.mxu0 0.0
    %1140 = vmatprep.subr.mxu0 0.0
    %1141 = vmatpush1.xpose.msra.mxu0 0.0
    %1142 = vmatprep.subr.mxu0 0.0
    %1143 = vmatpush1.xpose.msra.mxu0 0.0
    %1144 = vmatprep.subr.mxu0 0.0
    %1145 = vmatpush1.xpose.msra.mxu0 0.0
    %1146 = vmatprep.subr.mxu0 0.0
    %1147 = vmatpush1.xpose.msra.mxu0 0.0
    %1148 = vmatprep.subr.mxu0 0.0
    %1149 = vmatpush1.xpose.msra.mxu0 %v1116
    %1150 = vmatprep.subr.mxu0 0.0
    %1151 = vmatpush2.xpose.msra.mxu0 0.0
    %1152 = vmatprep.subr.mxu0 0.0
    %1153 = vmatpush2.xpose.msra.mxu0 0.0
    %1154 = vmatprep.subr.mxu0 0.0
    %1155 = vmatpush2.xpose.msra.mxu0 0.0
    %1156 = vmatprep.subr.mxu0 0.0
    %1157 = vmatpush2.xpose.msra.mxu0 0.0
    %1158 = vmatprep.subr.mxu0 0.0
    %1159 = vmatpush2.xpose.msra.mxu0 0.0
    %1160 = vmatprep.subr.mxu0 0.0
    %1161 = vmatpush2.xpose.msra.mxu0 0.0
    %1162 = vmatprep.subr.mxu0 0.0
    %1163 = vmatpush2.xpose.msra.mxu0 0.0
    %1164 = vmatprep.subr.mxu0 0.0
    %1165 = vmatpush2.xpose.msra.mxu0 0.0
    %1166 = vmatprep.subr.mxu0 0.0
    %1167 = vmatpush2.xpose.msra.mxu0 0.0
    %1168 = vmatprep.subr.mxu0 0.0
    %1169 = vmatpush2.xpose.msra.mxu0 0.0
    %1170 = vmatprep.subr.mxu0 0.0
    %1171 = vmatpush2.xpose.msra.mxu0 0.0
    %1172 = vmatprep.subr.mxu0 0.0
    %1173 = vmatpush2.xpose.msra.mxu0 0.0
    %1174 = vmatprep.subr.mxu0 0.0
    %1175 = vmatpush2.xpose.msra.mxu0 0.0
    %1176 = vmatprep.subr.mxu0 0.0
    %1177 = vmatpush2.xpose.msra.mxu0 0.0
    %1178 = vmatprep.subr.mxu0 0.0
    %1179 = vmatpush2.xpose.msra.mxu0 0.0
    %1180 = vmatprep.subr.mxu0 0.0
    %1181 = vmatpush2.xpose.msra.mxu0 0.0
    %1182 = vmatprep.mubr.f32.mxu0 0.0
    %1183 = vmatmul.mubr.f32.gmra.mxu0 %v1114
    %v1184 = vpop.f32.mrf.mxu0
    %v1185 = vadd.f32 0.0, %v1184
    %v1186 = vpop.f32.mrf.mxu0
    %1187 = vdwg.mxu0
    %v1188 = vmul.f32 %v1107, 0.35355338
    %v1189 = vmul.f32 %v1185, 0.35355338
    %v1190 = vadd.f32 %v1188, %v353
    %v1191 = vadd.f32 %v1189, %v357
    %v1192 = vsel %vm194, %v1190, -inf
    %1193 = vmax.xlane.f32.xlu0 %v1192
    %v1194 = vpop.xlane.xlu0 %1193
    %v1195 = vsel %vm194, %v1191, -inf
    %1196 = vmax.xlane.f32.xlu0 %v1195
    %v1197 = vpop.xlane.xlu0 %1196
    %v1198 = vsub.f32 %v1190, %v1194
    %v1199 = vsub.f32 %v1191, %v1197
    %v1200 = vmul.f32 %v1198, 1.442695
    %v1201 = vpow.pop %v1200
    %v1202 = vmul.f32 %v1199, 1.442695
    %v1203 = vpow.pop %v1202
    %v1204 = vsel %vm194, %v1201, 0.0
    %1205 = vadd.xlane.f32.xlu0 %v1204
    %v1206 = vpop.xlane.xlu0 %1205
    %v1207 = vsel %vm194, %v1203, 0.0
    %1208 = vadd.xlane.f32.xlu0 %v1207
    %v1209 = vpop.xlane.xlu0 %1208
    %v1210 = vrcp.pop %v1206
    %v1211 = vrcp.pop %v1209
    %v1212 = vmul.f32 %v1201, %v1210
    %v1213 = vmul.f32 %v1203, %v1211
    %1214 = vrot.lane.b32.xlu0 %v183, 48
    %v1215 = vpop.permute.xlu0 %1214
    %v1218 = vsel %vm194, %v1212, 0
    %1220 = vmatprep.subr.mxu0 0.0
    %1221 = vmatpush1.msra.mxu0 0.0
    %1222 = vmatprep.subr.mxu0 0.0
    %1223 = vmatpush1.msra.mxu0 0.0
    %1224 = vmatprep.subr.mxu0 0.0
    %1225 = vmatpush1.msra.mxu0 0.0
    %1226 = vmatprep.subr.mxu0 0.0
    %1227 = vmatpush1.msra.mxu0 0.0
    %1228 = vmatprep.subr.mxu0 0.0
    %1229 = vmatpush1.msra.mxu0 0.0
    %1230 = vmatprep.subr.mxu0 0.0
    %1231 = vmatpush1.msra.mxu0 0.0
    %1232 = vmatprep.subr.mxu0 0.0
    %1233 = vmatpush1.msra.mxu0 0.0
    %1234 = vmatprep.subr.mxu0 0.0
    %1235 = vmatpush1.msra.mxu0 0.0
    %1236 = vmatprep.subr.mxu0 0.0
    %1237 = vmatpush1.msra.mxu0 0.0
    %1238 = vmatprep.subr.mxu0 0.0
    %1239 = vmatpush1.msra.mxu0 0.0
    %1240 = vmatprep.subr.mxu0 0.0
    %1241 = vmatpush1.msra.mxu0 0.0
    %1242 = vmatprep.subr.mxu0 0.0
    %1243 = vmatpush1.msra.mxu0 0.0
    %1244 = vmatprep.subr.mxu0 0.0
    %1245 = vmatpush1.msra.mxu0 0.0
    %1246 = vmatprep.subr.mxu0 0.0
    %1247 = vmatpush1.msra.mxu0 0.0
    %1248 = vmatprep.subr.mxu0 0.0
    %1249 = vmatpush1.msra.mxu0 0.0
    %1250 = vmatprep.subr.mxu0 0.0
    %1251 = vmatpush1.msra.mxu0 %v1215
    %1252 = vmatprep.subr.mxu0 0.0
    %1253 = vmatpush2.msra.mxu0 0.0
    %1254 = vmatprep.subr.mxu0 0.0
    %1255 = vmatpush2.msra.mxu0 0.0
    %1256 = vmatprep.subr.mxu0 0.0
    %1257 = vmatpush2.msra.mxu0 0.0
    %1258 = vmatprep.subr.mxu0 0.0
    %1259 = vmatpush2.msra.mxu0 0.0
    %1260 = vmatprep.subr.mxu0 0.0
    %1261 = vmatpush2.msra.mxu0 0.0
    %1262 = vmatprep.subr.mxu0 0.0
    %1263 = vmatpush2.msra.mxu0 0.0
    %1264 = vmatprep.subr.mxu0 0.0
    %1265 = vmatpush2.msra.mxu0 0.0
    %1266 = vmatprep.subr.mxu0 0.0
    %1267 = vmatpush2.msra.mxu0 0.0
    %1268 = vmatprep.subr.mxu0 0.0
    %1269 = vmatpush2.msra.mxu0 0.0
    %1270 = vmatprep.subr.mxu0 0.0
    %1271 = vmatpush2.msra.mxu0 0.0
    %1272 = vmatprep.subr.mxu0 0.0
    %1273 = vmatpush2.msra.mxu0 0.0
    %1274 = vmatprep.subr.mxu0 0.0
    %1275 = vmatpush2.msra.mxu0 0.0
    %1276 = vmatprep.subr.mxu0 0.0
    %1277 = vmatpush2.msra.mxu0 0.0
    %1278 = vmatprep.subr.mxu0 0.0
    %1279 = vmatpush2.msra.mxu0 0.0
    %1280 = vmatprep.subr.mxu0 0.0
    %1281 = vmatpush2.msra.mxu0 0.0
    %1282 = vmatprep.subr.mxu0 0.0
    %1283 = vmatpush2.msra.mxu0 0.0
    %1284 = vmatprep.mubr.f32.mxu0 0.0
    %1285 = vmatmul.mubr.f32.gmra.mxu0 %v1218
    %v1286 = vpop.f32.mrf.mxu0
    %v1287 = vadd.f32 0.0, %v1286
    %v1288 = vpop.f32.mrf.mxu0
    %1289 = vdwg.mxu0
    %1290 = vrot.lane.b32.xlu0 %v188, 48
    %v1291 = vpop.permute.xlu0 %1290
    %v1294 = vsel %vm194, %v1213, 0
    %1296 = vmatprep.subr.mxu0 0.0
    %1297 = vmatpush1.msra.mxu0 0.0
    %1298 = vmatprep.subr.mxu0 0.0
    %1299 = vmatpush1.msra.mxu0 0.0
    %1300 = vmatprep.subr.mxu0 0.0
    %1301 = vmatpush1.msra.mxu0 0.0
    %1302 = vmatprep.subr.mxu0 0.0
    %1303 = vmatpush1.msra.mxu0 0.0
    %1304 = vmatprep.subr.mxu0 0.0
    %1305 = vmatpush1.msra.mxu0 0.0
    %1306 = vmatprep.subr.mxu0 0.0
    %1307 = vmatpush1.msra.mxu0 0.0
    %1308 = vmatprep.subr.mxu0 0.0
    %1309 = vmatpush1.msra.mxu0 0.0
    %1310 = vmatprep.subr.mxu0 0.0
    %1311 = vmatpush1.msra.mxu0 0.0
    %1312 = vmatprep.subr.mxu0 0.0
    %1313 = vmatpush1.msra.mxu0 0.0
    %1314 = vmatprep.subr.mxu0 0.0
    %1315 = vmatpush1.msra.mxu0 0.0
    %1316 = vmatprep.subr.mxu0 0.0
    %1317 = vmatpush1.msra.mxu0 0.0
    %1318 = vmatprep.subr.mxu0 0.0
    %1319 = vmatpush1.msra.mxu0 0.0
    %1320 = vmatprep.subr.mxu0 0.0
    %1321 = vmatpush1.msra.mxu0 0.0
    %1322 = vmatprep.subr.mxu0 0.0
    %1323 = vmatpush1.msra.mxu0 0.0
    %1324 = vmatprep.subr.mxu0 0.0
    %1325 = vmatpush1.msra.mxu0 0.0
    %1326 = vmatprep.subr.mxu0 0.0
    %1327 = vmatpush1.msra.mxu0 %v1291
    %1328 = vmatprep.subr.mxu0 0.0
    %1329 = vmatpush2.msra.mxu0 0.0
    %1330 = vmatprep.subr.mxu0 0.0
    %1331 = vmatpush2.msra.mxu0 0.0
    %1332 = vmatprep.subr.mxu0 0.0
    %1333 = vmatpush2.msra.mxu0 0.0
    %1334 = vmatprep.subr.mxu0 0.0
    %1335 = vmatpush2.msra.mxu0 0.0
    %1336 = vmatprep.subr.mxu0 0.0
    %1337 = vmatpush2.msra.mxu0 0.0
    %1338 = vmatprep.subr.mxu0 0.0
    %1339 = vmatpush2.msra.mxu0 0.0
    %1340 = vmatprep.subr.mxu0 0.0
    %1341 = vmatpush2.msra.mxu0 0.0
    %1342 = vmatprep.subr.mxu0 0.0
    %1343 = vmatpush2.msra.mxu0 0.0
    %1344 = vmatprep.subr.mxu0 0.0
    %1345 = vmatpush2.msra.mxu0 0.0
    %1346 = vmatprep.subr.mxu0 0.0
    %1347 = vmatpush2.msra.mxu0 0.0
    %1348 = vmatprep.subr.mxu0 0.0
    %1349 = vmatpush2.msra.mxu0 0.0
    %1350 = vmatprep.subr.mxu0 0.0
    %1351 = vmatpush2.msra.mxu0 0.0
    %1352 = vmatprep.subr.mxu0 0.0
    %1353 = vmatpush2.msra.mxu0 0.0
    %1354 = vmatprep.subr.mxu0 0.0
    %1355 = vmatpush2.msra.mxu0 0.0
    %1356 = vmatprep.subr.mxu0 0.0
    %1357 = vmatpush2.msra.mxu0 0.0
    %1358 = vmatprep.subr.mxu0 0.0
    %1359 = vmatpush2.msra.mxu0 0.0
    %1360 = vmatprep.mubr.f32.mxu0 0.0
    %1361 = vmatmul.mubr.f32.gmra.mxu0 %v1294
    %v1362 = vpop.f32.mrf.mxu0
    %v1363 = vadd.f32 0.0, %v1362
    %v1364 = vpop.f32.mrf.mxu0
    %1365 = vdwg.mxu0
    %v1367 = vsel %vm194, %v1287, 0
    %v1370 = vsel %vm194, %v1363, 0
    %1372 = vmatprep.subr.mxu0 0.0
    %1373 = vmatpush1.msra.mxu0 0.0
    %1374 = vmatprep.subr.mxu0 0.0
    %1375 = vmatpush1.msra.mxu0 0.0
    %1376 = vmatprep.subr.mxu0 0.0
    %1377 = vmatpush1.msra.mxu0 0.0
    %1378 = vmatprep.subr.mxu0 0.0
    %1379 = vmatpush1.msra.mxu0 0.0
    %1380 = vmatprep.subr.mxu0 0.0
    %1381 = vmatpush1.msra.mxu0 0.0
    %1382 = vmatprep.subr.mxu0 0.0
    %1383 = vmatpush1.msra.mxu0 0.0
    %1384 = vmatprep.subr.mxu0 0.0
    %1385 = vmatpush1.msra.mxu0 0.0
    %1386 = vmatprep.subr.mxu0 0.0
    %1387 = vmatpush1.msra.mxu0 0.0
    %1388 = vmatprep.subr.mxu0 0.0
    %1389 = vmatpush1.msra.mxu0 0.0
    %1390 = vmatprep.subr.mxu0 0.0
    %1391 = vmatpush1.msra.mxu0 0.0
    %1392 = vmatprep.subr.mxu0 0.0
    %1393 = vmatpush1.msra.mxu0 0.0
    %1394 = vmatprep.subr.mxu0 0.0
    %1395 = vmatpush1.msra.mxu0 0.0
    %1396 = vmatprep.subr.mxu0 0.0
    %1397 = vmatpush1.msra.mxu0 0.0
    %1398 = vmatprep.subr.mxu0 0.0
    %1399 = vmatpush1.msra.mxu0 0.0
    %1400 = vmatprep.subr.mxu0 0.0
    %1401 = vmatpush1.msra.mxu0 0.0
    %1402 = vmatprep.subr.mxu0 0.0
    %1403 = vmatpush1.msra.mxu0 %v48
    %1404 = vmatprep.subr.mxu0 0.0
    %1405 = vmatpush2.msra.mxu0 0.0
    %1406 = vmatprep.subr.mxu0 0.0
    %1407 = vmatpush2.msra.mxu0 0.0
    %1408 = vmatprep.subr.mxu0 0.0
    %1409 = vmatpush2.msra.mxu0 0.0
    %1410 = vmatprep.subr.mxu0 0.0
    %1411 = vmatpush2.msra.mxu0 0.0
    %1412 = vmatprep.subr.mxu0 0.0
    %1413 = vmatpush2.msra.mxu0 0.0
    %1414 = vmatprep.subr.mxu0 0.0
    %1415 = vmatpush2.msra.mxu0 0.0
    %1416 = vmatprep.subr.mxu0 0.0
    %1417 = vmatpush2.msra.mxu0 0.0
    %1418 = vmatprep.subr.mxu0 0.0
    %1419 = vmatpush2.msra.mxu0 0.0
    %1420 = vmatprep.subr.mxu0 0.0
    %1421 = vmatpush2.msra.mxu0 0.0
    %1422 = vmatprep.subr.mxu0 0.0
    %1423 = vmatpush2.msra.mxu0 0.0
    %1424 = vmatprep.subr.mxu0 0.0
    %1425 = vmatpush2.msra.mxu0 0.0
    %1426 = vmatprep.subr.mxu0 0.0
    %1427 = vmatpush2.msra.mxu0 0.0
    %1428 = vmatprep.subr.mxu0 0.0
    %1429 = vmatpush2.msra.mxu0 0.0
    %1430 = vmatprep.subr.mxu0 0.0
    %1431 = vmatpush2.msra.mxu0 0.0
    %1432 = vmatprep.subr.mxu0 0.0
    %1433 = vmatpush2.msra.mxu0 0.0
    %1434 = vmatprep.subr.mxu0 0.0
    %1435 = vmatpush2.msra.mxu0 0.0
    %1436 = vmatprep.mubr.f32.mxu0 0.0
    %1437 = vmatmul.mubr.f32.gmra.mxu0 %v1367
    %v1438 = vpop.f32.mrf.mxu0
    %v1439 = vadd.f32 0.0, %v1438
    %v1440 = vpop.f32.mrf.mxu0
    %1441 = vmatprep.mubr.f32.mxu0 0.0
    %1442 = vmatmul.mubr.f32.gmra.mxu0 %v1370
    %v1443 = vpop.f32.mrf.mxu0
    %v1444 = vadd.f32 0.0, %v1443
    %v1445 = vpop.f32.mrf.mxu0
    %1446 = vdwg.mxu0
    %v1447 = vadd.f32 %v1024, %v1439
    %v1448 = vadd.f32 %v1029, %v1444
    %1449 = vrot.lane.b32.xlu0 %v183, 104
    %v1450 = vpop.permute.xlu0 %1449
    %1451 = vrot.lane.b32.xlu0 %v183, 72
    %v1452 = vpop.permute.xlu0 %1451
    %v1453 = vsel %vm194, %v1450, 0
    %v1455 = vsel %vm194, %v1452, 0
    %1457 = vmatprep.subr.mxu0 0.0
    %1458 = vmatpush1.xpose.msra.mxu0 0.0
    %1459 = vmatprep.subr.mxu0 0.0
    %1460 = vmatpush1.xpose.msra.mxu0 0.0
    %1461 = vmatprep.subr.mxu0 0.0
    %1462 = vmatpush1.xpose.msra.mxu0 0.0
    %1463 = vmatprep.subr.mxu0 0.0
    %1464 = vmatpush1.xpose.msra.mxu0 0.0
    %1465 = vmatprep.subr.mxu0 0.0
    %1466 = vmatpush1.xpose.msra.mxu0 0.0
    %1467 = vmatprep.subr.mxu0 0.0
    %1468 = vmatpush1.xpose.msra.mxu0 0.0
    %1469 = vmatprep.subr.mxu0 0.0
    %1470 = vmatpush1.xpose.msra.mxu0 0.0
    %1471 = vmatprep.subr.mxu0 0.0
    %1472 = vmatpush1.xpose.msra.mxu0 0.0
    %1473 = vmatprep.subr.mxu0 0.0
    %1474 = vmatpush1.xpose.msra.mxu0 0.0
    %1475 = vmatprep.subr.mxu0 0.0
    %1476 = vmatpush1.xpose.msra.mxu0 0.0
    %1477 = vmatprep.subr.mxu0 0.0
    %1478 = vmatpush1.xpose.msra.mxu0 0.0
    %1479 = vmatprep.subr.mxu0 0.0
    %1480 = vmatpush1.xpose.msra.mxu0 0.0
    %1481 = vmatprep.subr.mxu0 0.0
    %1482 = vmatpush1.xpose.msra.mxu0 0.0
    %1483 = vmatprep.subr.mxu0 0.0
    %1484 = vmatpush1.xpose.msra.mxu0 0.0
    %1485 = vmatprep.subr.mxu0 0.0
    %1486 = vmatpush1.xpose.msra.mxu0 0.0
    %1487 = vmatprep.subr.mxu0 0.0
    %1488 = vmatpush1.xpose.msra.mxu0 %v1455
    %1489 = vmatprep.subr.mxu0 0.0
    %1490 = vmatpush2.xpose.msra.mxu0 0.0
    %1491 = vmatprep.subr.mxu0 0.0
    %1492 = vmatpush2.xpose.msra.mxu0 0.0
    %1493 = vmatprep.subr.mxu0 0.0
    %1494 = vmatpush2.xpose.msra.mxu0 0.0
    %1495 = vmatprep.subr.mxu0 0.0
    %1496 = vmatpush2.xpose.msra.mxu0 0.0
    %1497 = vmatprep.subr.mxu0 0.0
    %1498 = vmatpush2.xpose.msra.mxu0 0.0
    %1499 = vmatprep.subr.mxu0 0.0
    %1500 = vmatpush2.xpose.msra.mxu0 0.0
    %1501 = vmatprep.subr.mxu0 0.0
    %1502 = vmatpush2.xpose.msra.mxu0 0.0
    %1503 = vmatprep.subr.mxu0 0.0
    %1504 = vmatpush2.xpose.msra.mxu0 0.0
    %1505 = vmatprep.subr.mxu0 0.0
    %1506 = vmatpush2.xpose.msra.mxu0 0.0
    %1507 = vmatprep.subr.mxu0 0.0
    %1508 = vmatpush2.xpose.msra.mxu0 0.0
    %1509 = vmatprep.subr.mxu0 0.0
    %1510 = vmatpush2.xpose.msra.mxu0 0.0
    %1511 = vmatprep.subr.mxu0 0.0
    %1512 = vmatpush2.xpose.msra.mxu0 0.0
    %1513 = vmatprep.subr.mxu0 0.0
    %1514 = vmatpush2.xpose.msra.mxu0 0.0
    %1515 = vmatprep.subr.mxu0 0.0
    %1516 = vmatpush2.xpose.msra.mxu0 0.0
    %1517 = vmatprep.subr.mxu0 0.0
    %1518 = vmatpush2.xpose.msra.mxu0 0.0
    %1519 = vmatprep.subr.mxu0 0.0
    %1520 = vmatpush2.xpose.msra.mxu0 0.0
    %1521 = vmatprep.mubr.f32.mxu0 0.0
    %1522 = vmatmul.mubr.f32.gmra.mxu0 %v1453
    %v1523 = vpop.f32.mrf.mxu0
    %v1524 = vadd.f32 0.0, %v1523
    %v1525 = vpop.f32.mrf.mxu0
    %1526 = vdwg.mxu0
    %1527 = vrot.lane.b32.xlu0 %v188, 104
    %v1528 = vpop.permute.xlu0 %1527
    %1529 = vrot.lane.b32.xlu0 %v188, 72
    %v1530 = vpop.permute.xlu0 %1529
    %v1531 = vsel %vm194, %v1528, 0
    %v1533 = vsel %vm194, %v1530, 0
    %1535 = vmatprep.subr.mxu0 0.0
    %1536 = vmatpush1.xpose.msra.mxu0 0.0
    %1537 = vmatprep.subr.mxu0 0.0
    %1538 = vmatpush1.xpose.msra.mxu0 0.0
    %1539 = vmatprep.subr.mxu0 0.0
    %1540 = vmatpush1.xpose.msra.mxu0 0.0
    %1541 = vmatprep.subr.mxu0 0.0
    %1542 = vmatpush1.xpose.msra.mxu0 0.0
    %1543 = vmatprep.subr.mxu0 0.0
    %1544 = vmatpush1.xpose.msra.mxu0 0.0
    %1545 = vmatprep.subr.mxu0 0.0
    %1546 = vmatpush1.xpose.msra.mxu0 0.0
    %1547 = vmatprep.subr.mxu0 0.0
    %1548 = vmatpush1.xpose.msra.mxu0 0.0
    %1549 = vmatprep.subr.mxu0 0.0
    %1550 = vmatpush1.xpose.msra.mxu0 0.0
    %1551 = vmatprep.subr.mxu0 0.0
    %1552 = vmatpush1.xpose.msra.mxu0 0.0
    %1553 = vmatprep.subr.mxu0 0.0
    %1554 = vmatpush1.xpose.msra.mxu0 0.0
    %1555 = vmatprep.subr.mxu0 0.0
    %1556 = vmatpush1.xpose.msra.mxu0 0.0
    %1557 = vmatprep.subr.mxu0 0.0
    %1558 = vmatpush1.xpose.msra.mxu0 0.0
    %1559 = vmatprep.subr.mxu0 0.0
    %1560 = vmatpush1.xpose.msra.mxu0 0.0
    %1561 = vmatprep.subr.mxu0 0.0
    %1562 = vmatpush1.xpose.msra.mxu0 0.0
    %1563 = vmatprep.subr.mxu0 0.0
    %1564 = vmatpush1.xpose.msra.mxu0 0.0
    %1565 = vmatprep.subr.mxu0 0.0
    %1566 = vmatpush1.xpose.msra.mxu0 %v1533
    %1567 = vmatprep.subr.mxu0 0.0
    %1568 = vmatpush2.xpose.msra.mxu0 0.0
    %1569 = vmatprep.subr.mxu0 0.0
    %1570 = vmatpush2.xpose.msra.mxu0 0.0
    %1571 = vmatprep.subr.mxu0 0.0
    %1572 = vmatpush2.xpose.msra.mxu0 0.0
    %1573 = vmatprep.subr.mxu0 0.0
    %1574 = vmatpush2.xpose.msra.mxu0 0.0
    %1575 = vmatprep.subr.mxu0 0.0
    %1576 = vmatpush2.xpose.msra.mxu0 0.0
    %1577 = vmatprep.subr.mxu0 0.0
    %1578 = vmatpush2.xpose.msra.mxu0 0.0
    %1579 = vmatprep.subr.mxu0 0.0
    %1580 = vmatpush2.xpose.msra.mxu0 0.0
    %1581 = vmatprep.subr.mxu0 0.0
    %1582 = vmatpush2.xpose.msra.mxu0 0.0
    %1583 = vmatprep.subr.mxu0 0.0
    %1584 = vmatpush2.xpose.msra.mxu0 0.0
    %1585 = vmatprep.subr.mxu0 0.0
    %1586 = vmatpush2.xpose.msra.mxu0 0.0
    %1587 = vmatprep.subr.mxu0 0.0
    %1588 = vmatpush2.xpose.msra.mxu0 0.0
    %1589 = vmatprep.subr.mxu0 0.0
    %1590 = vmatpush2.xpose.msra.mxu0 0.0
    %1591 = vmatprep.subr.mxu0 0.0
    %1592 = vmatpush2.xpose.msra.mxu0 0.0
    %1593 = vmatprep.subr.mxu0 0.0
    %1594 = vmatpush2.xpose.msra.mxu0 0.0
    %1595 = vmatprep.subr.mxu0 0.0
    %1596 = vmatpush2.xpose.msra.mxu0 0.0
    %1597 = vmatprep.subr.mxu0 0.0
    %1598 = vmatpush2.xpose.msra.mxu0 0.0
    %1599 = vmatprep.mubr.f32.mxu0 0.0
    %1600 = vmatmul.mubr.f32.gmra.mxu0 %v1531
    %v1601 = vpop.f32.mrf.mxu0
    %v1602 = vadd.f32 0.0, %v1601
    %v1603 = vpop.f32.mrf.mxu0
    %1604 = vdwg.mxu0
    %v1605 = vmul.f32 %v1524, 0.35355338
    %v1606 = vmul.f32 %v1602, 0.35355338
    %v1607 = vadd.f32 %v1605, %v353
    %v1608 = vadd.f32 %v1606, %v357
    %v1609 = vsel %vm194, %v1607, -inf
    %1610 = vmax.xlane.f32.xlu0 %v1609
    %v1611 = vpop.xlane.xlu0 %1610
    %v1612 = vsel %vm194, %v1608, -inf
    %1613 = vmax.xlane.f32.xlu0 %v1612
    %v1614 = vpop.xlane.xlu0 %1613
    %v1615 = vsub.f32 %v1607, %v1611
    %v1616 = vsub.f32 %v1608, %v1614
    %v1617 = vmul.f32 %v1615, 1.442695
    %v1618 = vpow.pop %v1617
    %v1619 = vmul.f32 %v1616, 1.442695
    %v1620 = vpow.pop %v1619
    %v1621 = vsel %vm194, %v1618, 0.0
    %1622 = vadd.xlane.f32.xlu0 %v1621
    %v1623 = vpop.xlane.xlu0 %1622
    %v1624 = vsel %vm194, %v1620, 0.0
    %1625 = vadd.xlane.f32.xlu0 %v1624
    %v1626 = vpop.xlane.xlu0 %1625
    %v1627 = vrcp.pop %v1623
    %v1628 = vrcp.pop %v1626
    %v1629 = vmul.f32 %v1618, %v1627
    %v1630 = vmul.f32 %v1620, %v1628
    %1631 = vrot.lane.b32.xlu0 %v183, 40
    %v1632 = vpop.permute.xlu0 %1631
    %v1635 = vsel %vm194, %v1629, 0
    %1637 = vmatprep.subr.mxu0 0.0
    %1638 = vmatpush1.msra.mxu0 0.0
    %1639 = vmatprep.subr.mxu0 0.0
    %1640 = vmatpush1.msra.mxu0 0.0
    %1641 = vmatprep.subr.mxu0 0.0
    %1642 = vmatpush1.msra.mxu0 0.0
    %1643 = vmatprep.subr.mxu0 0.0
    %1644 = vmatpush1.msra.mxu0 0.0
    %1645 = vmatprep.subr.mxu0 0.0
    %1646 = vmatpush1.msra.mxu0 0.0
    %1647 = vmatprep.subr.mxu0 0.0
    %1648 = vmatpush1.msra.mxu0 0.0
    %1649 = vmatprep.subr.mxu0 0.0
    %1650 = vmatpush1.msra.mxu0 0.0
    %1651 = vmatprep.subr.mxu0 0.0
    %1652 = vmatpush1.msra.mxu0 0.0
    %1653 = vmatprep.subr.mxu0 0.0
    %1654 = vmatpush1.msra.mxu0 0.0
    %1655 = vmatprep.subr.mxu0 0.0
    %1656 = vmatpush1.msra.mxu0 0.0
    %1657 = vmatprep.subr.mxu0 0.0
    %1658 = vmatpush1.msra.mxu0 0.0
    %1659 = vmatprep.subr.mxu0 0.0
    %1660 = vmatpush1.msra.mxu0 0.0
    %1661 = vmatprep.subr.mxu0 0.0
    %1662 = vmatpush1.msra.mxu0 0.0
    %1663 = vmatprep.subr.mxu0 0.0
    %1664 = vmatpush1.msra.mxu0 0.0
    %1665 = vmatprep.subr.mxu0 0.0
    %1666 = vmatpush1.msra.mxu0 0.0
    %1667 = vmatprep.subr.mxu0 0.0
    %1668 = vmatpush1.msra.mxu0 %v1632
    %1669 = vmatprep.subr.mxu0 0.0
    %1670 = vmatpush2.msra.mxu0 0.0
    %1671 = vmatprep.subr.mxu0 0.0
    %1672 = vmatpush2.msra.mxu0 0.0
    %1673 = vmatprep.subr.mxu0 0.0
    %1674 = vmatpush2.msra.mxu0 0.0
    %1675 = vmatprep.subr.mxu0 0.0
    %1676 = vmatpush2.msra.mxu0 0.0
    %1677 = vmatprep.subr.mxu0 0.0
    %1678 = vmatpush2.msra.mxu0 0.0
    %1679 = vmatprep.subr.mxu0 0.0
    %1680 = vmatpush2.msra.mxu0 0.0
    %1681 = vmatprep.subr.mxu0 0.0
    %1682 = vmatpush2.msra.mxu0 0.0
    %1683 = vmatprep.subr.mxu0 0.0
    %1684 = vmatpush2.msra.mxu0 0.0
    %1685 = vmatprep.subr.mxu0 0.0
    %1686 = vmatpush2.msra.mxu0 0.0
    %1687 = vmatprep.subr.mxu0 0.0
    %1688 = vmatpush2.msra.mxu0 0.0
    %1689 = vmatprep.subr.mxu0 0.0
    %1690 = vmatpush2.msra.mxu0 0.0
    %1691 = vmatprep.subr.mxu0 0.0
    %1692 = vmatpush2.msra.mxu0 0.0
    %1693 = vmatprep.subr.mxu0 0.0
    %1694 = vmatpush2.msra.mxu0 0.0
    %1695 = vmatprep.subr.mxu0 0.0
    %1696 = vmatpush2.msra.mxu0 0.0
    %1697 = vmatprep.subr.mxu0 0.0
    %1698 = vmatpush2.msra.mxu0 0.0
    %1699 = vmatprep.subr.mxu0 0.0
    %1700 = vmatpush2.msra.mxu0 0.0
    %1701 = vmatprep.mubr.f32.mxu0 0.0
    %1702 = vmatmul.mubr.f32.gmra.mxu0 %v1635
    %v1703 = vpop.f32.mrf.mxu0
    %v1704 = vadd.f32 0.0, %v1703
    %v1705 = vpop.f32.mrf.mxu0
    %1706 = vdwg.mxu0
    %1707 = vrot.lane.b32.xlu0 %v188, 40
    %v1708 = vpop.permute.xlu0 %1707
    %v1711 = vsel %vm194, %v1630, 0
    %1713 = vmatprep.subr.mxu0 0.0
    %1714 = vmatpush1.msra.mxu0 0.0
    %1715 = vmatprep.subr.mxu0 0.0
    %1716 = vmatpush1.msra.mxu0 0.0
    %1717 = vmatprep.subr.mxu0 0.0
    %1718 = vmatpush1.msra.mxu0 0.0
    %1719 = vmatprep.subr.mxu0 0.0
    %1720 = vmatpush1.msra.mxu0 0.0
    %1721 = vmatprep.subr.mxu0 0.0
    %1722 = vmatpush1.msra.mxu0 0.0
    %1723 = vmatprep.subr.mxu0 0.0
    %1724 = vmatpush1.msra.mxu0 0.0
    %1725 = vmatprep.subr.mxu0 0.0
    %1726 = vmatpush1.msra.mxu0 0.0
    %1727 = vmatprep.subr.mxu0 0.0
    %1728 = vmatpush1.msra.mxu0 0.0
    %1729 = vmatprep.subr.mxu0 0.0
    %1730 = vmatpush1.msra.mxu0 0.0
    %1731 = vmatprep.subr.mxu0 0.0
    %1732 = vmatpush1.msra.mxu0 0.0
    %1733 = vmatprep.subr.mxu0 0.0
    %1734 = vmatpush1.msra.mxu0 0.0
    %1735 = vmatprep.subr.mxu0 0.0
    %1736 = vmatpush1.msra.mxu0 0.0
    %1737 = vmatprep.subr.mxu0 0.0
    %1738 = vmatpush1.msra.mxu0 0.0
    %1739 = vmatprep.subr.mxu0 0.0
    %1740 = vmatpush1.msra.mxu0 0.0
    %1741 = vmatprep.subr.mxu0 0.0
    %1742 = vmatpush1.msra.mxu0 0.0
    %1743 = vmatprep.subr.mxu0 0.0
    %1744 = vmatpush1.msra.mxu0 %v1708
    %1745 = vmatprep.subr.mxu0 0.0
    %1746 = vmatpush2.msra.mxu0 0.0
    %1747 = vmatprep.subr.mxu0 0.0
    %1748 = vmatpush2.msra.mxu0 0.0
    %1749 = vmatprep.subr.mxu0 0.0
    %1750 = vmatpush2.msra.mxu0 0.0
    %1751 = vmatprep.subr.mxu0 0.0
    %1752 = vmatpush2.msra.mxu0 0.0
    %1753 = vmatprep.subr.mxu0 0.0
    %1754 = vmatpush2.msra.mxu0 0.0
    %1755 = vmatprep.subr.mxu0 0.0
    %1756 = vmatpush2.msra.mxu0 0.0
    %1757 = vmatprep.subr.mxu0 0.0
    %1758 = vmatpush2.msra.mxu0 0.0
    %1759 = vmatprep.subr.mxu0 0.0
    %1760 = vmatpush2.msra.mxu0 0.0
    %1761 = vmatprep.subr.mxu0 0.0
    %1762 = vmatpush2.msra.mxu0 0.0
    %1763 = vmatprep.subr.mxu0 0.0
    %1764 = vmatpush2.msra.mxu0 0.0
    %1765 = vmatprep.subr.mxu0 0.0
    %1766 = vmatpush2.msra.mxu0 0.0
    %1767 = vmatprep.subr.mxu0 0.0
    %1768 = vmatpush2.msra.mxu0 0.0
    %1769 = vmatprep.subr.mxu0 0.0
    %1770 = vmatpush2.msra.mxu0 0.0
    %1771 = vmatprep.subr.mxu0 0.0
    %1772 = vmatpush2.msra.mxu0 0.0
    %1773 = vmatprep.subr.mxu0 0.0
    %1774 = vmatpush2.msra.mxu0 0.0
    %1775 = vmatprep.subr.mxu0 0.0
    %1776 = vmatpush2.msra.mxu0 0.0
    %1777 = vmatprep.mubr.f32.mxu0 0.0
    %1778 = vmatmul.mubr.f32.gmra.mxu0 %v1711
    %v1779 = vpop.f32.mrf.mxu0
    %v1780 = vadd.f32 0.0, %v1779
    %v1781 = vpop.f32.mrf.mxu0
    %1782 = vdwg.mxu0
    %v1784 = vsel %vm194, %v1704, 0
    %v1787 = vsel %vm194, %v1780, 0
    %1789 = vmatprep.subr.mxu0 0.0
    %1790 = vmatpush1.msra.mxu0 0.0
    %1791 = vmatprep.subr.mxu0 0.0
    %1792 = vmatpush1.msra.mxu0 0.0
    %1793 = vmatprep.subr.mxu0 0.0
    %1794 = vmatpush1.msra.mxu0 0.0
    %1795 = vmatprep.subr.mxu0 0.0
    %1796 = vmatpush1.msra.mxu0 0.0
    %1797 = vmatprep.subr.mxu0 0.0
    %1798 = vmatpush1.msra.mxu0 0.0
    %1799 = vmatprep.subr.mxu0 0.0
    %1800 = vmatpush1.msra.mxu0 0.0
    %1801 = vmatprep.subr.mxu0 0.0
    %1802 = vmatpush1.msra.mxu0 0.0
    %1803 = vmatprep.subr.mxu0 0.0
    %1804 = vmatpush1.msra.mxu0 0.0
    %1805 = vmatprep.subr.mxu0 0.0
    %1806 = vmatpush1.msra.mxu0 0.0
    %1807 = vmatprep.subr.mxu0 0.0
    %1808 = vmatpush1.msra.mxu0 0.0
    %1809 = vmatprep.subr.mxu0 0.0
    %1810 = vmatpush1.msra.mxu0 0.0
    %1811 = vmatprep.subr.mxu0 0.0
    %1812 = vmatpush1.msra.mxu0 0.0
    %1813 = vmatprep.subr.mxu0 0.0
    %1814 = vmatpush1.msra.mxu0 0.0
    %1815 = vmatprep.subr.mxu0 0.0
    %1816 = vmatpush1.msra.mxu0 0.0
    %1817 = vmatprep.subr.mxu0 0.0
    %1818 = vmatpush1.msra.mxu0 0.0
    %1819 = vmatprep.subr.mxu0 0.0
    %1820 = vmatpush1.msra.mxu0 %v49
    %1821 = vmatprep.subr.mxu0 0.0
    %1822 = vmatpush2.msra.mxu0 0.0
    %1823 = vmatprep.subr.mxu0 0.0
    %1824 = vmatpush2.msra.mxu0 0.0
    %1825 = vmatprep.subr.mxu0 0.0
    %1826 = vmatpush2.msra.mxu0 0.0
    %1827 = vmatprep.subr.mxu0 0.0
    %1828 = vmatpush2.msra.mxu0 0.0
    %1829 = vmatprep.subr.mxu0 0.0
    %1830 = vmatpush2.msra.mxu0 0.0
    %1831 = vmatprep.subr.mxu0 0.0
    %1832 = vmatpush2.msra.mxu0 0.0
    %1833 = vmatprep.subr.mxu0 0.0
    %1834 = vmatpush2.msra.mxu0 0.0
    %1835 = vmatprep.subr.mxu0 0.0
    %1836 = vmatpush2.msra.mxu0 0.0
    %1837 = vmatprep.subr.mxu0 0.0
    %1838 = vmatpush2.msra.mxu0 0.0
    %1839 = vmatprep.subr.mxu0 0.0
    %1840 = vmatpush2.msra.mxu0 0.0
    %1841 = vmatprep.subr.mxu0 0.0
    %1842 = vmatpush2.msra.mxu0 0.0
    %1843 = vmatprep.subr.mxu0 0.0
    %1844 = vmatpush2.msra.mxu0 0.0
    %1845 = vmatprep.subr.mxu0 0.0
    %1846 = vmatpush2.msra.mxu0 0.0
    %1847 = vmatprep.subr.mxu0 0.0
    %1848 = vmatpush2.msra.mxu0 0.0
    %1849 = vmatprep.subr.mxu0 0.0
    %1850 = vmatpush2.msra.mxu0 0.0
    %1851 = vmatprep.subr.mxu0 0.0
    %1852 = vmatpush2.msra.mxu0 0.0
    %1853 = vmatprep.mubr.f32.mxu0 0.0
    %1854 = vmatmul.mubr.f32.gmra.mxu0 %v1784
    %v1855 = vpop.f32.mrf.mxu0
    %v1856 = vadd.f32 0.0, %v1855
    %v1857 = vpop.f32.mrf.mxu0
    %1858 = vmatprep.mubr.f32.mxu0 0.0
    %1859 = vmatmul.mubr.f32.gmra.mxu0 %v1787
    %v1860 = vpop.f32.mrf.mxu0
    %v1861 = vadd.f32 0.0, %v1860
    %v1862 = vpop.f32.mrf.mxu0
    %1863 = vdwg.mxu0
    %v1864 = vadd.f32 %v1447, %v1856
    %v1865 = vadd.f32 %v1448, %v1861
    %v1866 = vadd.f32 %v33, %v1864
    %v1867 = vadd.f32 %v34, %v1865
    %v1868 = vlaneseq
    %v1869 = vshrl.u32 %v1868, 7
    %v1870 = vsub.s32 4, %v1869
    %v1871 = vrot.slane %v63, %v1870
    %v1872 = vadd.f32 %v1866, %v1871
    %v1873 = vadd.f32 %v1867, %v1871
    %v1874 = vsel %vm64, %v1872, 0.0
    %1875 = vadd.xlane.f32.xlu0 %v1874
    %v1876 = vpop.xlane.xlu0 %1875
    %v1877 = vsel %vm64, %v1873, 0.0
    %1878 = vadd.xlane.f32.xlu0 %v1877
    %v1879 = vpop.xlane.xlu0 %1878
    %v1880 = vmul.f32 %v1876, %v71
    %v1881 = vmul.f32 %v1879, %v71
    %v1882 = vsub.f32 %v1872, %v1880
    %v1883 = vsub.f32 %v1873, %v1881
    %v1884 = vmul.f32 %v1882, %v1882
    %v1885 = vmul.f32 %v1883, %v1883
    %v1886 = vsel %vm64, %v1884, 0.0
    %1887 = vadd.xlane.f32.xlu0 %v1886
    %v1888 = vpop.xlane.xlu0 %1887
    %v1889 = vsel %vm64, %v1885, 0.0
    %1890 = vadd.xlane.f32.xlu0 %v1889
    %v1891 = vpop.xlane.xlu0 %1890
    %v1892 = vmul.f32 %v1888, %v71
    %v1893 = vmul.f32 %v1891, %v71
    %v1894 = vadd.f32 %v1892, 1e-06
    %v1895 = vadd.f32 %v1893, 1e-06
    %v1896 = vrsqrt.pop %v1894
    %v1897 = vrsqrt.pop %v1895
    %v1898 = vmul.f32 %v1882, %v1896
    %v1899 = vmul.f32 %v1883, %v1897
    %v1900 = vlaneseq
    %v1901 = vshrl.u32 %v1900, 7
    %v1902 = vsub.s32 2, %v1901
    %v1903 = vrot.slane %v63, %v1902
    %v1904 = vmul.f32 %v1898, %v1903
    %v1905 = vmul.f32 %v1899, %v1903
    %v1906 = vlaneseq
    %v1907 = vshrl.u32 %v1906, 7
    %v1908 = vsub.s32 3, %v1907
    %v1909 = vrot.slane %v63, %v1908
    %v1910 = vadd.f32 %v1904, %v1909
    %v1911 = vadd.f32 %v1905, %v1909
    %v1913 = vlaneseq
    %v1914 = vshrl.u32 %v1913, 7
    %v1915 = vsub.s32 0, %v1914
    %v1916 = vrot.slane %v54, %v1915
    %v1919 = vsel %vm64, %v1910, 0
    %v1922 = vsel %vm64, %v1911, 0
    %1924 = vmatprep.subr.mxu0 0.0
    %1925 = vmatpush1.msra.mxu0 0.0
    %1926 = vmatprep.subr.mxu0 0.0
    %1927 = vmatpush1.msra.mxu0 0.0
    %1928 = vmatprep.subr.mxu0 0.0
    %1929 = vmatpush1.msra.mxu0 0.0
    %1930 = vmatprep.subr.mxu0 0.0
    %1931 = vmatpush1.msra.mxu0 0.0
    %1932 = vmatprep.subr.mxu0 0.0
    %1933 = vmatpush1.msra.mxu0 0.0
    %1934 = vmatprep.subr.mxu0 0.0
    %1935 = vmatpush1.msra.mxu0 0.0
    %1936 = vmatprep.subr.mxu0 0.0
    %1937 = vmatpush1.msra.mxu0 0.0
    %1938 = vmatprep.subr.mxu0 0.0
    %1939 = vmatpush1.msra.mxu0 0.0
    %1940 = vmatprep.subr.mxu0 0.0
    %1941 = vmatpush1.msra.mxu0 0.0
    %1942 = vmatprep.subr.mxu0 0.0
    %1943 = vmatpush1.msra.mxu0 0.0
    %1944 = vmatprep.subr.mxu0 0.0
    %1945 = vmatpush1.msra.mxu0 0.0
    %1946 = vmatprep.subr.mxu0 0.0
    %1947 = vmatpush1.msra.mxu0 0.0
    %1948 = vmatprep.subr.mxu0 0.0
    %1949 = vmatpush1.msra.mxu0 %v53
    %1950 = vmatprep.subr.mxu0 0.0
    %1951 = vmatpush1.msra.mxu0 %v52
    %1952 = vmatprep.subr.mxu0 0.0
    %1953 = vmatpush1.msra.mxu0 %v51
    %1954 = vmatprep.subr.mxu0 0.0
    %1955 = vmatpush1.msra.mxu0 %v50
    %1956 = vmatprep.subr.mxu0 0.0
    %1957 = vmatpush2.msra.mxu0 0.0
    %1958 = vmatprep.subr.mxu0 0.0
    %1959 = vmatpush2.msra.mxu0 0.0
    %1960 = vmatprep.subr.mxu0 0.0
    %1961 = vmatpush2.msra.mxu0 0.0
    %1962 = vmatprep.subr.mxu0 0.0
    %1963 = vmatpush2.msra.mxu0 0.0
    %1964 = vmatprep.subr.mxu0 0.0
    %1965 = vmatpush2.msra.mxu0 0.0
    %1966 = vmatprep.subr.mxu0 0.0
    %1967 = vmatpush2.msra.mxu0 0.0
    %1968 = vmatprep.subr.mxu0 0.0
    %1969 = vmatpush2.msra.mxu0 0.0
    %1970 = vmatprep.subr.mxu0 0.0
    %1971 = vmatpush2.msra.mxu0 0.0
    %1972 = vmatprep.subr.mxu0 0.0
    %1973 = vmatpush2.msra.mxu0 0.0
    %1974 = vmatprep.subr.mxu0 0.0
    %1975 = vmatpush2.msra.mxu0 0.0
    %1976 = vmatprep.subr.mxu0 0.0
    %1977 = vmatpush2.msra.mxu0 0.0
    %1978 = vmatprep.subr.mxu0 0.0
    %1979 = vmatpush2.msra.mxu0 0.0
    %1980 = vmatprep.subr.mxu0 0.0
    %1981 = vmatpush2.msra.mxu0 0.0
    %1982 = vmatprep.subr.mxu0 0.0
    %1983 = vmatpush2.msra.mxu0 0.0
    %1984 = vmatprep.subr.mxu0 0.0
    %1985 = vmatpush2.msra.mxu0 0.0
    %1986 = vmatprep.subr.mxu0 0.0
    %1987 = vmatpush2.msra.mxu0 0.0
    %1988 = vmatprep.mubr.f32.mxu0 0.0
    %1989 = vmatmul.mubr.f32.gmra.mxu0 %v1919
    %v1990 = vpop.f32.mrf.mxu0
    %v1991 = vadd.f32 %v1916, %v1990
    %v1992 = vpop.f32.mrf.mxu0
    %1993 = vmatprep.mubr.f32.mxu0 0.0
    %1994 = vmatmul.mubr.f32.gmra.mxu0 %v1922
    %v1995 = vpop.f32.mrf.mxu0
    %v1996 = vadd.f32 %v1916, %v1995
    %v1997 = vpop.f32.mrf.mxu0
    %1998 = vdwg.mxu0
    %v1999 = vmax.f32 %v1991, 0.0
    %v2000 = vmax.f32 %v1996, 0.0
    %vm2001 = vcmask 523264
    %v2003 = vsel %vm2001, %v1999, 0
    %v2006 = vsel %vm2001, %v2000, 0
    %2008 = vmatprep.subr.mxu0 0.0
    %2009 = vmatpush1.msra.mxu0 0.0
    %2010 = vmatprep.subr.mxu0 0.0
    %2011 = vmatpush1.msra.mxu0 0.0
    %2012 = vmatprep.subr.mxu0 0.0
    %2013 = vmatpush1.msra.mxu0 0.0
    %2014 = vmatprep.subr.mxu0 0.0
    %2015 = vmatpush1.msra.mxu0 0.0
    %2016 = vmatprep.subr.mxu0 0.0
    %2017 = vmatpush1.msra.mxu0 0.0
    %2018 = vmatprep.subr.mxu0 0.0
    %2019 = vmatpush1.msra.mxu0 0.0
    %2020 = vmatprep.subr.mxu0 0.0
    %2021 = vmatpush1.msra.mxu0 0.0
    %2022 = vmatprep.subr.mxu0 0.0
    %2023 = vmatpush1.msra.mxu0 0.0
    %2024 = vmatprep.subr.mxu0 0.0
    %2025 = vmatpush1.msra.mxu0 %v62
    %2026 = vmatprep.subr.mxu0 0.0
    %2027 = vmatpush1.msra.mxu0 %v61
    %2028 = vmatprep.subr.mxu0 0.0
    %2029 = vmatpush1.msra.mxu0 %v60
    %2030 = vmatprep.subr.mxu0 0.0
    %2031 = vmatpush1.msra.mxu0 %v59
    %2032 = vmatprep.subr.mxu0 0.0
    %2033 = vmatpush1.msra.mxu0 %v58
    %2034 = vmatprep.subr.mxu0 0.0
    %2035 = vmatpush1.msra.mxu0 %v57
    %2036 = vmatprep.subr.mxu0 0.0
    %2037 = vmatpush1.msra.mxu0 %v56
    %2038 = vmatprep.subr.mxu0 0.0
    %2039 = vmatpush1.msra.mxu0 %v55
    %2040 = vmatprep.subr.mxu0 0.0
    %2041 = vmatpush2.msra.mxu0 0.0
    %2042 = vmatprep.subr.mxu0 0.0
    %2043 = vmatpush2.msra.mxu0 0.0
    %2044 = vmatprep.subr.mxu0 0.0
    %2045 = vmatpush2.msra.mxu0 0.0
    %2046 = vmatprep.subr.mxu0 0.0
    %2047 = vmatpush2.msra.mxu0 0.0
    %2048 = vmatprep.subr.mxu0 0.0
    %2049 = vmatpush2.msra.mxu0 0.0
    %2050 = vmatprep.subr.mxu0 0.0
    %2051 = vmatpush2.msra.mxu0 0.0
    %2052 = vmatprep.subr.mxu0 0.0
    %2053 = vmatpush2.msra.mxu0 0.0
    %2054 = vmatprep.subr.mxu0 0.0
    %2055 = vmatpush2.msra.mxu0 0.0
    %2056 = vmatprep.subr.mxu0 0.0
    %2057 = vmatpush2.msra.mxu0 0.0
    %2058 = vmatprep.subr.mxu0 0.0
    %2059 = vmatpush2.msra.mxu0 0.0
    %2060 = vmatprep.subr.mxu0 0.0
    %2061 = vmatpush2.msra.mxu0 0.0
    %2062 = vmatprep.subr.mxu0 0.0
    %2063 = vmatpush2.msra.mxu0 0.0
    %2064 = vmatprep.subr.mxu0 0.0
    %2065 = vmatpush2.msra.mxu0 0.0
    %2066 = vmatprep.subr.mxu0 0.0
    %2067 = vmatpush2.msra.mxu0 0.0
    %2068 = vmatprep.subr.mxu0 0.0
    %2069 = vmatpush2.msra.mxu0 0.0
    %2070 = vmatprep.subr.mxu0 0.0
    %2071 = vmatpush2.msra.mxu0 0.0
    %2072 = vmatprep.mubr.f32.mxu0 0.0
    %2073 = vmatmul.mubr.f32.gmra.mxu0 %v2003
    %v2074 = vpop.f32.mrf.mxu0
    %v2075 = vadd.f32 0.0, %v2074
    %v2076 = vpop.f32.mrf.mxu0
    %2077 = vmatprep.mubr.f32.mxu0 0.0
    %2078 = vmatmul.mubr.f32.gmra.mxu0 %v2006
    %v2079 = vpop.f32.mrf.mxu0
    %v2080 = vadd.f32 0.0, %v2079
    %v2081 = vpop.f32.mrf.mxu0
    %2082 = vdwg.mxu0
    %v2083 = vadd.f32 %v1872, %v2075
    %v2084 = vadd.f32 %v1873, %v2080
    %v2085 = vlaneseq
    %v2086 = vshrl.u32 %v2085, 7
    %v2087 = vsub.s32 5, %v2086
    %v2088 = vrot.slane %v63, %v2087
    %v2089 = vadd.f32 %v2083, %v2088
    %v2090 = vadd.f32 %v2084, %v2088
    %s2091 = scalar_lea.vmem %s2, 32
    %v2092 = vld [vmem:[%s2091] sm:$0xff]
    %v2093 = vld [vmem:[%s2091 + $0x8] sm:$0xff]
    %v2094 = vld [vmem:[%s2091 + $0x10] sm:$0xff]
    %v2095 = vld [vmem:[%s2091 + $0x18] sm:$0xff]
    %s2096 = scalar_lea.vmem %s3, 1
    %v2097 = vld [vmem:[%s2096] sm:$0x1]
    %s2098 = scalar_lea.vmem %s4, 32
    %v2099 = vld [vmem:[%s2098] sm:$0xff]
    %v2100 = vld [vmem:[%s2098 + $0x8] sm:$0xff]
    %v2101 = vld [vmem:[%s2098 + $0x10] sm:$0xff]
    %v2102 = vld [vmem:[%s2098 + $0x18] sm:$0xff]
    %s2103 = scalar_lea.vmem %s5, 32
    %v2104 = vld [vmem:[%s2103] sm:$0xff]
    %v2105 = vld [vmem:[%s2103 + $0x8] sm:$0xff]
    %v2106 = vld [vmem:[%s2103 + $0x10] sm:$0xff]
    %v2107 = vld [vmem:[%s2103 + $0x18] sm:$0xff]
    %s2108 = scalar_lea.vmem %s6, 1
    %v2109 = vld [vmem:[%s2108] sm:$0x1]
    %s2110 = scalar_lea.vmem %s7, 64
    %v2111 = vld [vmem:[%s2110] sm:$0xff]
    %v2112 = vld [vmem:[%s2110 + $0x8] sm:$0xff]
    %v2113 = vld [vmem:[%s2110 + $0x10] sm:$0xff]
    %v2114 = vld [vmem:[%s2110 + $0x18] sm:$0xff]
    %v2115 = vld [vmem:[%s2110 + $0x20] sm:$0xff]
    %v2116 = vld [vmem:[%s2110 + $0x28] sm:$0xff]
    %v2117 = vld [vmem:[%s2110 + $0x30] sm:$0xff]
    %v2118 = vld [vmem:[%s2110 + $0x38] sm:$0xff]
    %s2119 = scalar_lea.vmem %s8, 8
    %v2120 = vld [vmem:[%s2119] sm:$0x3f]
    %v2121 = vsel %vm64, %v2089, 0.0
    %2122 = vadd.xlane.f32.xlu0 %v2121
    %v2123 = vpop.xlane.xlu0 %2122
    %v2124 = vsel %vm64, %v2090, 0.0
    %2125 = vadd.xlane.f32.xlu0 %v2124
    %v2126 = vpop.xlane.xlu0 %2125
    %v2127 = vmul.f32 %v2123, %v71
    %v2128 = vmul.f32 %v2126, %v71
    %v2129 = vsub.f32 %v2089, %v2127
    %v2130 = vsub.f32 %v2090, %v2128
    %v2131 = vmul.f32 %v2129, %v2129
    %v2132 = vmul.f32 %v2130, %v2130
    %v2133 = vsel %vm64, %v2131, 0.0
    %2134 = vadd.xlane.f32.xlu0 %v2133
    %v2135 = vpop.xlane.xlu0 %2134
    %v2136 = vsel %vm64, %v2132, 0.0
    %2137 = vadd.xlane.f32.xlu0 %v2136
    %v2138 = vpop.xlane.xlu0 %2137
    %v2139 = vmul.f32 %v2135, %v71
    %v2140 = vmul.f32 %v2138, %v71
    %v2141 = vadd.f32 %v2139, 1e-06
    %v2142 = vadd.f32 %v2140, 1e-06
    %v2143 = vrsqrt.pop %v2141
    %v2144 = vrsqrt.pop %v2142
    %v2145 = vmul.f32 %v2129, %v2143
    %v2146 = vmul.f32 %v2130, %v2144
    %v2147 = vlaneseq
    %v2148 = vshrl.u32 %v2147, 7
    %v2149 = vsub.s32 0, %v2148
    %v2150 = vrot.slane %v2120, %v2149
    %v2151 = vmul.f32 %v2145, %v2150
    %v2152 = vmul.f32 %v2146, %v2150
    %v2153 = vlaneseq
    %v2154 = vshrl.u32 %v2153, 7
    %v2155 = vsub.s32 1, %v2154
    %v2156 = vrot.slane %v2120, %v2155
    %v2157 = vadd.f32 %v2151, %v2156
    %v2158 = vadd.f32 %v2152, %v2156
    %v2160 = vlaneseq
    %v2161 = vshrl.u32 %v2160, 7
    %v2162 = vsub.s32 0, %v2161
    %v2163 = vrot.slane %v2097, %v2162
    %v2166 = vsel %vm64, %v2157, 0
    %v2169 = vsel %vm64, %v2158, 0
    %2171 = vmatprep.subr.mxu0 0.0
    %2172 = vmatpush1.msra.mxu0 0.0
    %2173 = vmatprep.subr.mxu0 0.0
    %2174 = vmatpush1.msra.mxu0 0.0
    %2175 = vmatprep.subr.mxu0 0.0
    %2176 = vmatpush1.msra.mxu0 0.0
    %2177 = vmatprep.subr.mxu0 0.0
    %2178 = vmatpush1.msra.mxu0 0.0
    %2179 = vmatprep.subr.mxu0 0.0
    %2180 = vmatpush1.msra.mxu0 0.0
    %2181 = vmatprep.subr.mxu0 0.0
    %2182 = vmatpush1.msra.mxu0 0.0
    %2183 = vmatprep.subr.mxu0 0.0
    %2184 = vmatpush1.msra.mxu0 0.0
    %2185 = vmatprep.subr.mxu0 0.0
    %2186 = vmatpush1.msra.mxu0 0.0
    %2187 = vmatprep.subr.mxu0 0.0
    %2188 = vmatpush1.msra.mxu0 0.0
    %2189 = vmatprep.subr.mxu0 0.0
    %2190 = vmatpush1.msra.mxu0 0.0
    %2191 = vmatprep.subr.mxu0 0.0
    %2192 = vmatpush1.msra.mxu0 0.0
    %2193 = vmatprep.subr.mxu0 0.0
    %2194 = vmatpush1.msra.mxu0 0.0
    %2195 = vmatprep.subr.mxu0 0.0
    %2196 = vmatpush1.msra.mxu0 %v2095
    %2197 = vmatprep.subr.mxu0 0.0
    %2198 = vmatpush1.msra.mxu0 %v2094
    %2199 = vmatprep.subr.mxu0 0.0
    %2200 = vmatpush1.msra.mxu0 %v2093
    %2201 = vmatprep.subr.mxu0 0.0
    %2202 = vmatpush1.msra.mxu0 %v2092
    %2203 = vmatprep.subr.mxu0 0.0
    %2204 = vmatpush2.msra.mxu0 0.0
    %2205 = vmatprep.subr.mxu0 0.0
    %2206 = vmatpush2.msra.mxu0 0.0
    %2207 = vmatprep.subr.mxu0 0.0
    %2208 = vmatpush2.msra.mxu0 0.0
    %2209 = vmatprep.subr.mxu0 0.0
    %2210 = vmatpush2.msra.mxu0 0.0
    %2211 = vmatprep.subr.mxu0 0.0
    %2212 = vmatpush2.msra.mxu0 0.0
    %2213 = vmatprep.subr.mxu0 0.0
    %2214 = vmatpush2.msra.mxu0 0.0
    %2215 = vmatprep.subr.mxu0 0.0
    %2216 = vmatpush2.msra.mxu0 0.0
    %2217 = vmatprep.subr.mxu0 0.0
    %2218 = vmatpush2.msra.mxu0 0.0
    %2219 = vmatprep.subr.mxu0 0.0
    %2220 = vmatpush2.msra.mxu0 0.0
    %2221 = vmatprep.subr.mxu0 0.0
    %2222 = vmatpush2.msra.mxu0 0.0
    %2223 = vmatprep.subr.mxu0 0.0
    %2224 = vmatpush2.msra.mxu0 0.0
    %2225 = vmatprep.subr.mxu0 0.0
    %2226 = vmatpush2.msra.mxu0 0.0
    %2227 = vmatprep.subr.mxu0 0.0
    %2228 = vmatpush2.msra.mxu0 0.0
    %2229 = vmatprep.subr.mxu0 0.0
    %2230 = vmatpush2.msra.mxu0 0.0
    %2231 = vmatprep.subr.mxu0 0.0
    %2232 = vmatpush2.msra.mxu0 0.0
    %2233 = vmatprep.subr.mxu0 0.0
    %2234 = vmatpush2.msra.mxu0 0.0
    %2235 = vmatprep.mubr.f32.mxu0 0.0
    %2236 = vmatmul.mubr.f32.gmra.mxu0 %v2166
    %v2237 = vpop.f32.mrf.mxu0
    %v2238 = vadd.f32 %v2163, %v2237
    %v2239 = vpop.f32.mrf.mxu0
    %2240 = vmatprep.mubr.f32.mxu0 0.0
    %2241 = vmatmul.mubr.f32.gmra.mxu0 %v2169
    %v2242 = vpop.f32.mrf.mxu0
    %v2243 = vadd.f32 %v2163, %v2242
    %v2244 = vpop.f32.mrf.mxu0
    %2245 = vdwg.mxu0
    %2247 = vrot.lane.b32.xlu0 %v2238, 96
    %v2248 = vpop.permute.xlu0 %2247
    %v2249 = vsel %vm194, %v2238, 0
    %v2251 = vsel %vm194, %v2248, 0
    %2253 = vmatprep.subr.mxu0 0.0
    %2254 = vmatpush1.xpose.msra.mxu0 0.0
    %2255 = vmatprep.subr.mxu0 0.0
    %2256 = vmatpush1.xpose.msra.mxu0 0.0
    %2257 = vmatprep.subr.mxu0 0.0
    %2258 = vmatpush1.xpose.msra.mxu0 0.0
    %2259 = vmatprep.subr.mxu0 0.0
    %2260 = vmatpush1.xpose.msra.mxu0 0.0
    %2261 = vmatprep.subr.mxu0 0.0
    %2262 = vmatpush1.xpose.msra.mxu0 0.0
    %2263 = vmatprep.subr.mxu0 0.0
    %2264 = vmatpush1.xpose.msra.mxu0 0.0
    %2265 = vmatprep.subr.mxu0 0.0
    %2266 = vmatpush1.xpose.msra.mxu0 0.0
    %2267 = vmatprep.subr.mxu0 0.0
    %2268 = vmatpush1.xpose.msra.mxu0 0.0
    %2269 = vmatprep.subr.mxu0 0.0
    %2270 = vmatpush1.xpose.msra.mxu0 0.0
    %2271 = vmatprep.subr.mxu0 0.0
    %2272 = vmatpush1.xpose.msra.mxu0 0.0
    %2273 = vmatprep.subr.mxu0 0.0
    %2274 = vmatpush1.xpose.msra.mxu0 0.0
    %2275 = vmatprep.subr.mxu0 0.0
    %2276 = vmatpush1.xpose.msra.mxu0 0.0
    %2277 = vmatprep.subr.mxu0 0.0
    %2278 = vmatpush1.xpose.msra.mxu0 0.0
    %2279 = vmatprep.subr.mxu0 0.0
    %2280 = vmatpush1.xpose.msra.mxu0 0.0
    %2281 = vmatprep.subr.mxu0 0.0
    %2282 = vmatpush1.xpose.msra.mxu0 0.0
    %2283 = vmatprep.subr.mxu0 0.0
    %2284 = vmatpush1.xpose.msra.mxu0 %v2251
    %2285 = vmatprep.subr.mxu0 0.0
    %2286 = vmatpush2.xpose.msra.mxu0 0.0
    %2287 = vmatprep.subr.mxu0 0.0
    %2288 = vmatpush2.xpose.msra.mxu0 0.0
    %2289 = vmatprep.subr.mxu0 0.0
    %2290 = vmatpush2.xpose.msra.mxu0 0.0
    %2291 = vmatprep.subr.mxu0 0.0
    %2292 = vmatpush2.xpose.msra.mxu0 0.0
    %2293 = vmatprep.subr.mxu0 0.0
    %2294 = vmatpush2.xpose.msra.mxu0 0.0
    %2295 = vmatprep.subr.mxu0 0.0
    %2296 = vmatpush2.xpose.msra.mxu0 0.0
    %2297 = vmatprep.subr.mxu0 0.0
    %2298 = vmatpush2.xpose.msra.mxu0 0.0
    %2299 = vmatprep.subr.mxu0 0.0
    %2300 = vmatpush2.xpose.msra.mxu0 0.0
    %2301 = vmatprep.subr.mxu0 0.0
    %2302 = vmatpush2.xpose.msra.mxu0 0.0
    %2303 = vmatprep.subr.mxu0 0.0
    %2304 = vmatpush2.xpose.msra.mxu0 0.0
    %2305 = vmatprep.subr.mxu0 0.0
    %2306 = vmatpush2.xpose.msra.mxu0 0.0
    %2307 = vmatprep.subr.mxu0 0.0
    %2308 = vmatpush2.xpose.msra.mxu0 0.0
    %2309 = vmatprep.subr.mxu0 0.0
    %2310 = vmatpush2.xpose.msra.mxu0 0.0
    %2311 = vmatprep.subr.mxu0 0.0
    %2312 = vmatpush2.xpose.msra.mxu0 0.0
    %2313 = vmatprep.subr.mxu0 0.0
    %2314 = vmatpush2.xpose.msra.mxu0 0.0
    %2315 = vmatprep.subr.mxu0 0.0
    %2316 = vmatpush2.xpose.msra.mxu0 0.0
    %2317 = vmatprep.mubr.f32.mxu0 0.0
    %2318 = vmatmul.mubr.f32.gmra.mxu0 %v2249
    %v2319 = vpop.f32.mrf.mxu0
    %v2320 = vadd.f32 0.0, %v2319
    %v2321 = vpop.f32.mrf.mxu0
    %2322 = vdwg.mxu0
    %2324 = vrot.lane.b32.xlu0 %v2243, 96
    %v2325 = vpop.permute.xlu0 %2324
    %v2326 = vsel %vm194, %v2243, 0
    %v2328 = vsel %vm194, %v2325, 0
    %2330 = vmatprep.subr.mxu0 0.0
    %2331 = vmatpush1.xpose.msra.mxu0 0.0
    %2332 = vmatprep.subr.mxu0 0.0
    %2333 = vmatpush1.xpose.msra.mxu0 0.0
    %2334 = vmatprep.subr.mxu0 0.0
    %2335 = vmatpush1.xpose.msra.mxu0 0.0
    %2336 = vmatprep.subr.mxu0 0.0
    %2337 = vmatpush1.xpose.msra.mxu0 0.0
    %2338 = vmatprep.subr.mxu0 0.0
    %2339 = vmatpush1.xpose.msra.mxu0 0.0
    %2340 = vmatprep.subr.mxu0 0.0
    %2341 = vmatpush1.xpose.msra.mxu0 0.0
    %2342 = vmatprep.subr.mxu0 0.0
    %2343 = vmatpush1.xpose.msra.mxu0 0.0
    %2344 = vmatprep.subr.mxu0 0.0
    %2345 = vmatpush1.xpose.msra.mxu0 0.0
    %2346 = vmatprep.subr.mxu0 0.0
    %2347 = vmatpush1.xpose.msra.mxu0 0.0
    %2348 = vmatprep.subr.mxu0 0.0
    %2349 = vmatpush1.xpose.msra.mxu0 0.0
    %2350 = vmatprep.subr.mxu0 0.0
    %2351 = vmatpush1.xpose.msra.mxu0 0.0
    %2352 = vmatprep.subr.mxu0 0.0
    %2353 = vmatpush1.xpose.msra.mxu0 0.0
    %2354 = vmatprep.subr.mxu0 0.0
    %2355 = vmatpush1.xpose.msra.mxu0 0.0
    %2356 = vmatprep.subr.mxu0 0.0
    %2357 = vmatpush1.xpose.msra.mxu0 0.0
    %2358 = vmatprep.subr.mxu0 0.0
    %2359 = vmatpush1.xpose.msra.mxu0 0.0
    %2360 = vmatprep.subr.mxu0 0.0
    %2361 = vmatpush1.xpose.msra.mxu0 %v2328
    %2362 = vmatprep.subr.mxu0 0.0
    %2363 = vmatpush2.xpose.msra.mxu0 0.0
    %2364 = vmatprep.subr.mxu0 0.0
    %2365 = vmatpush2.xpose.msra.mxu0 0.0
    %2366 = vmatprep.subr.mxu0 0.0
    %2367 = vmatpush2.xpose.msra.mxu0 0.0
    %2368 = vmatprep.subr.mxu0 0.0
    %2369 = vmatpush2.xpose.msra.mxu0 0.0
    %2370 = vmatprep.subr.mxu0 0.0
    %2371 = vmatpush2.xpose.msra.mxu0 0.0
    %2372 = vmatprep.subr.mxu0 0.0
    %2373 = vmatpush2.xpose.msra.mxu0 0.0
    %2374 = vmatprep.subr.mxu0 0.0
    %2375 = vmatpush2.xpose.msra.mxu0 0.0
    %2376 = vmatprep.subr.mxu0 0.0
    %2377 = vmatpush2.xpose.msra.mxu0 0.0
    %2378 = vmatprep.subr.mxu0 0.0
    %2379 = vmatpush2.xpose.msra.mxu0 0.0
    %2380 = vmatprep.subr.mxu0 0.0
    %2381 = vmatpush2.xpose.msra.mxu0 0.0
    %2382 = vmatprep.subr.mxu0 0.0
    %2383 = vmatpush2.xpose.msra.mxu0 0.0
    %2384 = vmatprep.subr.mxu0 0.0
    %2385 = vmatpush2.xpose.msra.mxu0 0.0
    %2386 = vmatprep.subr.mxu0 0.0
    %2387 = vmatpush2.xpose.msra.mxu0 0.0
    %2388 = vmatprep.subr.mxu0 0.0
    %2389 = vmatpush2.xpose.msra.mxu0 0.0
    %2390 = vmatprep.subr.mxu0 0.0
    %2391 = vmatpush2.xpose.msra.mxu0 0.0
    %2392 = vmatprep.subr.mxu0 0.0
    %2393 = vmatpush2.xpose.msra.mxu0 0.0
    %2394 = vmatprep.mubr.f32.mxu0 0.0
    %2395 = vmatmul.mubr.f32.gmra.mxu0 %v2326
    %v2396 = vpop.f32.mrf.mxu0
    %v2397 = vadd.f32 0.0, %v2396
    %v2398 = vpop.f32.mrf.mxu0
    %2399 = vdwg.mxu0
    %v2400 = vmul.f32 %v2320, 0.35355338
    %v2401 = vmul.f32 %v2397, 0.35355338
    %v2402 = vadd.f32 %v2400, %v353
    %v2403 = vadd.f32 %v2401, %v357
    %v2404 = vsel %vm194, %v2402, -inf
    %2405 = vmax.xlane.f32.xlu0 %v2404
    %v2406 = vpop.xlane.xlu0 %2405
    %v2407 = vsel %vm194, %v2403, -inf
    %2408 = vmax.xlane.f32.xlu0 %v2407
    %v2409 = vpop.xlane.xlu0 %2408
    %v2410 = vsub.f32 %v2402, %v2406
    %v2411 = vsub.f32 %v2403, %v2409
    %v2412 = vmul.f32 %v2410, 1.442695
    %v2413 = vpow.pop %v2412
    %v2414 = vmul.f32 %v2411, 1.442695
    %v2415 = vpow.pop %v2414
    %v2416 = vsel %vm194, %v2413, 0.0
    %2417 = vadd.xlane.f32.xlu0 %v2416
    %v2418 = vpop.xlane.xlu0 %2417
    %v2419 = vsel %vm194, %v2415, 0.0
    %2420 = vadd.xlane.f32.xlu0 %v2419
    %v2421 = vpop.xlane.xlu0 %2420
    %v2422 = vrcp.pop %v2418
    %v2423 = vrcp.pop %v2421
    %v2424 = vmul.f32 %v2413, %v2422
    %v2425 = vmul.f32 %v2415, %v2423
    %2426 = vrot.lane.b32.xlu0 %v2238, 64
    %v2427 = vpop.permute.xlu0 %2426
    %v2430 = vsel %vm194, %v2424, 0
    %2432 = vmatprep.subr.mxu0 0.0
    %2433 = vmatpush1.msra.mxu0 0.0
    %2434 = vmatprep.subr.mxu0 0.0
    %2435 = vmatpush1.msra.mxu0 0.0
    %2436 = vmatprep.subr.mxu0 0.0
    %2437 = vmatpush1.msra.mxu0 0.0
    %2438 = vmatprep.subr.mxu0 0.0
    %2439 = vmatpush1.msra.mxu0 0.0
    %2440 = vmatprep.subr.mxu0 0.0
    %2441 = vmatpush1.msra.mxu0 0.0
    %2442 = vmatprep.subr.mxu0 0.0
    %2443 = vmatpush1.msra.mxu0 0.0
    %2444 = vmatprep.subr.mxu0 0.0
    %2445 = vmatpush1.msra.mxu0 0.0
    %2446 = vmatprep.subr.mxu0 0.0
    %2447 = vmatpush1.msra.mxu0 0.0
    %2448 = vmatprep.subr.mxu0 0.0
    %2449 = vmatpush1.msra.mxu0 0.0
    %2450 = vmatprep.subr.mxu0 0.0
    %2451 = vmatpush1.msra.mxu0 0.0
    %2452 = vmatprep.subr.mxu0 0.0
    %2453 = vmatpush1.msra.mxu0 0.0
    %2454 = vmatprep.subr.mxu0 0.0
    %2455 = vmatpush1.msra.mxu0 0.0
    %2456 = vmatprep.subr.mxu0 0.0
    %2457 = vmatpush1.msra.mxu0 0.0
    %2458 = vmatprep.subr.mxu0 0.0
    %2459 = vmatpush1.msra.mxu0 0.0
    %2460 = vmatprep.subr.mxu0 0.0
    %2461 = vmatpush1.msra.mxu0 0.0
    %2462 = vmatprep.subr.mxu0 0.0
    %2463 = vmatpush1.msra.mxu0 %v2427
    %2464 = vmatprep.subr.mxu0 0.0
    %2465 = vmatpush2.msra.mxu0 0.0
    %2466 = vmatprep.subr.mxu0 0.0
    %2467 = vmatpush2.msra.mxu0 0.0
    %2468 = vmatprep.subr.mxu0 0.0
    %2469 = vmatpush2.msra.mxu0 0.0
    %2470 = vmatprep.subr.mxu0 0.0
    %2471 = vmatpush2.msra.mxu0 0.0
    %2472 = vmatprep.subr.mxu0 0.0
    %2473 = vmatpush2.msra.mxu0 0.0
    %2474 = vmatprep.subr.mxu0 0.0
    %2475 = vmatpush2.msra.mxu0 0.0
    %2476 = vmatprep.subr.mxu0 0.0
    %2477 = vmatpush2.msra.mxu0 0.0
    %2478 = vmatprep.subr.mxu0 0.0
    %2479 = vmatpush2.msra.mxu0 0.0
    %2480 = vmatprep.subr.mxu0 0.0
    %2481 = vmatpush2.msra.mxu0 0.0
    %2482 = vmatprep.subr.mxu0 0.0
    %2483 = vmatpush2.msra.mxu0 0.0
    %2484 = vmatprep.subr.mxu0 0.0
    %2485 = vmatpush2.msra.mxu0 0.0
    %2486 = vmatprep.subr.mxu0 0.0
    %2487 = vmatpush2.msra.mxu0 0.0
    %2488 = vmatprep.subr.mxu0 0.0
    %2489 = vmatpush2.msra.mxu0 0.0
    %2490 = vmatprep.subr.mxu0 0.0
    %2491 = vmatpush2.msra.mxu0 0.0
    %2492 = vmatprep.subr.mxu0 0.0
    %2493 = vmatpush2.msra.mxu0 0.0
    %2494 = vmatprep.subr.mxu0 0.0
    %2495 = vmatpush2.msra.mxu0 0.0
    %2496 = vmatprep.mubr.f32.mxu0 0.0
    %2497 = vmatmul.mubr.f32.gmra.mxu0 %v2430
    %v2498 = vpop.f32.mrf.mxu0
    %v2499 = vadd.f32 0.0, %v2498
    %v2500 = vpop.f32.mrf.mxu0
    %2501 = vdwg.mxu0
    %2502 = vrot.lane.b32.xlu0 %v2243, 64
    %v2503 = vpop.permute.xlu0 %2502
    %v2506 = vsel %vm194, %v2425, 0
    %2508 = vmatprep.subr.mxu0 0.0
    %2509 = vmatpush1.msra.mxu0 0.0
    %2510 = vmatprep.subr.mxu0 0.0
    %2511 = vmatpush1.msra.mxu0 0.0
    %2512 = vmatprep.subr.mxu0 0.0
    %2513 = vmatpush1.msra.mxu0 0.0
    %2514 = vmatprep.subr.mxu0 0.0
    %2515 = vmatpush1.msra.mxu0 0.0
    %2516 = vmatprep.subr.mxu0 0.0
    %2517 = vmatpush1.msra.mxu0 0.0
    %2518 = vmatprep.subr.mxu0 0.0
    %2519 = vmatpush1.msra.mxu0 0.0
    %2520 = vmatprep.subr.mxu0 0.0
    %2521 = vmatpush1.msra.mxu0 0.0
    %2522 = vmatprep.subr.mxu0 0.0
    %2523 = vmatpush1.msra.mxu0 0.0
    %2524 = vmatprep.subr.mxu0 0.0
    %2525 = vmatpush1.msra.mxu0 0.0
    %2526 = vmatprep.subr.mxu0 0.0
    %2527 = vmatpush1.msra.mxu0 0.0
    %2528 = vmatprep.subr.mxu0 0.0
    %2529 = vmatpush1.msra.mxu0 0.0
    %2530 = vmatprep.subr.mxu0 0.0
    %2531 = vmatpush1.msra.mxu0 0.0
    %2532 = vmatprep.subr.mxu0 0.0
    %2533 = vmatpush1.msra.mxu0 0.0
    %2534 = vmatprep.subr.mxu0 0.0
    %2535 = vmatpush1.msra.mxu0 0.0
    %2536 = vmatprep.subr.mxu0 0.0
    %2537 = vmatpush1.msra.mxu0 0.0
    %2538 = vmatprep.subr.mxu0 0.0
    %2539 = vmatpush1.msra.mxu0 %v2503
    %2540 = vmatprep.subr.mxu0 0.0
    %2541 = vmatpush2.msra.mxu0 0.0
    %2542 = vmatprep.subr.mxu0 0.0
    %2543 = vmatpush2.msra.mxu0 0.0
    %2544 = vmatprep.subr.mxu0 0.0
    %2545 = vmatpush2.msra.mxu0 0.0
    %2546 = vmatprep.subr.mxu0 0.0
    %2547 = vmatpush2.msra.mxu0 0.0
    %2548 = vmatprep.subr.mxu0 0.0
    %2549 = vmatpush2.msra.mxu0 0.0
    %2550 = vmatprep.subr.mxu0 0.0
    %2551 = vmatpush2.msra.mxu0 0.0
    %2552 = vmatprep.subr.mxu0 0.0
    %2553 = vmatpush2.msra.mxu0 0.0
    %2554 = vmatprep.subr.mxu0 0.0
    %2555 = vmatpush2.msra.mxu0 0.0
    %2556 = vmatprep.subr.mxu0 0.0
    %2557 = vmatpush2.msra.mxu0 0.0
    %2558 = vmatprep.subr.mxu0 0.0
    %2559 = vmatpush2.msra.mxu0 0.0
    %2560 = vmatprep.subr.mxu0 0.0
    %2561 = vmatpush2.msra.mxu0 0.0
    %2562 = vmatprep.subr.mxu0 0.0
    %2563 = vmatpush2.msra.mxu0 0.0
    %2564 = vmatprep.subr.mxu0 0.0
    %2565 = vmatpush2.msra.mxu0 0.0
    %2566 = vmatprep.subr.mxu0 0.0
    %2567 = vmatpush2.msra.mxu0 0.0
    %2568 = vmatprep.subr.mxu0 0.0
    %2569 = vmatpush2.msra.mxu0 0.0
    %2570 = vmatprep.subr.mxu0 0.0
    %2571 = vmatpush2.msra.mxu0 0.0
    %2572 = vmatprep.mubr.f32.mxu0 0.0
    %2573 = vmatmul.mubr.f32.gmra.mxu0 %v2506
    %v2574 = vpop.f32.mrf.mxu0
    %v2575 = vadd.f32 0.0, %v2574
    %v2576 = vpop.f32.mrf.mxu0
    %2577 = vdwg.mxu0
    %2578 = vrot.lane.b32.xlu0 %v2238, 120
    %v2579 = vpop.permute.xlu0 %2578
    %2580 = vrot.lane.b32.xlu0 %v2238, 88
    %v2581 = vpop.permute.xlu0 %2580
    %v2582 = vsel %vm194, %v2579, 0
    %v2584 = vsel %vm194, %v2581, 0
    %2586 = vmatprep.subr.mxu0 0.0
    %2587 = vmatpush1.xpose.msra.mxu0 0.0
    %2588 = vmatprep.subr.mxu0 0.0
    %2589 = vmatpush1.xpose.msra.mxu0 0.0
    %2590 = vmatprep.subr.mxu0 0.0
    %2591 = vmatpush1.xpose.msra.mxu0 0.0
    %2592 = vmatprep.subr.mxu0 0.0
    %2593 = vmatpush1.xpose.msra.mxu0 0.0
    %2594 = vmatprep.subr.mxu0 0.0
    %2595 = vmatpush1.xpose.msra.mxu0 0.0
    %2596 = vmatprep.subr.mxu0 0.0
    %2597 = vmatpush1.xpose.msra.mxu0 0.0
    %2598 = vmatprep.subr.mxu0 0.0
    %2599 = vmatpush1.xpose.msra.mxu0 0.0
    %2600 = vmatprep.subr.mxu0 0.0
    %2601 = vmatpush1.xpose.msra.mxu0 0.0
    %2602 = vmatprep.subr.mxu0 0.0
    %2603 = vmatpush1.xpose.msra.mxu0 0.0
    %2604 = vmatprep.subr.mxu0 0.0
    %2605 = vmatpush1.xpose.msra.mxu0 0.0
    %2606 = vmatprep.subr.mxu0 0.0
    %2607 = vmatpush1.xpose.msra.mxu0 0.0
    %2608 = vmatprep.subr.mxu0 0.0
    %2609 = vmatpush1.xpose.msra.mxu0 0.0
    %2610 = vmatprep.subr.mxu0 0.0
    %2611 = vmatpush1.xpose.msra.mxu0 0.0
    %2612 = vmatprep.subr.mxu0 0.0
    %2613 = vmatpush1.xpose.msra.mxu0 0.0
    %2614 = vmatprep.subr.mxu0 0.0
    %2615 = vmatpush1.xpose.msra.mxu0 0.0
    %2616 = vmatprep.subr.mxu0 0.0
    %2617 = vmatpush1.xpose.msra.mxu0 %v2584
    %2618 = vmatprep.subr.mxu0 0.0
    %2619 = vmatpush2.xpose.msra.mxu0 0.0
    %2620 = vmatprep.subr.mxu0 0.0
    %2621 = vmatpush2.xpose.msra.mxu0 0.0
    %2622 = vmatprep.subr.mxu0 0.0
    %2623 = vmatpush2.xpose.msra.mxu0 0.0
    %2624 = vmatprep.subr.mxu0 0.0
    %2625 = vmatpush2.xpose.msra.mxu0 0.0
    %2626 = vmatprep.subr.mxu0 0.0
    %2627 = vmatpush2.xpose.msra.mxu0 0.0
    %2628 = vmatprep.subr.mxu0 0.0
    %2629 = vmatpush2.xpose.msra.mxu0 0.0
    %2630 = vmatprep.subr.mxu0 0.0
    %2631 = vmatpush2.xpose.msra.mxu0 0.0
    %2632 = vmatprep.subr.mxu0 0.0
    %2633 = vmatpush2.xpose.msra.mxu0 0.0
    %2634 = vmatprep.subr.mxu0 0.0
    %2635 = vmatpush2.xpose.msra.mxu0 0.0
    %2636 = vmatprep.subr.mxu0 0.0
    %2637 = vmatpush2.xpose.msra.mxu0 0.0
    %2638 = vmatprep.subr.mxu0 0.0
    %2639 = vmatpush2.xpose.msra.mxu0 0.0
    %2640 = vmatprep.subr.mxu0 0.0
    %2641 = vmatpush2.xpose.msra.mxu0 0.0
    %2642 = vmatprep.subr.mxu0 0.0
    %2643 = vmatpush2.xpose.msra.mxu0 0.0
    %2644 = vmatprep.subr.mxu0 0.0
    %2645 = vmatpush2.xpose.msra.mxu0 0.0
    %2646 = vmatprep.subr.mxu0 0.0
    %2647 = vmatpush2.xpose.msra.mxu0 0.0
    %2648 = vmatprep.subr.mxu0 0.0
    %2649 = vmatpush2.xpose.msra.mxu0 0.0
    %2650 = vmatprep.mubr.f32.mxu0 0.0
    %2651 = vmatmul.mubr.f32.gmra.mxu0 %v2582
    %v2652 = vpop.f32.mrf.mxu0
    %v2653 = vadd.f32 0.0, %v2652
    %v2654 = vpop.f32.mrf.mxu0
    %2655 = vdwg.mxu0
    %2656 = vrot.lane.b32.xlu0 %v2243, 120
    %v2657 = vpop.permute.xlu0 %2656
    %2658 = vrot.lane.b32.xlu0 %v2243, 88
    %v2659 = vpop.permute.xlu0 %2658
    %v2660 = vsel %vm194, %v2657, 0
    %v2662 = vsel %vm194, %v2659, 0
    %2664 = vmatprep.subr.mxu0 0.0
    %2665 = vmatpush1.xpose.msra.mxu0 0.0
    %2666 = vmatprep.subr.mxu0 0.0
    %2667 = vmatpush1.xpose.msra.mxu0 0.0
    %2668 = vmatprep.subr.mxu0 0.0
    %2669 = vmatpush1.xpose.msra.mxu0 0.0
    %2670 = vmatprep.subr.mxu0 0.0
    %2671 = vmatpush1.xpose.msra.mxu0 0.0
    %2672 = vmatprep.subr.mxu0 0.0
    %2673 = vmatpush1.xpose.msra.mxu0 0.0
    %2674 = vmatprep.subr.mxu0 0.0
    %2675 = vmatpush1.xpose.msra.mxu0 0.0
    %2676 = vmatprep.subr.mxu0 0.0
    %2677 = vmatpush1.xpose.msra.mxu0 0.0
    %2678 = vmatprep.subr.mxu0 0.0
    %2679 = vmatpush1.xpose.msra.mxu0 0.0
    %2680 = vmatprep.subr.mxu0 0.0
    %2681 = vmatpush1.xpose.msra.mxu0 0.0
    %2682 = vmatprep.subr.mxu0 0.0
    %2683 = vmatpush1.xpose.msra.mxu0 0.0
    %2684 = vmatprep.subr.mxu0 0.0
    %2685 = vmatpush1.xpose.msra.mxu0 0.0
    %2686 = vmatprep.subr.mxu0 0.0
    %2687 = vmatpush1.xpose.msra.mxu0 0.0
    %2688 = vmatprep.subr.mxu0 0.0
    %2689 = vmatpush1.xpose.msra.mxu0 0.0
    %2690 = vmatprep.subr.mxu0 0.0
    %2691 = vmatpush1.xpose.msra.mxu0 0.0
    %2692 = vmatprep.subr.mxu0 0.0
    %2693 = vmatpush1.xpose.msra.mxu0 0.0
    %2694 = vmatprep.subr.mxu0 0.0
    %2695 = vmatpush1.xpose.msra.mxu0 %v2662
    %2696 = vmatprep.subr.mxu0 0.0
    %2697 = vmatpush2.xpose.msra.mxu0 0.0
    %2698 = vmatprep.subr.mxu0 0.0
    %2699 = vmatpush2.xpose.msra.mxu0 0.0
    %2700 = vmatprep.subr.mxu0 0.0
    %2701 = vmatpush2.xpose.msra.mxu0 0.0
    %2702 = vmatprep.subr.mxu0 0.0
    %2703 = vmatpush2.xpose.msra.mxu0 0.0
    %2704 = vmatprep.subr.mxu0 0.0
    %2705 = vmatpush2.xpose.msra.mxu0 0.0
    %2706 = vmatprep.subr.mxu0 0.0
    %2707 = vmatpush2.xpose.msra.mxu0 0.0
    %2708 = vmatprep.subr.mxu0 0.0
    %2709 = vmatpush2.xpose.msra.mxu0 0.0
    %2710 = vmatprep.subr.mxu0 0.0
    %2711 = vmatpush2.xpose.msra.mxu0 0.0
    %2712 = vmatprep.subr.mxu0 0.0
    %2713 = vmatpush2.xpose.msra.mxu0 0.0
    %2714 = vmatprep.subr.mxu0 0.0
    %2715 = vmatpush2.xpose.msra.mxu0 0.0
    %2716 = vmatprep.subr.mxu0 0.0
    %2717 = vmatpush2.xpose.msra.mxu0 0.0
    %2718 = vmatprep.subr.mxu0 0.0
    %2719 = vmatpush2.xpose.msra.mxu0 0.0
    %2720 = vmatprep.subr.mxu0 0.0
    %2721 = vmatpush2.xpose.msra.mxu0 0.0
    %2722 = vmatprep.subr.mxu0 0.0
    %2723 = vmatpush2.xpose.msra.mxu0 0.0
    %2724 = vmatprep.subr.mxu0 0.0
    %2725 = vmatpush2.xpose.msra.mxu0 0.0
    %2726 = vmatprep.subr.mxu0 0.0
    %2727 = vmatpush2.xpose.msra.mxu0 0.0
    %2728 = vmatprep.mubr.f32.mxu0 0.0
    %2729 = vmatmul.mubr.f32.gmra.mxu0 %v2660
    %v2730 = vpop.f32.mrf.mxu0
    %v2731 = vadd.f32 0.0, %v2730
    %v2732 = vpop.f32.mrf.mxu0
    %2733 = vdwg.mxu0
    %v2734 = vmul.f32 %v2653, 0.35355338
    %v2735 = vmul.f32 %v2731, 0.35355338
    %v2736 = vadd.f32 %v2734, %v353
    %v2737 = vadd.f32 %v2735, %v357
    %v2738 = vsel %vm194, %v2736, -inf
    %2739 = vmax.xlane.f32.xlu0 %v2738
    %v2740 = vpop.xlane.xlu0 %2739
    %v2741 = vsel %vm194, %v2737, -inf
    %2742 = vmax.xlane.f32.xlu0 %v2741
    %v2743 = vpop.xlane.xlu0 %2742
    %v2744 = vsub.f32 %v2736, %v2740
    %v2745 = vsub.f32 %v2737, %v2743
    %v2746 = vmul.f32 %v2744, 1.442695
    %v2747 = vpow.pop %v2746
    %v2748 = vmul.f32 %v2745, 1.442695
    %v2749 = vpow.pop %v2748
    %v2750 = vsel %vm194, %v2747, 0.0
    %2751 = vadd.xlane.f32.xlu0 %v2750
    %v2752 = vpop.xlane.xlu0 %2751
    %v2753 = vsel %vm194, %v2749, 0.0
    %2754 = vadd.xlane.f32.xlu0 %v2753
    %v2755 = vpop.xlane.xlu0 %2754
    %v2756 = vrcp.pop %v2752
    %v2757 = vrcp.pop %v2755
    %v2758 = vmul.f32 %v2747, %v2756
    %v2759 = vmul.f32 %v2749, %v2757
    %2760 = vrot.lane.b32.xlu0 %v2238, 56
    %v2761 = vpop.permute.xlu0 %2760
    %v2764 = vsel %vm194, %v2758, 0
    %2766 = vmatprep.subr.mxu0 0.0
    %2767 = vmatpush1.msra.mxu0 0.0
    %2768 = vmatprep.subr.mxu0 0.0
    %2769 = vmatpush1.msra.mxu0 0.0
    %2770 = vmatprep.subr.mxu0 0.0
    %2771 = vmatpush1.msra.mxu0 0.0
    %2772 = vmatprep.subr.mxu0 0.0
    %2773 = vmatpush1.msra.mxu0 0.0
    %2774 = vmatprep.subr.mxu0 0.0
    %2775 = vmatpush1.msra.mxu0 0.0
    %2776 = vmatprep.subr.mxu0 0.0
    %2777 = vmatpush1.msra.mxu0 0.0
    %2778 = vmatprep.subr.mxu0 0.0
    %2779 = vmatpush1.msra.mxu0 0.0
    %2780 = vmatprep.subr.mxu0 0.0
    %2781 = vmatpush1.msra.mxu0 0.0
    %2782 = vmatprep.subr.mxu0 0.0
    %2783 = vmatpush1.msra.mxu0 0.0
    %2784 = vmatprep.subr.mxu0 0.0
    %2785 = vmatpush1.msra.mxu0 0.0
    %2786 = vmatprep.subr.mxu0 0.0
    %2787 = vmatpush1.msra.mxu0 0.0
    %2788 = vmatprep.subr.mxu0 0.0
    %2789 = vmatpush1.msra.mxu0 0.0
    %2790 = vmatprep.subr.mxu0 0.0
    %2791 = vmatpush1.msra.mxu0 0.0
    %2792 = vmatprep.subr.mxu0 0.0
    %2793 = vmatpush1.msra.mxu0 0.0
    %2794 = vmatprep.subr.mxu0 0.0
    %2795 = vmatpush1.msra.mxu0 0.0
    %2796 = vmatprep.subr.mxu0 0.0
    %2797 = vmatpush1.msra.mxu0 %v2761
    %2798 = vmatprep.subr.mxu0 0.0
    %2799 = vmatpush2.msra.mxu0 0.0
    %2800 = vmatprep.subr.mxu0 0.0
    %2801 = vmatpush2.msra.mxu0 0.0
    %2802 = vmatprep.subr.mxu0 0.0
    %2803 = vmatpush2.msra.mxu0 0.0
    %2804 = vmatprep.subr.mxu0 0.0
    %2805 = vmatpush2.msra.mxu0 0.0
    %2806 = vmatprep.subr.mxu0 0.0
    %2807 = vmatpush2.msra.mxu0 0.0
    %2808 = vmatprep.subr.mxu0 0.0
    %2809 = vmatpush2.msra.mxu0 0.0
    %2810 = vmatprep.subr.mxu0 0.0
    %2811 = vmatpush2.msra.mxu0 0.0
    %2812 = vmatprep.subr.mxu0 0.0
    %2813 = vmatpush2.msra.mxu0 0.0
    %2814 = vmatprep.subr.mxu0 0.0
    %2815 = vmatpush2.msra.mxu0 0.0
    %2816 = vmatprep.subr.mxu0 0.0
    %2817 = vmatpush2.msra.mxu0 0.0
    %2818 = vmatprep.subr.mxu0 0.0
    %2819 = vmatpush2.msra.mxu0 0.0
    %2820 = vmatprep.subr.mxu0 0.0
    %2821 = vmatpush2.msra.mxu0 0.0
    %2822 = vmatprep.subr.mxu0 0.0
    %2823 = vmatpush2.msra.mxu0 0.0
    %2824 = vmatprep.subr.mxu0 0.0
    %2825 = vmatpush2.msra.mxu0 0.0
    %2826 = vmatprep.subr.mxu0 0.0
    %2827 = vmatpush2.msra.mxu0 0.0
    %2828 = vmatprep.subr.mxu0 0.0
    %2829 = vmatpush2.msra.mxu0 0.0
    %2830 = vmatprep.mubr.f32.mxu0 0.0
    %2831 = vmatmul.mubr.f32.gmra.mxu0 %v2764
    %v2832 = vpop.f32.mrf.mxu0
    %v2833 = vadd.f32 0.0, %v2832
    %v2834 = vpop.f32.mrf.mxu0
    %2835 = vdwg.mxu0
    %2836 = vrot.lane.b32.xlu0 %v2243, 56
    %v2837 = vpop.permute.xlu0 %2836
    %v2840 = vsel %vm194, %v2759, 0
    %2842 = vmatprep.subr.mxu0 0.0
    %2843 = vmatpush1.msra.mxu0 0.0
    %2844 = vmatprep.subr.mxu0 0.0
    %2845 = vmatpush1.msra.mxu0 0.0
    %2846 = vmatprep.subr.mxu0 0.0
    %2847 = vmatpush1.msra.mxu0 0.0
    %2848 = vmatprep.subr.mxu0 0.0
    %2849 = vmatpush1.msra.mxu0 0.0
    %2850 = vmatprep.subr.mxu0 0.0
    %2851 = vmatpush1.msra.mxu0 0.0
    %2852 = vmatprep.subr.mxu0 0.0
    %2853 = vmatpush1.msra.mxu0 0.0
    %2854 = vmatprep.subr.mxu0 0.0
    %2855 = vmatpush1.msra.mxu0 0.0
    %2856 = vmatprep.subr.mxu0 0.0
    %2857 = vmatpush1.msra.mxu0 0.0
    %2858 = vmatprep.subr.mxu0 0.0
    %2859 = vmatpush1.msra.mxu0 0.0
    %2860 = vmatprep.subr.mxu0 0.0
    %2861 = vmatpush1.msra.mxu0 0.0
    %2862 = vmatprep.subr.mxu0 0.0
    %2863 = vmatpush1.msra.mxu0 0.0
    %2864 = vmatprep.subr.mxu0 0.0
    %2865 = vmatpush1.msra.mxu0 0.0
    %2866 = vmatprep.subr.mxu0 0.0
    %2867 = vmatpush1.msra.mxu0 0.0
    %2868 = vmatprep.subr.mxu0 0.0
    %2869 = vmatpush1.msra.mxu0 0.0
    %2870 = vmatprep.subr.mxu0 0.0
    %2871 = vmatpush1.msra.mxu0 0.0
    %2872 = vmatprep.subr.mxu0 0.0
    %2873 = vmatpush1.msra.mxu0 %v2837
    %2874 = vmatprep.subr.mxu0 0.0
    %2875 = vmatpush2.msra.mxu0 0.0
    %2876 = vmatprep.subr.mxu0 0.0
    %2877 = vmatpush2.msra.mxu0 0.0
    %2878 = vmatprep.subr.mxu0 0.0
    %2879 = vmatpush2.msra.mxu0 0.0
    %2880 = vmatprep.subr.mxu0 0.0
    %2881 = vmatpush2.msra.mxu0 0.0
    %2882 = vmatprep.subr.mxu0 0.0
    %2883 = vmatpush2.msra.mxu0 0.0
    %2884 = vmatprep.subr.mxu0 0.0
    %2885 = vmatpush2.msra.mxu0 0.0
    %2886 = vmatprep.subr.mxu0 0.0
    %2887 = vmatpush2.msra.mxu0 0.0
    %2888 = vmatprep.subr.mxu0 0.0
    %2889 = vmatpush2.msra.mxu0 0.0
    %2890 = vmatprep.subr.mxu0 0.0
    %2891 = vmatpush2.msra.mxu0 0.0
    %2892 = vmatprep.subr.mxu0 0.0
    %2893 = vmatpush2.msra.mxu0 0.0
    %2894 = vmatprep.subr.mxu0 0.0
    %2895 = vmatpush2.msra.mxu0 0.0
    %2896 = vmatprep.subr.mxu0 0.0
    %2897 = vmatpush2.msra.mxu0 0.0
    %2898 = vmatprep.subr.mxu0 0.0
    %2899 = vmatpush2.msra.mxu0 0.0
    %2900 = vmatprep.subr.mxu0 0.0
    %2901 = vmatpush2.msra.mxu0 0.0
    %2902 = vmatprep.subr.mxu0 0.0
    %2903 = vmatpush2.msra.mxu0 0.0
    %2904 = vmatprep.subr.mxu0 0.0
    %2905 = vmatpush2.msra.mxu0 0.0
    %2906 = vmatprep.mubr.f32.mxu0 0.0
    %2907 = vmatmul.mubr.f32.gmra.mxu0 %v2840
    %v2908 = vpop.f32.mrf.mxu0
    %v2909 = vadd.f32 0.0, %v2908
    %v2910 = vpop.f32.mrf.mxu0
    %2911 = vdwg.mxu0
    %v2913 = vsel %vm194, %v2833, 0
    %v2916 = vsel %vm194, %v2909, 0
    %2918 = vmatprep.subr.mxu0 0.0
    %2919 = vmatpush1.msra.mxu0 0.0
    %2920 = vmatprep.subr.mxu0 0.0
    %2921 = vmatpush1.msra.mxu0 0.0
    %2922 = vmatprep.subr.mxu0 0.0
    %2923 = vmatpush1.msra.mxu0 0.0
    %2924 = vmatprep.subr.mxu0 0.0
    %2925 = vmatpush1.msra.mxu0 0.0
    %2926 = vmatprep.subr.mxu0 0.0
    %2927 = vmatpush1.msra.mxu0 0.0
    %2928 = vmatprep.subr.mxu0 0.0
    %2929 = vmatpush1.msra.mxu0 0.0
    %2930 = vmatprep.subr.mxu0 0.0
    %2931 = vmatpush1.msra.mxu0 0.0
    %2932 = vmatprep.subr.mxu0 0.0
    %2933 = vmatpush1.msra.mxu0 0.0
    %2934 = vmatprep.subr.mxu0 0.0
    %2935 = vmatpush1.msra.mxu0 0.0
    %2936 = vmatprep.subr.mxu0 0.0
    %2937 = vmatpush1.msra.mxu0 0.0
    %2938 = vmatprep.subr.mxu0 0.0
    %2939 = vmatpush1.msra.mxu0 0.0
    %2940 = vmatprep.subr.mxu0 0.0
    %2941 = vmatpush1.msra.mxu0 0.0
    %2942 = vmatprep.subr.mxu0 0.0
    %2943 = vmatpush1.msra.mxu0 0.0
    %2944 = vmatprep.subr.mxu0 0.0
    %2945 = vmatpush1.msra.mxu0 0.0
    %2946 = vmatprep.subr.mxu0 0.0
    %2947 = vmatpush1.msra.mxu0 0.0
    %2948 = vmatprep.subr.mxu0 0.0
    %2949 = vmatpush1.msra.mxu0 %v2100
    %2950 = vmatprep.subr.mxu0 0.0
    %2951 = vmatpush2.msra.mxu0 0.0
    %2952 = vmatprep.subr.mxu0 0.0
    %2953 = vmatpush2.msra.mxu0 0.0
    %2954 = vmatprep.subr.mxu0 0.0
    %2955 = vmatpush2.msra.mxu0 0.0
    %2956 = vmatprep.subr.mxu0 0.0
    %2957 = vmatpush2.msra.mxu0 0.0
    %2958 = vmatprep.subr.mxu0 0.0
    %2959 = vmatpush2.msra.mxu0 0.0
    %2960 = vmatprep.subr.mxu0 0.0
    %2961 = vmatpush2.msra.mxu0 0.0
    %2962 = vmatprep.subr.mxu0 0.0
    %2963 = vmatpush2.msra.mxu0 0.0
    %2964 = vmatprep.subr.mxu0 0.0
    %2965 = vmatpush2.msra.mxu0 0.0
    %2966 = vmatprep.subr.mxu0 0.0
    %2967 = vmatpush2.msra.mxu0 0.0
    %2968 = vmatprep.subr.mxu0 0.0
    %2969 = vmatpush2.msra.mxu0 0.0
    %2970 = vmatprep.subr.mxu0 0.0
    %2971 = vmatpush2.msra.mxu0 0.0
    %2972 = vmatprep.subr.mxu0 0.0
    %2973 = vmatpush2.msra.mxu0 0.0
    %2974 = vmatprep.subr.mxu0 0.0
    %2975 = vmatpush2.msra.mxu0 0.0
    %2976 = vmatprep.subr.mxu0 0.0
    %2977 = vmatpush2.msra.mxu0 0.0
    %2978 = vmatprep.subr.mxu0 0.0
    %2979 = vmatpush2.msra.mxu0 0.0
    %2980 = vmatprep.subr.mxu0 0.0
    %2981 = vmatpush2.msra.mxu0 0.0
    %2982 = vmatprep.mubr.f32.mxu0 0.0
    %2983 = vmatmul.mubr.f32.gmra.mxu0 %v2913
    %v2984 = vpop.f32.mrf.mxu0
    %v2985 = vadd.f32 0.0, %v2984
    %v2986 = vpop.f32.mrf.mxu0
    %2987 = vmatprep.mubr.f32.mxu0 0.0
    %2988 = vmatmul.mubr.f32.gmra.mxu0 %v2916
    %v2989 = vpop.f32.mrf.mxu0
    %v2990 = vadd.f32 0.0, %v2989
    %v2991 = vpop.f32.mrf.mxu0
    %2992 = vdwg.mxu0
    %v2994 = vsel %vm194, %v2499, 0
    %v2997 = vsel %vm194, %v2575, 0
    %2999 = vmatprep.subr.mxu0 0.0
    %3000 = vmatpush1.msra.mxu0 0.0
    %3001 = vmatprep.subr.mxu0 0.0
    %3002 = vmatpush1.msra.mxu0 0.0
    %3003 = vmatprep.subr.mxu0 0.0
    %3004 = vmatpush1.msra.mxu0 0.0
    %3005 = vmatprep.subr.mxu0 0.0
    %3006 = vmatpush1.msra.mxu0 0.0
    %3007 = vmatprep.subr.mxu0 0.0
    %3008 = vmatpush1.msra.mxu0 0.0
    %3009 = vmatprep.subr.mxu0 0.0
    %3010 = vmatpush1.msra.mxu0 0.0
    %3011 = vmatprep.subr.mxu0 0.0
    %3012 = vmatpush1.msra.mxu0 0.0
    %3013 = vmatprep.subr.mxu0 0.0
    %3014 = vmatpush1.msra.mxu0 0.0
    %3015 = vmatprep.subr.mxu0 0.0
    %3016 = vmatpush1.msra.mxu0 0.0
    %3017 = vmatprep.subr.mxu0 0.0
    %3018 = vmatpush1.msra.mxu0 0.0
    %3019 = vmatprep.subr.mxu0 0.0
    %3020 = vmatpush1.msra.mxu0 0.0
    %3021 = vmatprep.subr.mxu0 0.0
    %3022 = vmatpush1.msra.mxu0 0.0
    %3023 = vmatprep.subr.mxu0 0.0
    %3024 = vmatpush1.msra.mxu0 0.0
    %3025 = vmatprep.subr.mxu0 0.0
    %3026 = vmatpush1.msra.mxu0 0.0
    %3027 = vmatprep.subr.mxu0 0.0
    %3028 = vmatpush1.msra.mxu0 0.0
    %3029 = vmatprep.subr.mxu0 0.0
    %3030 = vmatpush1.msra.mxu0 %v2099
    %3031 = vmatprep.subr.mxu0 0.0
    %3032 = vmatpush2.msra.mxu0 0.0
    %3033 = vmatprep.subr.mxu0 0.0
    %3034 = vmatpush2.msra.mxu0 0.0
    %3035 = vmatprep.subr.mxu0 0.0
    %3036 = vmatpush2.msra.mxu0 0.0
    %3037 = vmatprep.subr.mxu0 0.0
    %3038 = vmatpush2.msra.mxu0 0.0
    %3039 = vmatprep.subr.mxu0 0.0
    %3040 = vmatpush2.msra.mxu0 0.0
    %3041 = vmatprep.subr.mxu0 0.0
    %3042 = vmatpush2.msra.mxu0 0.0
    %3043 = vmatprep.subr.mxu0 0.0
    %3044 = vmatpush2.msra.mxu0 0.0
    %3045 = vmatprep.subr.mxu0 0.0
    %3046 = vmatpush2.msra.mxu0 0.0
    %3047 = vmatprep.subr.mxu0 0.0
    %3048 = vmatpush2.msra.mxu0 0.0
    %3049 = vmatprep.subr.mxu0 0.0
    %3050 = vmatpush2.msra.mxu0 0.0
    %3051 = vmatprep.subr.mxu0 0.0
    %3052 = vmatpush2.msra.mxu0 0.0
    %3053 = vmatprep.subr.mxu0 0.0
    %3054 = vmatpush2.msra.mxu0 0.0
    %3055 = vmatprep.subr.mxu0 0.0
    %3056 = vmatpush2.msra.mxu0 0.0
    %3057 = vmatprep.subr.mxu0 0.0
    %3058 = vmatpush2.msra.mxu0 0.0
    %3059 = vmatprep.subr.mxu0 0.0
    %3060 = vmatpush2.msra.mxu0 0.0
    %3061 = vmatprep.subr.mxu0 0.0
    %3062 = vmatpush2.msra.mxu0 0.0
    %3063 = vmatprep.mubr.f32.mxu0 0.0
    %3064 = vmatmul.mubr.f32.gmra.mxu0 %v2994
    %v3065 = vpop.f32.mrf.mxu0
    %v3066 = vadd.f32 %v2985, %v3065
    %v3067 = vpop.f32.mrf.mxu0
    %3068 = vmatprep.mubr.f32.mxu0 0.0
    %3069 = vmatmul.mubr.f32.gmra.mxu0 %v2997
    %v3070 = vpop.f32.mrf.mxu0
    %v3071 = vadd.f32 %v2990, %v3070
    %v3072 = vpop.f32.mrf.mxu0
    %3073 = vdwg.mxu0
    %3074 = vrot.lane.b32.xlu0 %v2238, 112
    %v3075 = vpop.permute.xlu0 %3074
    %3076 = vrot.lane.b32.xlu0 %v2238, 80
    %v3077 = vpop.permute.xlu0 %3076
    %v3078 = vsel %vm194, %v3075, 0
    %v3080 = vsel %vm194, %v3077, 0
    %3082 = vmatprep.subr.mxu0 0.0
    %3083 = vmatpush1.xpose.msra.mxu0 0.0
    %3084 = vmatprep.subr.mxu0 0.0
    %3085 = vmatpush1.xpose.msra.mxu0 0.0
    %3086 = vmatprep.subr.mxu0 0.0
    %3087 = vmatpush1.xpose.msra.mxu0 0.0
    %3088 = vmatprep.subr.mxu0 0.0
    %3089 = vmatpush1.xpose.msra.mxu0 0.0
    %3090 = vmatprep.subr.mxu0 0.0
    %3091 = vmatpush1.xpose.msra.mxu0 0.0
    %3092 = vmatprep.subr.mxu0 0.0
    %3093 = vmatpush1.xpose.msra.mxu0 0.0
    %3094 = vmatprep.subr.mxu0 0.0
    %3095 = vmatpush1.xpose.msra.mxu0 0.0
    %3096 = vmatprep.subr.mxu0 0.0
    %3097 = vmatpush1.xpose.msra.mxu0 0.0
    %3098 = vmatprep.subr.mxu0 0.0
    %3099 = vmatpush1.xpose.msra.mxu0 0.0
    %3100 = vmatprep.subr.mxu0 0.0
    %3101 = vmatpush1.xpose.msra.mxu0 0.0
    %3102 = vmatprep.subr.mxu0 0.0
    %3103 = vmatpush1.xpose.msra.mxu0 0.0
    %3104 = vmatprep.subr.mxu0 0.0
    %3105 = vmatpush1.xpose.msra.mxu0 0.0
    %3106 = vmatprep.subr.mxu0 0.0
    %3107 = vmatpush1.xpose.msra.mxu0 0.0
    %3108 = vmatprep.subr.mxu0 0.0
    %3109 = vmatpush1.xpose.msra.mxu0 0.0
    %3110 = vmatprep.subr.mxu0 0.0
    %3111 = vmatpush1.xpose.msra.mxu0 0.0
    %3112 = vmatprep.subr.mxu0 0.0
    %3113 = vmatpush1.xpose.msra.mxu0 %v3080
    %3114 = vmatprep.subr.mxu0 0.0
    %3115 = vmatpush2.xpose.msra.mxu0 0.0
    %3116 = vmatprep.subr.mxu0 0.0
    %3117 = vmatpush2.xpose.msra.mxu0 0.0
    %3118 = vmatprep.subr.mxu0 0.0
    %3119 = vmatpush2.xpose.msra.mxu0 0.0
    %3120 = vmatprep.subr.mxu0 0.0
    %3121 = vmatpush2.xpose.msra.mxu0 0.0
    %3122 = vmatprep.subr.mxu0 0.0
    %3123 = vmatpush2.xpose.msra.mxu0 0.0
    %3124 = vmatprep.subr.mxu0 0.0
    %3125 = vmatpush2.xpose.msra.mxu0 0.0
    %3126 = vmatprep.subr.mxu0 0.0
    %3127 = vmatpush2.xpose.msra.mxu0 0.0
    %3128 = vmatprep.subr.mxu0 0.0
    %3129 = vmatpush2.xpose.msra.mxu0 0.0
    %3130 = vmatprep.subr.mxu0 0.0
    %3131 = vmatpush2.xpose.msra.mxu0 0.0
    %3132 = vmatprep.subr.mxu0 0.0
    %3133 = vmatpush2.xpose.msra.mxu0 0.0
    %3134 = vmatprep.subr.mxu0 0.0
    %3135 = vmatpush2.xpose.msra.mxu0 0.0
    %3136 = vmatprep.subr.mxu0 0.0
    %3137 = vmatpush2.xpose.msra.mxu0 0.0
    %3138 = vmatprep.subr.mxu0 0.0
    %3139 = vmatpush2.xpose.msra.mxu0 0.0
    %3140 = vmatprep.subr.mxu0 0.0
    %3141 = vmatpush2.xpose.msra.mxu0 0.0
    %3142 = vmatprep.subr.mxu0 0.0
    %3143 = vmatpush2.xpose.msra.mxu0 0.0
    %3144 = vmatprep.subr.mxu0 0.0
    %3145 = vmatpush2.xpose.msra.mxu0 0.0
    %3146 = vmatprep.mubr.f32.mxu0 0.0
    %3147 = vmatmul.mubr.f32.gmra.mxu0 %v3078
    %v3148 = vpop.f32.mrf.mxu0
    %v3149 = vadd.f32 0.0, %v3148
    %v3150 = vpop.f32.mrf.mxu0
    %3151 = vdwg.mxu0
    %3152 = vrot.lane.b32.xlu0 %v2243, 112
    %v3153 = vpop.permute.xlu0 %3152
    %3154 = vrot.lane.b32.xlu0 %v2243, 80
    %v3155 = vpop.permute.xlu0 %3154
    %v3156 = vsel %vm194, %v3153, 0
    %v3158 = vsel %vm194, %v3155, 0
    %3160 = vmatprep.subr.mxu0 0.0
    %3161 = vmatpush1.xpose.msra.mxu0 0.0
    %3162 = vmatprep.subr.mxu0 0.0
    %3163 = vmatpush1.xpose.msra.mxu0 0.0
    %3164 = vmatprep.subr.mxu0 0.0
    %3165 = vmatpush1.xpose.msra.mxu0 0.0
    %3166 = vmatprep.subr.mxu0 0.0
    %3167 = vmatpush1.xpose.msra.mxu0 0.0
    %3168 = vmatprep.subr.mxu0 0.0
    %3169 = vmatpush1.xpose.msra.mxu0 0.0
    %3170 = vmatprep.subr.mxu0 0.0
    %3171 = vmatpush1.xpose.msra.mxu0 0.0
    %3172 = vmatprep.subr.mxu0 0.0
    %3173 = vmatpush1.xpose.msra.mxu0 0.0
    %3174 = vmatprep.subr.mxu0 0.0
    %3175 = vmatpush1.xpose.msra.mxu0 0.0
    %3176 = vmatprep.subr.mxu0 0.0
    %3177 = vmatpush1.xpose.msra.mxu0 0.0
    %3178 = vmatprep.subr.mxu0 0.0
    %3179 = vmatpush1.xpose.msra.mxu0 0.0
    %3180 = vmatprep.subr.mxu0 0.0
    %3181 = vmatpush1.xpose.msra.mxu0 0.0
    %3182 = vmatprep.subr.mxu0 0.0
    %3183 = vmatpush1.xpose.msra.mxu0 0.0
    %3184 = vmatprep.subr.mxu0 0.0
    %3185 = vmatpush1.xpose.msra.mxu0 0.0
    %3186 = vmatprep.subr.mxu0 0.0
    %3187 = vmatpush1.xpose.msra.mxu0 0.0
    %3188 = vmatprep.subr.mxu0 0.0
    %3189 = vmatpush1.xpose.msra.mxu0 0.0
    %3190 = vmatprep.subr.mxu0 0.0
    %3191 = vmatpush1.xpose.msra.mxu0 %v3158
    %3192 = vmatprep.subr.mxu0 0.0
    %3193 = vmatpush2.xpose.msra.mxu0 0.0
    %3194 = vmatprep.subr.mxu0 0.0
    %3195 = vmatpush2.xpose.msra.mxu0 0.0
    %3196 = vmatprep.subr.mxu0 0.0
    %3197 = vmatpush2.xpose.msra.mxu0 0.0
    %3198 = vmatprep.subr.mxu0 0.0
    %3199 = vmatpush2.xpose.msra.mxu0 0.0
    %3200 = vmatprep.subr.mxu0 0.0
    %3201 = vmatpush2.xpose.msra.mxu0 0.0
    %3202 = vmatprep.subr.mxu0 0.0
    %3203 = vmatpush2.xpose.msra.mxu0 0.0
    %3204 = vmatprep.subr.mxu0 0.0
    %3205 = vmatpush2.xpose.msra.mxu0 0.0
    %3206 = vmatprep.subr.mxu0 0.0
    %3207 = vmatpush2.xpose.msra.mxu0 0.0
    %3208 = vmatprep.subr.mxu0 0.0
    %3209 = vmatpush2.xpose.msra.mxu0 0.0
    %3210 = vmatprep.subr.mxu0 0.0
    %3211 = vmatpush2.xpose.msra.mxu0 0.0
    %3212 = vmatprep.subr.mxu0 0.0
    %3213 = vmatpush2.xpose.msra.mxu0 0.0
    %3214 = vmatprep.subr.mxu0 0.0
    %3215 = vmatpush2.xpose.msra.mxu0 0.0
    %3216 = vmatprep.subr.mxu0 0.0
    %3217 = vmatpush2.xpose.msra.mxu0 0.0
    %3218 = vmatprep.subr.mxu0 0.0
    %3219 = vmatpush2.xpose.msra.mxu0 0.0
    %3220 = vmatprep.subr.mxu0 0.0
    %3221 = vmatpush2.xpose.msra.mxu0 0.0
    %3222 = vmatprep.subr.mxu0 0.0
    %3223 = vmatpush2.xpose.msra.mxu0 0.0
    %3224 = vmatprep.mubr.f32.mxu0 0.0
    %3225 = vmatmul.mubr.f32.gmra.mxu0 %v3156
    %v3226 = vpop.f32.mrf.mxu0
    %v3227 = vadd.f32 0.0, %v3226
    %v3228 = vpop.f32.mrf.mxu0
    %3229 = vdwg.mxu0
    %v3230 = vmul.f32 %v3149, 0.35355338
    %v3231 = vmul.f32 %v3227, 0.35355338
    %v3232 = vadd.f32 %v3230, %v353
    %v3233 = vadd.f32 %v3231, %v357
    %v3234 = vsel %vm194, %v3232, -inf
    %3235 = vmax.xlane.f32.xlu0 %v3234
    %v3236 = vpop.xlane.xlu0 %3235
    %v3237 = vsel %vm194, %v3233, -inf
    %3238 = vmax.xlane.f32.xlu0 %v3237
    %v3239 = vpop.xlane.xlu0 %3238
    %v3240 = vsub.f32 %v3232, %v3236
    %v3241 = vsub.f32 %v3233, %v3239
    %v3242 = vmul.f32 %v3240, 1.442695
    %v3243 = vpow.pop %v3242
    %v3244 = vmul.f32 %v3241, 1.442695
    %v3245 = vpow.pop %v3244
    %v3246 = vsel %vm194, %v3243, 0.0
    %3247 = vadd.xlane.f32.xlu0 %v3246
    %v3248 = vpop.xlane.xlu0 %3247
    %v3249 = vsel %vm194, %v3245, 0.0
    %3250 = vadd.xlane.f32.xlu0 %v3249
    %v3251 = vpop.xlane.xlu0 %3250
    %v3252 = vrcp.pop %v3248
    %v3253 = vrcp.pop %v3251
    %v3254 = vmul.f32 %v3243, %v3252
    %v3255 = vmul.f32 %v3245, %v3253
    %3256 = vrot.lane.b32.xlu0 %v2238, 48
    %v3257 = vpop.permute.xlu0 %3256
    %v3260 = vsel %vm194, %v3254, 0
    %3262 = vmatprep.subr.mxu0 0.0
    %3263 = vmatpush1.msra.mxu0 0.0
    %3264 = vmatprep.subr.mxu0 0.0
    %3265 = vmatpush1.msra.mxu0 0.0
    %3266 = vmatprep.subr.mxu0 0.0
    %3267 = vmatpush1.msra.mxu0 0.0
    %3268 = vmatprep.subr.mxu0 0.0
    %3269 = vmatpush1.msra.mxu0 0.0
    %3270 = vmatprep.subr.mxu0 0.0
    %3271 = vmatpush1.msra.mxu0 0.0
    %3272 = vmatprep.subr.mxu0 0.0
    %3273 = vmatpush1.msra.mxu0 0.0
    %3274 = vmatprep.subr.mxu0 0.0
    %3275 = vmatpush1.msra.mxu0 0.0
    %3276 = vmatprep.subr.mxu0 0.0
    %3277 = vmatpush1.msra.mxu0 0.0
    %3278 = vmatprep.subr.mxu0 0.0
    %3279 = vmatpush1.msra.mxu0 0.0
    %3280 = vmatprep.subr.mxu0 0.0
    %3281 = vmatpush1.msra.mxu0 0.0
    %3282 = vmatprep.subr.mxu0 0.0
    %3283 = vmatpush1.msra.mxu0 0.0
    %3284 = vmatprep.subr.mxu0 0.0
    %3285 = vmatpush1.msra.mxu0 0.0
    %3286 = vmatprep.subr.mxu0 0.0
    %3287 = vmatpush1.msra.mxu0 0.0
    %3288 = vmatprep.subr.mxu0 0.0
    %3289 = vmatpush1.msra.mxu0 0.0
    %3290 = vmatprep.subr.mxu0 0.0
    %3291 = vmatpush1.msra.mxu0 0.0
    %3292 = vmatprep.subr.mxu0 0.0
    %3293 = vmatpush1.msra.mxu0 %v3257
    %3294 = vmatprep.subr.mxu0 0.0
    %3295 = vmatpush2.msra.mxu0 0.0
    %3296 = vmatprep.subr.mxu0 0.0
    %3297 = vmatpush2.msra.mxu0 0.0
    %3298 = vmatprep.subr.mxu0 0.0
    %3299 = vmatpush2.msra.mxu0 0.0
    %3300 = vmatprep.subr.mxu0 0.0
    %3301 = vmatpush2.msra.mxu0 0.0
    %3302 = vmatprep.subr.mxu0 0.0
    %3303 = vmatpush2.msra.mxu0 0.0
    %3304 = vmatprep.subr.mxu0 0.0
    %3305 = vmatpush2.msra.mxu0 0.0
    %3306 = vmatprep.subr.mxu0 0.0
    %3307 = vmatpush2.msra.mxu0 0.0
    %3308 = vmatprep.subr.mxu0 0.0
    %3309 = vmatpush2.msra.mxu0 0.0
    %3310 = vmatprep.subr.mxu0 0.0
    %3311 = vmatpush2.msra.mxu0 0.0
    %3312 = vmatprep.subr.mxu0 0.0
    %3313 = vmatpush2.msra.mxu0 0.0
    %3314 = vmatprep.subr.mxu0 0.0
    %3315 = vmatpush2.msra.mxu0 0.0
    %3316 = vmatprep.subr.mxu0 0.0
    %3317 = vmatpush2.msra.mxu0 0.0
    %3318 = vmatprep.subr.mxu0 0.0
    %3319 = vmatpush2.msra.mxu0 0.0
    %3320 = vmatprep.subr.mxu0 0.0
    %3321 = vmatpush2.msra.mxu0 0.0
    %3322 = vmatprep.subr.mxu0 0.0
    %3323 = vmatpush2.msra.mxu0 0.0
    %3324 = vmatprep.subr.mxu0 0.0
    %3325 = vmatpush2.msra.mxu0 0.0
    %3326 = vmatprep.mubr.f32.mxu0 0.0
    %3327 = vmatmul.mubr.f32.gmra.mxu0 %v3260
    %v3328 = vpop.f32.mrf.mxu0
    %v3329 = vadd.f32 0.0, %v3328
    %v3330 = vpop.f32.mrf.mxu0
    %3331 = vdwg.mxu0
    %3332 = vrot.lane.b32.xlu0 %v2243, 48
    %v3333 = vpop.permute.xlu0 %3332
    %v3336 = vsel %vm194, %v3255, 0
    %3338 = vmatprep.subr.mxu0 0.0
    %3339 = vmatpush1.msra.mxu0 0.0
    %3340 = vmatprep.subr.mxu0 0.0
    %3341 = vmatpush1.msra.mxu0 0.0
    %3342 = vmatprep.subr.mxu0 0.0
    %3343 = vmatpush1.msra.mxu0 0.0
    %3344 = vmatprep.subr.mxu0 0.0
    %3345 = vmatpush1.msra.mxu0 0.0
    %3346 = vmatprep.subr.mxu0 0.0
    %3347 = vmatpush1.msra.mxu0 0.0
    %3348 = vmatprep.subr.mxu0 0.0
    %3349 = vmatpush1.msra.mxu0 0.0
    %3350 = vmatprep.subr.mxu0 0.0
    %3351 = vmatpush1.msra.mxu0 0.0
    %3352 = vmatprep.subr.mxu0 0.0
    %3353 = vmatpush1.msra.mxu0 0.0
    %3354 = vmatprep.subr.mxu0 0.0
    %3355 = vmatpush1.msra.mxu0 0.0
    %3356 = vmatprep.subr.mxu0 0.0
    %3357 = vmatpush1.msra.mxu0 0.0
    %3358 = vmatprep.subr.mxu0 0.0
    %3359 = vmatpush1.msra.mxu0 0.0
    %3360 = vmatprep.subr.mxu0 0.0
    %3361 = vmatpush1.msra.mxu0 0.0
    %3362 = vmatprep.subr.mxu0 0.0
    %3363 = vmatpush1.msra.mxu0 0.0
    %3364 = vmatprep.subr.mxu0 0.0
    %3365 = vmatpush1.msra.mxu0 0.0
    %3366 = vmatprep.subr.mxu0 0.0
    %3367 = vmatpush1.msra.mxu0 0.0
    %3368 = vmatprep.subr.mxu0 0.0
    %3369 = vmatpush1.msra.mxu0 %v3333
    %3370 = vmatprep.subr.mxu0 0.0
    %3371 = vmatpush2.msra.mxu0 0.0
    %3372 = vmatprep.subr.mxu0 0.0
    %3373 = vmatpush2.msra.mxu0 0.0
    %3374 = vmatprep.subr.mxu0 0.0
    %3375 = vmatpush2.msra.mxu0 0.0
    %3376 = vmatprep.subr.mxu0 0.0
    %3377 = vmatpush2.msra.mxu0 0.0
    %3378 = vmatprep.subr.mxu0 0.0
    %3379 = vmatpush2.msra.mxu0 0.0
    %3380 = vmatprep.subr.mxu0 0.0
    %3381 = vmatpush2.msra.mxu0 0.0
    %3382 = vmatprep.subr.mxu0 0.0
    %3383 = vmatpush2.msra.mxu0 0.0
    %3384 = vmatprep.subr.mxu0 0.0
    %3385 = vmatpush2.msra.mxu0 0.0
    %3386 = vmatprep.subr.mxu0 0.0
    %3387 = vmatpush2.msra.mxu0 0.0
    %3388 = vmatprep.subr.mxu0 0.0
    %3389 = vmatpush2.msra.mxu0 0.0
    %3390 = vmatprep.subr.mxu0 0.0
    %3391 = vmatpush2.msra.mxu0 0.0
    %3392 = vmatprep.subr.mxu0 0.0
    %3393 = vmatpush2.msra.mxu0 0.0
    %3394 = vmatprep.subr.mxu0 0.0
    %3395 = vmatpush2.msra.mxu0 0.0
    %3396 = vmatprep.subr.mxu0 0.0
    %3397 = vmatpush2.msra.mxu0 0.0
    %3398 = vmatprep.subr.mxu0 0.0
    %3399 = vmatpush2.msra.mxu0 0.0
    %3400 = vmatprep.subr.mxu0 0.0
    %3401 = vmatpush2.msra.mxu0 0.0
    %3402 = vmatprep.mubr.f32.mxu0 0.0
    %3403 = vmatmul.mubr.f32.gmra.mxu0 %v3336
    %v3404 = vpop.f32.mrf.mxu0
    %v3405 = vadd.f32 0.0, %v3404
    %v3406 = vpop.f32.mrf.mxu0
    %3407 = vdwg.mxu0
    %v3409 = vsel %vm194, %v3329, 0
    %v3412 = vsel %vm194, %v3405, 0
    %3414 = vmatprep.subr.mxu0 0.0
    %3415 = vmatpush1.msra.mxu0 0.0
    %3416 = vmatprep.subr.mxu0 0.0
    %3417 = vmatpush1.msra.mxu0 0.0
    %3418 = vmatprep.subr.mxu0 0.0
    %3419 = vmatpush1.msra.mxu0 0.0
    %3420 = vmatprep.subr.mxu0 0.0
    %3421 = vmatpush1.msra.mxu0 0.0
    %3422 = vmatprep.subr.mxu0 0.0
    %3423 = vmatpush1.msra.mxu0 0.0
    %3424 = vmatprep.subr.mxu0 0.0
    %3425 = vmatpush1.msra.mxu0 0.0
    %3426 = vmatprep.subr.mxu0 0.0
    %3427 = vmatpush1.msra.mxu0 0.0
    %3428 = vmatprep.subr.mxu0 0.0
    %3429 = vmatpush1.msra.mxu0 0.0
    %3430 = vmatprep.subr.mxu0 0.0
    %3431 = vmatpush1.msra.mxu0 0.0
    %3432 = vmatprep.subr.mxu0 0.0
    %3433 = vmatpush1.msra.mxu0 0.0
    %3434 = vmatprep.subr.mxu0 0.0
    %3435 = vmatpush1.msra.mxu0 0.0
    %3436 = vmatprep.subr.mxu0 0.0
    %3437 = vmatpush1.msra.mxu0 0.0
    %3438 = vmatprep.subr.mxu0 0.0
    %3439 = vmatpush1.msra.mxu0 0.0
    %3440 = vmatprep.subr.mxu0 0.0
    %3441 = vmatpush1.msra.mxu0 0.0
    %3442 = vmatprep.subr.mxu0 0.0
    %3443 = vmatpush1.msra.mxu0 0.0
    %3444 = vmatprep.subr.mxu0 0.0
    %3445 = vmatpush1.msra.mxu0 %v2101
    %3446 = vmatprep.subr.mxu0 0.0
    %3447 = vmatpush2.msra.mxu0 0.0
    %3448 = vmatprep.subr.mxu0 0.0
    %3449 = vmatpush2.msra.mxu0 0.0
    %3450 = vmatprep.subr.mxu0 0.0
    %3451 = vmatpush2.msra.mxu0 0.0
    %3452 = vmatprep.subr.mxu0 0.0
    %3453 = vmatpush2.msra.mxu0 0.0
    %3454 = vmatprep.subr.mxu0 0.0
    %3455 = vmatpush2.msra.mxu0 0.0
    %3456 = vmatprep.subr.mxu0 0.0
    %3457 = vmatpush2.msra.mxu0 0.0
    %3458 = vmatprep.subr.mxu0 0.0
    %3459 = vmatpush2.msra.mxu0 0.0
    %3460 = vmatprep.subr.mxu0 0.0
    %3461 = vmatpush2.msra.mxu0 0.0
    %3462 = vmatprep.subr.mxu0 0.0
    %3463 = vmatpush2.msra.mxu0 0.0
    %3464 = vmatprep.subr.mxu0 0.0
    %3465 = vmatpush2.msra.mxu0 0.0
    %3466 = vmatprep.subr.mxu0 0.0
    %3467 = vmatpush2.msra.mxu0 0.0
    %3468 = vmatprep.subr.mxu0 0.0
    %3469 = vmatpush2.msra.mxu0 0.0
    %3470 = vmatprep.subr.mxu0 0.0
    %3471 = vmatpush2.msra.mxu0 0.0
    %3472 = vmatprep.subr.mxu0 0.0
    %3473 = vmatpush2.msra.mxu0 0.0
    %3474 = vmatprep.subr.mxu0 0.0
    %3475 = vmatpush2.msra.mxu0 0.0
    %3476 = vmatprep.subr.mxu0 0.0
    %3477 = vmatpush2.msra.mxu0 0.0
    %3478 = vmatprep.mubr.f32.mxu0 0.0
    %3479 = vmatmul.mubr.f32.gmra.mxu0 %v3409
    %v3480 = vpop.f32.mrf.mxu0
    %v3481 = vadd.f32 0.0, %v3480
    %v3482 = vpop.f32.mrf.mxu0
    %3483 = vmatprep.mubr.f32.mxu0 0.0
    %3484 = vmatmul.mubr.f32.gmra.mxu0 %v3412
    %v3485 = vpop.f32.mrf.mxu0
    %v3486 = vadd.f32 0.0, %v3485
    %v3487 = vpop.f32.mrf.mxu0
    %3488 = vdwg.mxu0
    %v3489 = vadd.f32 %v3066, %v3481
    %v3490 = vadd.f32 %v3071, %v3486
    %3491 = vrot.lane.b32.xlu0 %v2238, 104
    %v3492 = vpop.permute.xlu0 %3491
    %3493 = vrot.lane.b32.xlu0 %v2238, 72
    %v3494 = vpop.permute.xlu0 %3493
    %v3495 = vsel %vm194, %v3492, 0
    %v3497 = vsel %vm194, %v3494, 0
    %3499 = vmatprep.subr.mxu0 0.0
    %3500 = vmatpush1.xpose.msra.mxu0 0.0
    %3501 = vmatprep.subr.mxu0 0.0
    %3502 = vmatpush1.xpose.msra.mxu0 0.0
    %3503 = vmatprep.subr.mxu0 0.0
    %3504 = vmatpush1.xpose.msra.mxu0 0.0
    %3505 = vmatprep.subr.mxu0 0.0
    %3506 = vmatpush1.xpose.msra.mxu0 0.0
    %3507 = vmatprep.subr.mxu0 0.0
    %3508 = vmatpush1.xpose.msra.mxu0 0.0
    %3509 = vmatprep.subr.mxu0 0.0
    %3510 = vmatpush1.xpose.msra.mxu0 0.0
    %3511 = vmatprep.subr.mxu0 0.0
    %3512 = vmatpush1.xpose.msra.mxu0 0.0
    %3513 = vmatprep.subr.mxu0 0.0
    %3514 = vmatpush1.xpose.msra.mxu0 0.0
    %3515 = vmatprep.subr.mxu0 0.0
    %3516 = vmatpush1.xpose.msra.mxu0 0.0
    %3517 = vmatprep.subr.mxu0 0.0
    %3518 = vmatpush1.xpose.msra.mxu0 0.0
    %3519 = vmatprep.subr.mxu0 0.0
    %3520 = vmatpush1.xpose.msra.mxu0 0.0
    %3521 = vmatprep.subr.mxu0 0.0
    %3522 = vmatpush1.xpose.msra.mxu0 0.0
    %3523 = vmatprep.subr.mxu0 0.0
    %3524 = vmatpush1.xpose.msra.mxu0 0.0
    %3525 = vmatprep.subr.mxu0 0.0
    %3526 = vmatpush1.xpose.msra.mxu0 0.0
    %3527 = vmatprep.subr.mxu0 0.0
    %3528 = vmatpush1.xpose.msra.mxu0 0.0
    %3529 = vmatprep.subr.mxu0 0.0
    %3530 = vmatpush1.xpose.msra.mxu0 %v3497
    %3531 = vmatprep.subr.mxu0 0.0
    %3532 = vmatpush2.xpose.msra.mxu0 0.0
    %3533 = vmatprep.subr.mxu0 0.0
    %3534 = vmatpush2.xpose.msra.mxu0 0.0
    %3535 = vmatprep.subr.mxu0 0.0
    %3536 = vmatpush2.xpose.msra.mxu0 0.0
    %3537 = vmatprep.subr.mxu0 0.0
    %3538 = vmatpush2.xpose.msra.mxu0 0.0
    %3539 = vmatprep.subr.mxu0 0.0
    %3540 = vmatpush2.xpose.msra.mxu0 0.0
    %3541 = vmatprep.subr.mxu0 0.0
    %3542 = vmatpush2.xpose.msra.mxu0 0.0
    %3543 = vmatprep.subr.mxu0 0.0
    %3544 = vmatpush2.xpose.msra.mxu0 0.0
    %3545 = vmatprep.subr.mxu0 0.0
    %3546 = vmatpush2.xpose.msra.mxu0 0.0
    %3547 = vmatprep.subr.mxu0 0.0
    %3548 = vmatpush2.xpose.msra.mxu0 0.0
    %3549 = vmatprep.subr.mxu0 0.0
    %3550 = vmatpush2.xpose.msra.mxu0 0.0
    %3551 = vmatprep.subr.mxu0 0.0
    %3552 = vmatpush2.xpose.msra.mxu0 0.0
    %3553 = vmatprep.subr.mxu0 0.0
    %3554 = vmatpush2.xpose.msra.mxu0 0.0
    %3555 = vmatprep.subr.mxu0 0.0
    %3556 = vmatpush2.xpose.msra.mxu0 0.0
    %3557 = vmatprep.subr.mxu0 0.0
    %3558 = vmatpush2.xpose.msra.mxu0 0.0
    %3559 = vmatprep.subr.mxu0 0.0
    %3560 = vmatpush2.xpose.msra.mxu0 0.0
    %3561 = vmatprep.subr.mxu0 0.0
    %3562 = vmatpush2.xpose.msra.mxu0 0.0
    %3563 = vmatprep.mubr.f32.mxu0 0.0
    %3564 = vmatmul.mubr.f32.gmra.mxu0 %v3495
    %v3565 = vpop.f32.mrf.mxu0
    %v3566 = vadd.f32 0.0, %v3565
    %v3567 = vpop.f32.mrf.mxu0
    %3568 = vdwg.mxu0
    %3569 = vrot.lane.b32.xlu0 %v2243, 104
    %v3570 = vpop.permute.xlu0 %3569
    %3571 = vrot.lane.b32.xlu0 %v2243, 72
    %v3572 = vpop.permute.xlu0 %3571
    %v3573 = vsel %vm194, %v3570, 0
    %v3575 = vsel %vm194, %v3572, 0
    %3577 = vmatprep.subr.mxu0 0.0
    %3578 = vmatpush1.xpose.msra.mxu0 0.0
    %3579 = vmatprep.subr.mxu0 0.0
    %3580 = vmatpush1.xpose.msra.mxu0 0.0
    %3581 = vmatprep.subr.mxu0 0.0
    %3582 = vmatpush1.xpose.msra.mxu0 0.0
    %3583 = vmatprep.subr.mxu0 0.0
    %3584 = vmatpush1.xpose.msra.mxu0 0.0
    %3585 = vmatprep.subr.mxu0 0.0
    %3586 = vmatpush1.xpose.msra.mxu0 0.0
    %3587 = vmatprep.subr.mxu0 0.0
    %3588 = vmatpush1.xpose.msra.mxu0 0.0
    %3589 = vmatprep.subr.mxu0 0.0
    %3590 = vmatpush1.xpose.msra.mxu0 0.0
    %3591 = vmatprep.subr.mxu0 0.0
    %3592 = vmatpush1.xpose.msra.mxu0 0.0
    %3593 = vmatprep.subr.mxu0 0.0
    %3594 = vmatpush1.xpose.msra.mxu0 0.0
    %3595 = vmatprep.subr.mxu0 0.0
    %3596 = vmatpush1.xpose.msra.mxu0 0.0
    %3597 = vmatprep.subr.mxu0 0.0
    %3598 = vmatpush1.xpose.msra.mxu0 0.0
    %3599 = vmatprep.subr.mxu0 0.0
    %3600 = vmatpush1.xpose.msra.mxu0 0.0
    %3601 = vmatprep.subr.mxu0 0.0
    %3602 = vmatpush1.xpose.msra.mxu0 0.0
    %3603 = vmatprep.subr.mxu0 0.0
    %3604 = vmatpush1.xpose.msra.mxu0 0.0
    %3605 = vmatprep.subr.mxu0 0.0
    %3606 = vmatpush1.xpose.msra.mxu0 0.0
    %3607 = vmatprep.subr.mxu0 0.0
    %3608 = vmatpush1.xpose.msra.mxu0 %v3575
    %3609 = vmatprep.subr.mxu0 0.0
    %3610 = vmatpush2.xpose.msra.mxu0 0.0
    %3611 = vmatprep.subr.mxu0 0.0
    %3612 = vmatpush2.xpose.msra.mxu0 0.0
    %3613 = vmatprep.subr.mxu0 0.0
    %3614 = vmatpush2.xpose.msra.mxu0 0.0
    %3615 = vmatprep.subr.mxu0 0.0
    %3616 = vmatpush2.xpose.msra.mxu0 0.0
    %3617 = vmatprep.subr.mxu0 0.0
    %3618 = vmatpush2.xpose.msra.mxu0 0.0
    %3619 = vmatprep.subr.mxu0 0.0
    %3620 = vmatpush2.xpose.msra.mxu0 0.0
    %3621 = vmatprep.subr.mxu0 0.0
    %3622 = vmatpush2.xpose.msra.mxu0 0.0
    %3623 = vmatprep.subr.mxu0 0.0
    %3624 = vmatpush2.xpose.msra.mxu0 0.0
    %3625 = vmatprep.subr.mxu0 0.0
    %3626 = vmatpush2.xpose.msra.mxu0 0.0
    %3627 = vmatprep.subr.mxu0 0.0
    %3628 = vmatpush2.xpose.msra.mxu0 0.0
    %3629 = vmatprep.subr.mxu0 0.0
    %3630 = vmatpush2.xpose.msra.mxu0 0.0
    %3631 = vmatprep.subr.mxu0 0.0
    %3632 = vmatpush2.xpose.msra.mxu0 0.0
    %3633 = vmatprep.subr.mxu0 0.0
    %3634 = vmatpush2.xpose.msra.mxu0 0.0
    %3635 = vmatprep.subr.mxu0 0.0
    %3636 = vmatpush2.xpose.msra.mxu0 0.0
    %3637 = vmatprep.subr.mxu0 0.0
    %3638 = vmatpush2.xpose.msra.mxu0 0.0
    %3639 = vmatprep.subr.mxu0 0.0
    %3640 = vmatpush2.xpose.msra.mxu0 0.0
    %3641 = vmatprep.mubr.f32.mxu0 0.0
    %3642 = vmatmul.mubr.f32.gmra.mxu0 %v3573
    %v3643 = vpop.f32.mrf.mxu0
    %v3644 = vadd.f32 0.0, %v3643
    %v3645 = vpop.f32.mrf.mxu0
    %3646 = vdwg.mxu0
    %v3647 = vmul.f32 %v3566, 0.35355338
    %v3648 = vmul.f32 %v3644, 0.35355338
    %v3649 = vadd.f32 %v3647, %v353
    %v3650 = vadd.f32 %v3648, %v357
    %v3651 = vsel %vm194, %v3649, -inf
    %3652 = vmax.xlane.f32.xlu0 %v3651
    %v3653 = vpop.xlane.xlu0 %3652
    %v3654 = vsel %vm194, %v3650, -inf
    %3655 = vmax.xlane.f32.xlu0 %v3654
    %v3656 = vpop.xlane.xlu0 %3655
    %v3657 = vsub.f32 %v3649, %v3653
    %v3658 = vsub.f32 %v3650, %v3656
    %v3659 = vmul.f32 %v3657, 1.442695
    %v3660 = vpow.pop %v3659
    %v3661 = vmul.f32 %v3658, 1.442695
    %v3662 = vpow.pop %v3661
    %v3663 = vsel %vm194, %v3660, 0.0
    %3664 = vadd.xlane.f32.xlu0 %v3663
    %v3665 = vpop.xlane.xlu0 %3664
    %v3666 = vsel %vm194, %v3662, 0.0
    %3667 = vadd.xlane.f32.xlu0 %v3666
    %v3668 = vpop.xlane.xlu0 %3667
    %v3669 = vrcp.pop %v3665
    %v3670 = vrcp.pop %v3668
    %v3671 = vmul.f32 %v3660, %v3669
    %v3672 = vmul.f32 %v3662, %v3670
    %3673 = vrot.lane.b32.xlu0 %v2238, 40
    %v3674 = vpop.permute.xlu0 %3673
    %v3677 = vsel %vm194, %v3671, 0
    %3679 = vmatprep.subr.mxu0 0.0
    %3680 = vmatpush1.msra.mxu0 0.0
    %3681 = vmatprep.subr.mxu0 0.0
    %3682 = vmatpush1.msra.mxu0 0.0
    %3683 = vmatprep.subr.mxu0 0.0
    %3684 = vmatpush1.msra.mxu0 0.0
    %3685 = vmatprep.subr.mxu0 0.0
    %3686 = vmatpush1.msra.mxu0 0.0
    %3687 = vmatprep.subr.mxu0 0.0
    %3688 = vmatpush1.msra.mxu0 0.0
    %3689 = vmatprep.subr.mxu0 0.0
    %3690 = vmatpush1.msra.mxu0 0.0
    %3691 = vmatprep.subr.mxu0 0.0
    %3692 = vmatpush1.msra.mxu0 0.0
    %3693 = vmatprep.subr.mxu0 0.0
    %3694 = vmatpush1.msra.mxu0 0.0
    %3695 = vmatprep.subr.mxu0 0.0
    %3696 = vmatpush1.msra.mxu0 0.0
    %3697 = vmatprep.subr.mxu0 0.0
    %3698 = vmatpush1.msra.mxu0 0.0
    %3699 = vmatprep.subr.mxu0 0.0
    %3700 = vmatpush1.msra.mxu0 0.0
    %3701 = vmatprep.subr.mxu0 0.0
    %3702 = vmatpush1.msra.mxu0 0.0
    %3703 = vmatprep.subr.mxu0 0.0
    %3704 = vmatpush1.msra.mxu0 0.0
    %3705 = vmatprep.subr.mxu0 0.0
    %3706 = vmatpush1.msra.mxu0 0.0
    %3707 = vmatprep.subr.mxu0 0.0
    %3708 = vmatpush1.msra.mxu0 0.0
    %3709 = vmatprep.subr.mxu0 0.0
    %3710 = vmatpush1.msra.mxu0 %v3674
    %3711 = vmatprep.subr.mxu0 0.0
    %3712 = vmatpush2.msra.mxu0 0.0
    %3713 = vmatprep.subr.mxu0 0.0
    %3714 = vmatpush2.msra.mxu0 0.0
    %3715 = vmatprep.subr.mxu0 0.0
    %3716 = vmatpush2.msra.mxu0 0.0
    %3717 = vmatprep.subr.mxu0 0.0
    %3718 = vmatpush2.msra.mxu0 0.0
    %3719 = vmatprep.subr.mxu0 0.0
    %3720 = vmatpush2.msra.mxu0 0.0
    %3721 = vmatprep.subr.mxu0 0.0
    %3722 = vmatpush2.msra.mxu0 0.0
    %3723 = vmatprep.subr.mxu0 0.0
    %3724 = vmatpush2.msra.mxu0 0.0
    %3725 = vmatprep.subr.mxu0 0.0
    %3726 = vmatpush2.msra.mxu0 0.0
    %3727 = vmatprep.subr.mxu0 0.0
    %3728 = vmatpush2.msra.mxu0 0.0
    %3729 = vmatprep.subr.mxu0 0.0
    %3730 = vmatpush2.msra.mxu0 0.0
    %3731 = vmatprep.subr.mxu0 0.0
    %3732 = vmatpush2.msra.mxu0 0.0
    %3733 = vmatprep.subr.mxu0 0.0
    %3734 = vmatpush2.msra.mxu0 0.0
    %3735 = vmatprep.subr.mxu0 0.0
    %3736 = vmatpush2.msra.mxu0 0.0
    %3737 = vmatprep.subr.mxu0 0.0
    %3738 = vmatpush2.msra.mxu0 0.0
    %3739 = vmatprep.subr.mxu0 0.0
    %3740 = vmatpush2.msra.mxu0 0.0
    %3741 = vmatprep.subr.mxu0 0.0
    %3742 = vmatpush2.msra.mxu0 0.0
    %3743 = vmatprep.mubr.f32.mxu0 0.0
    %3744 = vmatmul.mubr.f32.gmra.mxu0 %v3677
    %v3745 = vpop.f32.mrf.mxu0
    %v3746 = vadd.f32 0.0, %v3745
    %v3747 = vpop.f32.mrf.mxu0
    %3748 = vdwg.mxu0
    %3749 = vrot.lane.b32.xlu0 %v2243, 40
    %v3750 = vpop.permute.xlu0 %3749
    %v3753 = vsel %vm194, %v3672, 0
    %3755 = vmatprep.subr.mxu0 0.0
    %3756 = vmatpush1.msra.mxu0 0.0
    %3757 = vmatprep.subr.mxu0 0.0
    %3758 = vmatpush1.msra.mxu0 0.0
    %3759 = vmatprep.subr.mxu0 0.0
    %3760 = vmatpush1.msra.mxu0 0.0
    %3761 = vmatprep.subr.mxu0 0.0
    %3762 = vmatpush1.msra.mxu0 0.0
    %3763 = vmatprep.subr.mxu0 0.0
    %3764 = vmatpush1.msra.mxu0 0.0
    %3765 = vmatprep.subr.mxu0 0.0
    %3766 = vmatpush1.msra.mxu0 0.0
    %3767 = vmatprep.subr.mxu0 0.0
    %3768 = vmatpush1.msra.mxu0 0.0
    %3769 = vmatprep.subr.mxu0 0.0
    %3770 = vmatpush1.msra.mxu0 0.0
    %3771 = vmatprep.subr.mxu0 0.0
    %3772 = vmatpush1.msra.mxu0 0.0
    %3773 = vmatprep.subr.mxu0 0.0
    %3774 = vmatpush1.msra.mxu0 0.0
    %3775 = vmatprep.subr.mxu0 0.0
    %3776 = vmatpush1.msra.mxu0 0.0
    %3777 = vmatprep.subr.mxu0 0.0
    %3778 = vmatpush1.msra.mxu0 0.0
    %3779 = vmatprep.subr.mxu0 0.0
    %3780 = vmatpush1.msra.mxu0 0.0
    %3781 = vmatprep.subr.mxu0 0.0
    %3782 = vmatpush1.msra.mxu0 0.0
    %3783 = vmatprep.subr.mxu0 0.0
    %3784 = vmatpush1.msra.mxu0 0.0
    %3785 = vmatprep.subr.mxu0 0.0
    %3786 = vmatpush1.msra.mxu0 %v3750
    %3787 = vmatprep.subr.mxu0 0.0
    %3788 = vmatpush2.msra.mxu0 0.0
    %3789 = vmatprep.subr.mxu0 0.0
    %3790 = vmatpush2.msra.mxu0 0.0
    %3791 = vmatprep.subr.mxu0 0.0
    %3792 = vmatpush2.msra.mxu0 0.0
    %3793 = vmatprep.subr.mxu0 0.0
    %3794 = vmatpush2.msra.mxu0 0.0
    %3795 = vmatprep.subr.mxu0 0.0
    %3796 = vmatpush2.msra.mxu0 0.0
    %3797 = vmatprep.subr.mxu0 0.0
    %3798 = vmatpush2.msra.mxu0 0.0
    %3799 = vmatprep.subr.mxu0 0.0
    %3800 = vmatpush2.msra.mxu0 0.0
    %3801 = vmatprep.subr.mxu0 0.0
    %3802 = vmatpush2.msra.mxu0 0.0
    %3803 = vmatprep.subr.mxu0 0.0
    %3804 = vmatpush2.msra.mxu0 0.0
    %3805 = vmatprep.subr.mxu0 0.0
    %3806 = vmatpush2.msra.mxu0 0.0
    %3807 = vmatprep.subr.mxu0 0.0
    %3808 = vmatpush2.msra.mxu0 0.0
    %3809 = vmatprep.subr.mxu0 0.0
    %3810 = vmatpush2.msra.mxu0 0.0
    %3811 = vmatprep.subr.mxu0 0.0
    %3812 = vmatpush2.msra.mxu0 0.0
    %3813 = vmatprep.subr.mxu0 0.0
    %3814 = vmatpush2.msra.mxu0 0.0
    %3815 = vmatprep.subr.mxu0 0.0
    %3816 = vmatpush2.msra.mxu0 0.0
    %3817 = vmatprep.subr.mxu0 0.0
    %3818 = vmatpush2.msra.mxu0 0.0
    %3819 = vmatprep.mubr.f32.mxu0 0.0
    %3820 = vmatmul.mubr.f32.gmra.mxu0 %v3753
    %v3821 = vpop.f32.mrf.mxu0
    %v3822 = vadd.f32 0.0, %v3821
    %v3823 = vpop.f32.mrf.mxu0
    %3824 = vdwg.mxu0
    %v3826 = vsel %vm194, %v3746, 0
    %v3829 = vsel %vm194, %v3822, 0
    %3831 = vmatprep.subr.mxu0 0.0
    %3832 = vmatpush1.msra.mxu0 0.0
    %3833 = vmatprep.subr.mxu0 0.0
    %3834 = vmatpush1.msra.mxu0 0.0
    %3835 = vmatprep.subr.mxu0 0.0
    %3836 = vmatpush1.msra.mxu0 0.0
    %3837 = vmatprep.subr.mxu0 0.0
    %3838 = vmatpush1.msra.mxu0 0.0
    %3839 = vmatprep.subr.mxu0 0.0
    %3840 = vmatpush1.msra.mxu0 0.0
    %3841 = vmatprep.subr.mxu0 0.0
    %3842 = vmatpush1.msra.mxu0 0.0
    %3843 = vmatprep.subr.mxu0 0.0
    %3844 = vmatpush1.msra.mxu0 0.0
    %3845 = vmatprep.subr.mxu0 0.0
    %3846 = vmatpush1.msra.mxu0 0.0
    %3847 = vmatprep.subr.mxu0 0.0
    %3848 = vmatpush1.msra.mxu0 0.0
    %3849 = vmatprep.subr.mxu0 0.0
    %3850 = vmatpush1.msra.mxu0 0.0
    %3851 = vmatprep.subr.mxu0 0.0
    %3852 = vmatpush1.msra.mxu0 0.0
    %3853 = vmatprep.subr.mxu0 0.0
    %3854 = vmatpush1.msra.mxu0 0.0
    %3855 = vmatprep.subr.mxu0 0.0
    %3856 = vmatpush1.msra.mxu0 0.0
    %3857 = vmatprep.subr.mxu0 0.0
    %3858 = vmatpush1.msra.mxu0 0.0
    %3859 = vmatprep.subr.mxu0 0.0
    %3860 = vmatpush1.msra.mxu0 0.0
    %3861 = vmatprep.subr.mxu0 0.0
    %3862 = vmatpush1.msra.mxu0 %v2102
    %3863 = vmatprep.subr.mxu0 0.0
    %3864 = vmatpush2.msra.mxu0 0.0
    %3865 = vmatprep.subr.mxu0 0.0
    %3866 = vmatpush2.msra.mxu0 0.0
    %3867 = vmatprep.subr.mxu0 0.0
    %3868 = vmatpush2.msra.mxu0 0.0
    %3869 = vmatprep.subr.mxu0 0.0
    %3870 = vmatpush2.msra.mxu0 0.0
    %3871 = vmatprep.subr.mxu0 0.0
    %3872 = vmatpush2.msra.mxu0 0.0
    %3873 = vmatprep.subr.mxu0 0.0
    %3874 = vmatpush2.msra.mxu0 0.0
    %3875 = vmatprep.subr.mxu0 0.0
    %3876 = vmatpush2.msra.mxu0 0.0
    %3877 = vmatprep.subr.mxu0 0.0
    %3878 = vmatpush2.msra.mxu0 0.0
    %3879 = vmatprep.subr.mxu0 0.0
    %3880 = vmatpush2.msra.mxu0 0.0
    %3881 = vmatprep.subr.mxu0 0.0
    %3882 = vmatpush2.msra.mxu0 0.0
    %3883 = vmatprep.subr.mxu0 0.0
    %3884 = vmatpush2.msra.mxu0 0.0
    %3885 = vmatprep.subr.mxu0 0.0
    %3886 = vmatpush2.msra.mxu0 0.0
    %3887 = vmatprep.subr.mxu0 0.0
    %3888 = vmatpush2.msra.mxu0 0.0
    %3889 = vmatprep.subr.mxu0 0.0
    %3890 = vmatpush2.msra.mxu0 0.0
    %3891 = vmatprep.subr.mxu0 0.0
    %3892 = vmatpush2.msra.mxu0 0.0
    %3893 = vmatprep.subr.mxu0 0.0
    %3894 = vmatpush2.msra.mxu0 0.0
    %3895 = vmatprep.mubr.f32.mxu0 0.0
    %3896 = vmatmul.mubr.f32.gmra.mxu0 %v3826
    %v3897 = vpop.f32.mrf.mxu0
    %v3898 = vadd.f32 0.0, %v3897
    %v3899 = vpop.f32.mrf.mxu0
    %3900 = vmatprep.mubr.f32.mxu0 0.0
    %3901 = vmatmul.mubr.f32.gmra.mxu0 %v3829
    %v3902 = vpop.f32.mrf.mxu0
    %v3903 = vadd.f32 0.0, %v3902
    %v3904 = vpop.f32.mrf.mxu0
    %3905 = vdwg.mxu0
    %v3906 = vadd.f32 %v3489, %v3898
    %v3907 = vadd.f32 %v3490, %v3903
    %v3908 = vadd.f32 %v2089, %v3906
    %v3909 = vadd.f32 %v2090, %v3907
    %v3910 = vlaneseq
    %v3911 = vshrl.u32 %v3910, 7
    %v3912 = vsub.s32 4, %v3911
    %v3913 = vrot.slane %v2120, %v3912
    %v3914 = vadd.f32 %v3908, %v3913
    %v3915 = vadd.f32 %v3909, %v3913
    %v3916 = vsel %vm64, %v3914, 0.0
    %3917 = vadd.xlane.f32.xlu0 %v3916
    %v3918 = vpop.xlane.xlu0 %3917
    %v3919 = vsel %vm64, %v3915, 0.0
    %3920 = vadd.xlane.f32.xlu0 %v3919
    %v3921 = vpop.xlane.xlu0 %3920
    %v3922 = vmul.f32 %v3918, %v71
    %v3923 = vmul.f32 %v3921, %v71
    %v3924 = vsub.f32 %v3914, %v3922
    %v3925 = vsub.f32 %v3915, %v3923
    %v3926 = vmul.f32 %v3924, %v3924
    %v3927 = vmul.f32 %v3925, %v3925
    %v3928 = vsel %vm64, %v3926, 0.0
    %3929 = vadd.xlane.f32.xlu0 %v3928
    %v3930 = vpop.xlane.xlu0 %3929
    %v3931 = vsel %vm64, %v3927, 0.0
    %3932 = vadd.xlane.f32.xlu0 %v3931
    %v3933 = vpop.xlane.xlu0 %3932
    %v3934 = vmul.f32 %v3930, %v71
    %v3935 = vmul.f32 %v3933, %v71
    %v3936 = vadd.f32 %v3934, 1e-06
    %v3937 = vadd.f32 %v3935, 1e-06
    %v3938 = vrsqrt.pop %v3936
    %v3939 = vrsqrt.pop %v3937
    %v3940 = vmul.f32 %v3924, %v3938
    %v3941 = vmul.f32 %v3925, %v3939
    %v3942 = vlaneseq
    %v3943 = vshrl.u32 %v3942, 7
    %v3944 = vsub.s32 2, %v3943
    %v3945 = vrot.slane %v2120, %v3944
    %v3946 = vmul.f32 %v3940, %v3945
    %v3947 = vmul.f32 %v3941, %v3945
    %v3948 = vlaneseq
    %v3949 = vshrl.u32 %v3948, 7
    %v3950 = vsub.s32 3, %v3949
    %v3951 = vrot.slane %v2120, %v3950
    %v3952 = vadd.f32 %v3946, %v3951
    %v3953 = vadd.f32 %v3947, %v3951
    %v3955 = vlaneseq
    %v3956 = vshrl.u32 %v3955, 7
    %v3957 = vsub.s32 0, %v3956
    %v3958 = vrot.slane %v2109, %v3957
    %v3961 = vsel %vm64, %v3952, 0
    %v3964 = vsel %vm64, %v3953, 0
    %3966 = vmatprep.subr.mxu0 0.0
    %3967 = vmatpush1.msra.mxu0 0.0
    %3968 = vmatprep.subr.mxu0 0.0
    %3969 = vmatpush1.msra.mxu0 0.0
    %3970 = vmatprep.subr.mxu0 0.0
    %3971 = vmatpush1.msra.mxu0 0.0
    %3972 = vmatprep.subr.mxu0 0.0
    %3973 = vmatpush1.msra.mxu0 0.0
    %3974 = vmatprep.subr.mxu0 0.0
    %3975 = vmatpush1.msra.mxu0 0.0
    %3976 = vmatprep.subr.mxu0 0.0
    %3977 = vmatpush1.msra.mxu0 0.0
    %3978 = vmatprep.subr.mxu0 0.0
    %3979 = vmatpush1.msra.mxu0 0.0
    %3980 = vmatprep.subr.mxu0 0.0
    %3981 = vmatpush1.msra.mxu0 0.0
    %3982 = vmatprep.subr.mxu0 0.0
    %3983 = vmatpush1.msra.mxu0 0.0
    %3984 = vmatprep.subr.mxu0 0.0
    %3985 = vmatpush1.msra.mxu0 0.0
    %3986 = vmatprep.subr.mxu0 0.0
    %3987 = vmatpush1.msra.mxu0 0.0
    %3988 = vmatprep.subr.mxu0 0.0
    %3989 = vmatpush1.msra.mxu0 0.0
    %3990 = vmatprep.subr.mxu0 0.0
    %3991 = vmatpush1.msra.mxu0 %v2107
    %3992 = vmatprep.subr.mxu0 0.0
    %3993 = vmatpush1.msra.mxu0 %v2106
    %3994 = vmatprep.subr.mxu0 0.0
    %3995 = vmatpush1.msra.mxu0 %v2105
    %3996 = vmatprep.subr.mxu0 0.0
    %3997 = vmatpush1.msra.mxu0 %v2104
    %3998 = vmatprep.subr.mxu0 0.0
    %3999 = vmatpush2.msra.mxu0 0.0
    %4000 = vmatprep.subr.mxu0 0.0
    %4001 = vmatpush2.msra.mxu0 0.0
    %4002 = vmatprep.subr.mxu0 0.0
    %4003 = vmatpush2.msra.mxu0 0.0
    %4004 = vmatprep.subr.mxu0 0.0
    %4005 = vmatpush2.msra.mxu0 0.0
    %4006 = vmatprep.subr.mxu0 0.0
    %4007 = vmatpush2.msra.mxu0 0.0
    %4008 = vmatprep.subr.mxu0 0.0
    %4009 = vmatpush2.msra.mxu0 0.0
    %4010 = vmatprep.subr.mxu0 0.0
    %4011 = vmatpush2.msra.mxu0 0.0
    %4012 = vmatprep.subr.mxu0 0.0
    %4013 = vmatpush2.msra.mxu0 0.0
    %4014 = vmatprep.subr.mxu0 0.0
    %4015 = vmatpush2.msra.mxu0 0.0
    %4016 = vmatprep.subr.mxu0 0.0
    %4017 = vmatpush2.msra.mxu0 0.0
    %4018 = vmatprep.subr.mxu0 0.0
    %4019 = vmatpush2.msra.mxu0 0.0
    %4020 = vmatprep.subr.mxu0 0.0
    %4021 = vmatpush2.msra.mxu0 0.0
    %4022 = vmatprep.subr.mxu0 0.0
    %4023 = vmatpush2.msra.mxu0 0.0
    %4024 = vmatprep.subr.mxu0 0.0
    %4025 = vmatpush2.msra.mxu0 0.0
    %4026 = vmatprep.subr.mxu0 0.0
    %4027 = vmatpush2.msra.mxu0 0.0
    %4028 = vmatprep.subr.mxu0 0.0
    %4029 = vmatpush2.msra.mxu0 0.0
    %4030 = vmatprep.mubr.f32.mxu0 0.0
    %4031 = vmatmul.mubr.f32.gmra.mxu0 %v3961
    %v4032 = vpop.f32.mrf.mxu0
    %v4033 = vadd.f32 %v3958, %v4032
    %v4034 = vpop.f32.mrf.mxu0
    %4035 = vmatprep.mubr.f32.mxu0 0.0
    %4036 = vmatmul.mubr.f32.gmra.mxu0 %v3964
    %v4037 = vpop.f32.mrf.mxu0
    %v4038 = vadd.f32 %v3958, %v4037
    %v4039 = vpop.f32.mrf.mxu0
    %4040 = vdwg.mxu0
    %v4041 = vmax.f32 %v4033, 0.0
    %v4042 = vmax.f32 %v4038, 0.0
    %v4044 = vsel %vm2001, %v4041, 0
    %v4047 = vsel %vm2001, %v4042, 0
    %4049 = vmatprep.subr.mxu0 0.0
    %4050 = vmatpush1.msra.mxu0 0.0
    %4051 = vmatprep.subr.mxu0 0.0
    %4052 = vmatpush1.msra.mxu0 0.0
    %4053 = vmatprep.subr.mxu0 0.0
    %4054 = vmatpush1.msra.mxu0 0.0
    %4055 = vmatprep.subr.mxu0 0.0
    %4056 = vmatpush1.msra.mxu0 0.0
    %4057 = vmatprep.subr.mxu0 0.0
    %4058 = vmatpush1.msra.mxu0 0.0
    %4059 = vmatprep.subr.mxu0 0.0
    %4060 = vmatpush1.msra.mxu0 0.0
    %4061 = vmatprep.subr.mxu0 0.0
    %4062 = vmatpush1.msra.mxu0 0.0
    %4063 = vmatprep.subr.mxu0 0.0
    %4064 = vmatpush1.msra.mxu0 0.0
    %4065 = vmatprep.subr.mxu0 0.0
    %4066 = vmatpush1.msra.mxu0 %v2118
    %4067 = vmatprep.subr.mxu0 0.0
    %4068 = vmatpush1.msra.mxu0 %v2117
    %4069 = vmatprep.subr.mxu0 0.0
    %4070 = vmatpush1.msra.mxu0 %v2116
    %4071 = vmatprep.subr.mxu0 0.0
    %4072 = vmatpush1.msra.mxu0 %v2115
    %4073 = vmatprep.subr.mxu0 0.0
    %4074 = vmatpush1.msra.mxu0 %v2114
    %4075 = vmatprep.subr.mxu0 0.0
    %4076 = vmatpush1.msra.mxu0 %v2113
    %4077 = vmatprep.subr.mxu0 0.0
    %4078 = vmatpush1.msra.mxu0 %v2112
    %4079 = vmatprep.subr.mxu0 0.0
    %4080 = vmatpush1.msra.mxu0 %v2111
    %4081 = vmatprep.subr.mxu0 0.0
    %4082 = vmatpush2.msra.mxu0 0.0
    %4083 = vmatprep.subr.mxu0 0.0
    %4084 = vmatpush2.msra.mxu0 0.0
    %4085 = vmatprep.subr.mxu0 0.0
    %4086 = vmatpush2.msra.mxu0 0.0
    %4087 = vmatprep.subr.mxu0 0.0
    %4088 = vmatpush2.msra.mxu0 0.0
    %4089 = vmatprep.subr.mxu0 0.0
    %4090 = vmatpush2.msra.mxu0 0.0
    %4091 = vmatprep.subr.mxu0 0.0
    %4092 = vmatpush2.msra.mxu0 0.0
    %4093 = vmatprep.subr.mxu0 0.0
    %4094 = vmatpush2.msra.mxu0 0.0
    %4095 = vmatprep.subr.mxu0 0.0
    %4096 = vmatpush2.msra.mxu0 0.0
    %4097 = vmatprep.subr.mxu0 0.0
    %4098 = vmatpush2.msra.mxu0 0.0
    %4099 = vmatprep.subr.mxu0 0.0
    %4100 = vmatpush2.msra.mxu0 0.0
    %4101 = vmatprep.subr.mxu0 0.0
    %4102 = vmatpush2.msra.mxu0 0.0
    %4103 = vmatprep.subr.mxu0 0.0
    %4104 = vmatpush2.msra.mxu0 0.0
    %4105 = vmatprep.subr.mxu0 0.0
    %4106 = vmatpush2.msra.mxu0 0.0
    %4107 = vmatprep.subr.mxu0 0.0
    %4108 = vmatpush2.msra.mxu0 0.0
    %4109 = vmatprep.subr.mxu0 0.0
    %4110 = vmatpush2.msra.mxu0 0.0
    %4111 = vmatprep.subr.mxu0 0.0
    %4112 = vmatpush2.msra.mxu0 0.0
    %4113 = vmatprep.mubr.f32.mxu0 0.0
    %4114 = vmatmul.mubr.f32.gmra.mxu0 %v4044
    %v4115 = vpop.f32.mrf.mxu0
    %v4116 = vadd.f32 0.0, %v4115
    %v4117 = vpop.f32.mrf.mxu0
    %4118 = vmatprep.mubr.f32.mxu0 0.0
    %4119 = vmatmul.mubr.f32.gmra.mxu0 %v4047
    %v4120 = vpop.f32.mrf.mxu0
    %v4121 = vadd.f32 0.0, %v4120
    %v4122 = vpop.f32.mrf.mxu0
    %4123 = vdwg.mxu0
    %v4124 = vadd.f32 %v3914, %v4116
    %v4125 = vadd.f32 %v3915, %v4121
    %v4126 = vlaneseq
    %v4127 = vshrl.u32 %v4126, 7
    %v4128 = vsub.s32 5, %v4127
    %v4129 = vrot.slane %v2120, %v4128
    %v4130 = vadd.f32 %v4124, %v4129
    %v4131 = vadd.f32 %v4125, %v4129
    %4132 = vst.msk [vmem:[#allocation2] sm:$0xff] %vm64, %v4130
    %4133 = vst.msk [vmem:[#allocation2 + $0x8] sm:$0xff] %vm64, %v4131
    // Predicated region
    $region38: #{encoder_forward.1} parent=1 // pred_check
      _
    $region39: #{encoder_forward.1} parent=1 // pred_check_branch
      %4135 = sbr.rel (0) target = $region41
    $region40: #{encoder_forward.1} parent=1 // pred_region
      %s4137 = ssub.s32 256, 256
      %4138 = vsyncadd [#allocation3], %s4137
      %s4139 = sshll.u32 [#allocation2], 4
      %s4140 = int_to_ptr.vmem [resolvable:$true] %s4139
      %4145 = dma.vmem_to_hbm [thread:$0]  %s4140, 256, %s9, [#allocation3], 128, 128, 8
    $region41: #{encoder_forward.1} parent=1 // pred_fallthru
      _
    // Predicated region
    $region42: #{encoder_forward.1} parent=1 // pred_check
      _
    $region43: #{encoder_forward.1} parent=1 // pred_check_branch
      %4147 = sbr.rel (0) target = $region45
    $region44: #{encoder_forward.1} parent=1 // pred_region
      %4148 = dma.done [#allocation3], 256
    $region45: #{encoder_forward.1} parent=1 // pred_fallthru
      _
    %4149 = vsyncpa [#allocation3], 1

</llo_original>
